<compile_context>
chip_gen: v6e
topology: v6e:2x2x1
jax: 0.10.0
libtpu: 0.0.40
codegen_flags: <defaults>
</compile_context>

<pallas_src>
import jax
import jax.numpy as jnp
from jax.experimental import pallas as pl
from jax.experimental.pallas import tpu as pltpu

NEG_SLOPE = 0.01  # torch.nn.LeakyReLU default


def _leaky(x):
    return jnp.where(x >= 0, x, NEG_SLOPE * x)


def _row_softmax(m):
    mx = jnp.max(m, axis=1, keepdims=True)
    e = jnp.exp(m - mx)
    return e / jnp.sum(e, axis=1, keepdims=True)


def _sum_all(m):
    return jnp.sum(jnp.sum(m, axis=1, keepdims=True), axis=0, keepdims=True)


def total_mi_kernel(f_pos_ref, f_flat_ref, rep_ref,
                    sel_pos_ref, sel_i_ref, sel_j_ref, scat_i_ref,
                    w1f_ref, w1r_ref, b1_ref,
                    w2_ref, b2_ref, w3_ref, b3_ref,
                    w4_ref, b4_ref, out_ref):
    f32 = jnp.float32
    B, C = rep_ref.shape
    P = f_pos_ref.shape[1]          # B * H * W spatial positions
    HW = P // B

    rep = rep_ref[...]                                                  # (B, C) f32

    # ---------------- LocalMI: cosine map in two matmuls -------------------
    f_pos = f_pos_ref[...]                                              # (C, P) f32
    inv_fn = jax.lax.rsqrt(jnp.sum(f_pos * f_pos, axis=0, keepdims=True))  # (1, P)
    f_hat = f_pos * inv_fn                                              # unit vec per position
    r_hat = rep * jax.lax.rsqrt(jnp.sum(rep * rep, axis=1, keepdims=True))  # (B, C)

    # per-sample spatial sums of normalized features: (B, C) = sel_pos @ f_hat^T
    block_sums = jax.lax.dot_general(
        sel_pos_ref[...], f_hat,
        dimension_numbers=(((1,), (1,)), ((), ())),
        preferred_element_type=f32)                                     # (B, C)
    # lmi_map[i, j] = mean_pos cos(f_i(pos), r_j) = (1/HW) * block_sums @ r_hat^T
    lmi_map = jax.lax.dot_general(
        block_sums, r_hat,
        dimension_numbers=(((1,), (1,)), ((), ())),
        preferred_element_type=f32) * (1.0 / HW)                        # (B, B)

    # ---------------- GlobalMI: all B*B pairs in one MLP pass --------------
    a1 = jnp.dot(f_flat_ref[...], w1f_ref[...],
                 preferred_element_type=f32)                            # (B, 1024) bf16 MXU
    r1 = jnp.dot(rep, w1r_ref[...].astype(f32),
                 preferred_element_type=f32)                            # (B, 1024)

    sel_i = sel_i_ref[...]                                              # (B*B, B) picks row i
    sel_j = sel_j_ref[...]                                              # (B*B, B) picks row j
    h1 = _leaky(jnp.dot(sel_i, a1, preferred_element_type=f32)
                + jnp.dot(sel_j, r1, preferred_element_type=f32)
                + b1_ref[...])                                          # (B*B, 1024)
    h2 = _leaky(jnp.dot(h1, w2_ref[...].astype(f32),
                        preferred_element_type=f32) + b2_ref[...])      # (B*B, 512)
    h3 = _leaky(jnp.dot(h2, w3_ref[...].astype(f32),
                        preferred_element_type=f32) + b3_ref[...])      # (B*B, 256)
    logit = jnp.sum(h3 * w4_ref[...].astype(f32), axis=1, keepdims=True) + b4_ref[...]
    g = 1.0 / (1.0 + jnp.exp(-logit))                                   # sigmoid, (B*B, 1)
    # scatter pair scores back to (B, B): gmi_map = scat_i @ (sel_j * g)
    gmi_map = jnp.dot(scat_i_ref[...], sel_j * g,
                      preferred_element_type=f32)                       # (B, B)

    # ---------------- softmax + focus/zero-focus scoring --------------------
    lmi_sm = _row_softmax(lmi_map)
    gmi_sm = _row_softmax(gmi_map)
    rb = jax.lax.broadcasted_iota(jnp.int32, (B, B), 0)
    cb = jax.lax.broadcasted_iota(jnp.int32, (B, B), 1)
    focus = (rb == cb).astype(f32)
    zero_focus = 1.0 - focus

    diag_lmi = _sum_all(focus * lmi_sm)
    off_lmi = _sum_all(zero_focus * lmi_sm)
    off_gmi = _sum_all(zero_focus * gmi_sm)

    lmi_score = off_lmi - diag_lmi
    gmi_score = off_gmi - diag_lmi   # NOTE: reproduces reference bug (gmi uses lmi diag term)
    out_ref[...] = lmi_score + gmi_score


def init_params(key, in_dim):
    """Deterministic synthetic parameters matching GlobalMI's Linear shapes."""
    ks = jax.random.split(key, 8)

    def lin(kw, kb, out_d, in_d):
        w = jax.random.normal(kw, (out_d, in_d), jnp.float32) * 0.05
        b = jax.random.normal(kb, (out_d,), jnp.float32) * 0.05
        return w, b

    w1, b1 = lin(ks[0], ks[1], 1024, in_dim)
    w2, b2 = lin(ks[2], ks[3], 512, 1024)
    w3, b3 = lin(ks[4], ks[5], 256, 512)
    w4, b4 = lin(ks[6], ks[7], 1, 256)
    return (w1, b1, w2, b2, w3, b3, w4, b4)


@jax.jit
def total_mi_forward(features, representation, labels, params):
    del labels  # unused in the reference forward (focus = identity)
    B, C, H, W = features.shape
    HW = H * W
    Df = C * HW
    BB = B * B

    # Layout / precision prep (glue only, no real compute).
    f_flat = features.reshape(B, Df).astype(jnp.bfloat16)              # torch .view(B, -1) order
    f_pos = jnp.transpose(features, (1, 0, 2, 3)).reshape(C, B * HW)   # channels on sublanes

    w1, b1, w2, b2, w3, b3, w4, b4 = params
    w1t = jnp.transpose(w1).astype(jnp.bfloat16)                       # (Df + C, 1024)
    w1f = w1t[:Df, :]
    w1r = w1t[Df:, :]

    # Tiny one-hot selector matrices (avoid vector int div/mod inside the kernel).
    eye_b = jnp.eye(B, dtype=jnp.float32)
    sel_pos = jnp.repeat(eye_b, HW, axis=1)            # (B, B*HW): positions of sample b
    pair_i = jnp.repeat(jnp.arange(B), B)              # pair p = i*B + j
    pair_j = jnp.tile(jnp.arange(B), B)
    sel_i = eye_b[pair_i]                              # (BB, B)
    sel_j = eye_b[pair_j]                              # (BB, B)
    scat_i = sel_i.T                                   # (B, BB)

    inputs = (
        f_pos, f_flat, representation.astype(jnp.float32),
        sel_pos, sel_i, sel_j, scat_i,
        w1f, w1r, b1.reshape(1, -1).astype(jnp.float32),
        jnp.transpose(w2).astype(jnp.bfloat16), b2.reshape(1, -1).astype(jnp.float32),
        jnp.transpose(w3).astype(jnp.bfloat16), b3.reshape(1, -1).astype(jnp.float32),
        w4.astype(jnp.bfloat16), b4.reshape(1, 1).astype(jnp.float32),
    )

    out = pl.pallas_call(
        total_mi_kernel,
        out_shape=jax.ShapeDtypeStruct((1, 1), jnp.float32),
        in_specs=[pl.BlockSpec(memory_space=pltpu.MemorySpace.VMEM)] * len(inputs),
        out_specs=pl.BlockSpec(memory_space=pltpu.MemorySpace.VMEM),
        compiler_params=pltpu.CompilerParams(vmem_limit_bytes=16 * 1024 * 1024),
    )(*inputs)
    return out[0, 0]


def total_mi_reference(features, representation, params):
    """Pure-JAX re-implementation of the PyTorch forward, with the same bf16
    storage of MLP weights / flattened features as the kernel (so the compare
    checks kernel structure, not quantization)."""
    B, C, H, W = features.shape
    w1, b1, w2, b2, w3, b3, w4, b4 = params
    q = lambda x: x.astype(jnp.bfloat16).astype(jnp.float32)
    w1q, w2q, w3q, w4q = q(w1), q(w2), q(w3), q(w4)

    def leaky(x):
        return jnp.where(x >= 0, x, NEG_SLOPE * x)

    def gmi_one(f, r):
        x = jnp.concatenate([q(f.reshape(-1)), r])
        h = leaky(x @ w1q.T + b1)
        h = leaky(h @ w2q.T + b2)
        h = leaky(h @ w3q.T + b3)
        o = h @ w4q.T + b4
        return jax.nn.sigmoid(o)[0]

    def lmi_one(f, r):
        fn = jnp.sqrt(jnp.sum(f * f, axis=0, keepdims=True))
        fh = f / fn
        rh = r / jnp.sqrt(jnp.sum(r * r))
        cos = jnp.einsum('chw,c->hw', fh, rh)
        return jnp.mean(cos)

    lmap = jnp.stack([jnp.stack([lmi_one(features[i], representation[j])
                                 for j in range(B)]) for i in range(B)])
    gmap = jnp.stack([jnp.stack([gmi_one(features[i], representation[j])
                                 for j in range(B)]) for i in range(B)])
    lsm = jax.nn.softmax(lmap, axis=1)
    gsm = jax.nn.softmax(gmap, axis=1)
    eye = jnp.eye(B, dtype=jnp.float32)
    zf = 1.0 - eye
    lscore = jnp.sum(zf * lsm) - jnp.sum(eye * lsm)
    gscore = jnp.sum(zf * gsm) - jnp.sum(eye * lsm)   # same bug as PyTorch source
    return lscore + gscore


if __name__ == "__main__":
    key = jax.random.PRNGKey(0)
    k_feat, k_rep, k_lab, k_par = jax.random.split(key, 4)

    # cfg.latent_dim = C = 4, cfg.img_size // 32 = 8  ->  Linear in_dim = 4*8*8 + 4 = 260
    B, C, H, W = 2, 4, 8, 8
    features = jax.random.normal(k_feat, (B, C, H, W), jnp.float32)
    representation = jax.random.normal(k_rep, (B, C), jnp.float32)
    labels = jax.random.randint(k_lab, (B, 3), 0, 2)   # unused by forward, kept for signature fidelity
    params = init_params(k_par, C * H * W + C)

    out = total_mi_forward(features, representation, labels, params)
    out = jax.block_until_ready(out)

    ref = total_mi_reference(features, representation, params)
    assert jnp.allclose(out, ref, atol=1e-3, rtol=1e-3), (float(out), float(ref))
    print("KERNEL_OK")
</pallas_src>

<mosaic_0001>
module attributes {stable_mosaic.version = 11 : i64} {
  func.func @total_mi_kernel(%arg0: memref<4x128xf32, #tpu.memory_space<vmem>>, %arg1: memref<2x256xbf16, #tpu.memory_space<vmem>>, %arg2: memref<2x4xf32, #tpu.memory_space<vmem>>, %arg3: memref<2x128xf32, #tpu.memory_space<vmem>>, %arg4: memref<4x2xf32, #tpu.memory_space<vmem>>, %arg5: memref<4x2xf32, #tpu.memory_space<vmem>>, %arg6: memref<2x4xf32, #tpu.memory_space<vmem>>, %arg7: memref<256x1024xbf16, #tpu.memory_space<vmem>>, %arg8: memref<4x1024xbf16, #tpu.memory_space<vmem>>, %arg9: memref<1x1024xf32, #tpu.memory_space<vmem>>, %arg10: memref<1024x512xbf16, #tpu.memory_space<vmem>>, %arg11: memref<1x512xf32, #tpu.memory_space<vmem>>, %arg12: memref<512x256xbf16, #tpu.memory_space<vmem>>, %arg13: memref<1x256xf32, #tpu.memory_space<vmem>>, %arg14: memref<1x256xbf16, #tpu.memory_space<vmem>>, %arg15: memref<1x1xf32, #tpu.memory_space<vmem>>, %arg16: memref<1x1xf32, #tpu.memory_space<vmem>>) attributes {dimension_semantics = [], scalar_prefetch = 0 : i64, scratch_operands = 0 : i64, tpu.core_type = #tpu.core_type<tc>} {
    %c0 = arith.constant 0 : index
    %c0_0 = arith.constant 0 : index
    %0 = vector.load %arg2[%c0, %c0_0] : memref<2x4xf32, #tpu.memory_space<vmem>>, vector<2x4xf32>
    %c0_1 = arith.constant 0 : index
    %c0_2 = arith.constant 0 : index
    %1 = vector.load %arg0[%c0_1, %c0_2] : memref<4x128xf32, #tpu.memory_space<vmem>>, vector<4x128xf32>
    %2 = arith.mulf %1, %1 : vector<4x128xf32>
    %cst = arith.constant dense<0.000000e+00> : vector<128xf32>
    %3 = vector.multi_reduction <add>, %2, %cst [0] : vector<4x128xf32> to vector<128xf32>
    %4 = vector.shape_cast %3 : vector<128xf32> to vector<1x128xf32>
    %5 = math.rsqrt %4 : vector<1x128xf32>
    %6 = vector.broadcast %5 : vector<1x128xf32> to vector<4x128xf32>
    %7 = arith.mulf %1, %6 : vector<4x128xf32>
    %8 = arith.mulf %0, %0 : vector<2x4xf32>
    %cst_3 = arith.constant dense<0.000000e+00> : vector<2xf32>
    %9 = vector.multi_reduction <add>, %8, %cst_3 [1] : vector<2x4xf32> to vector<2xf32>
    %10 = vector.shape_cast %9 : vector<2xf32> to vector<2x1xf32>
    %11 = math.rsqrt %10 : vector<2x1xf32>
    %12 = vector.broadcast %11 : vector<2x1xf32> to vector<2x4xf32>
    %13 = arith.mulf %0, %12 : vector<2x4xf32>
    %c0_4 = arith.constant 0 : index
    %c0_5 = arith.constant 0 : index
    %14 = vector.load %arg3[%c0_4, %c0_5] : memref<2x128xf32, #tpu.memory_space<vmem>>, vector<2x128xf32>
    %cst_6 = arith.constant dense<0.000000e+00> : vector<2x4xf32>
    %15 = tpu.matmul %14, %7, %cst_6 {dimension_numbers = #tpu.dot_dimension_numbers<[1], [1], [0], [0], [0, 0, 1, 0], [], []>} : vector<2x128xf32>, vector<4x128xf32>, vector<2x4xf32> -> vector<2x4xf32>
    %cst_7 = arith.constant dense<0.000000e+00> : vector<2x2xf32>
    %16 = tpu.matmul %15, %13, %cst_7 {dimension_numbers = #tpu.dot_dimension_numbers<[1], [1], [0], [0], [0, 0, 1, 0], [], []>} : vector<2x4xf32>, vector<2x4xf32>, vector<2x2xf32> -> vector<2x2xf32>
    %cst_8 = arith.constant 1.562500e-02 : f32
    %17 = vector.broadcast %cst_8 : f32 to vector<2x2xf32>
    %18 = arith.mulf %16, %17 : vector<2x2xf32>
    %c0_9 = arith.constant 0 : index
    %c0_10 = arith.constant 0 : index
    %19 = vector.load %arg1[%c0_9, %c0_10] : memref<2x256xbf16, #tpu.memory_space<vmem>>, vector<2x256xbf16>
    %c0_11 = arith.constant 0 : index
    %c0_12 = arith.constant 0 : index
    %20 = vector.load %arg7[%c0_11, %c0_12] : memref<256x1024xbf16, #tpu.memory_space<vmem>>, vector<256x1024xbf16>
    %cst_13 = arith.constant dense<0.000000e+00> : vector<2x1024xf32>
    %21 = tpu.matmul %19, %20, %cst_13 {dimension_numbers = #tpu.dot_dimension_numbers<[1], [0], [0], [1], [0, 0, 1, 1], [], []>} : vector<2x256xbf16>, vector<256x1024xbf16>, vector<2x1024xf32> -> vector<2x1024xf32>
    %c0_14 = arith.constant 0 : index
    %c0_15 = arith.constant 0 : index
    %22 = vector.load %arg8[%c0_14, %c0_15] : memref<4x1024xbf16, #tpu.memory_space<vmem>>, vector<4x1024xbf16>
    %23 = arith.extf %22 : vector<4x1024xbf16> to vector<4x1024xf32>
    %cst_16 = arith.constant dense<0.000000e+00> : vector<2x1024xf32>
    %24 = tpu.matmul %0, %23, %cst_16 {dimension_numbers = #tpu.dot_dimension_numbers<[1], [0], [0], [1], [0, 0, 1, 1], [], []>} : vector<2x4xf32>, vector<4x1024xf32>, vector<2x1024xf32> -> vector<2x1024xf32>
    %c0_17 = arith.constant 0 : index
    %c0_18 = arith.constant 0 : index
    %25 = vector.load %arg4[%c0_17, %c0_18] : memref<4x2xf32, #tpu.memory_space<vmem>>, vector<4x2xf32>
    %c0_19 = arith.constant 0 : index
    %c0_20 = arith.constant 0 : index
    %26 = vector.load %arg5[%c0_19, %c0_20] : memref<4x2xf32, #tpu.memory_space<vmem>>, vector<4x2xf32>
    %cst_21 = arith.constant dense<0.000000e+00> : vector<4x1024xf32>
    %27 = tpu.matmul %25, %21, %cst_21 {dimension_numbers = #tpu.dot_dimension_numbers<[1], [0], [0], [1], [0, 0, 1, 1], [], []>} : vector<4x2xf32>, vector<2x1024xf32>, vector<4x1024xf32> -> vector<4x1024xf32>
    %cst_22 = arith.constant dense<0.000000e+00> : vector<4x1024xf32>
    %28 = tpu.matmul %26, %24, %cst_22 {dimension_numbers = #tpu.dot_dimension_numbers<[1], [0], [0], [1], [0, 0, 1, 1], [], []>} : vector<4x2xf32>, vector<2x1024xf32>, vector<4x1024xf32> -> vector<4x1024xf32>
    %29 = arith.addf %27, %28 : vector<4x1024xf32>
    %c0_23 = arith.constant 0 : index
    %c0_24 = arith.constant 0 : index
    %30 = vector.load %arg9[%c0_23, %c0_24] : memref<1x1024xf32, #tpu.memory_space<vmem>>, vector<1x1024xf32>
    %31 = vector.broadcast %30 : vector<1x1024xf32> to vector<4x1024xf32>
    %32 = arith.addf %29, %31 : vector<4x1024xf32>
    %cst_25 = arith.constant 0.000000e+00 : f32
    %33 = vector.broadcast %cst_25 : f32 to vector<4x1024xf32>
    %34 = arith.cmpf oge, %32, %33 : vector<4x1024xf32>
    %cst_26 = arith.constant 0.00999999977 : f32
    %35 = vector.broadcast %cst_26 : f32 to vector<4x1024xf32>
    %36 = arith.mulf %35, %32 : vector<4x1024xf32>
    %37 = arith.select %34, %32, %36 : vector<4x1024xi1>, vector<4x1024xf32>
    %c0_27 = arith.constant 0 : index
    %c0_28 = arith.constant 0 : index
    %38 = vector.load %arg10[%c0_27, %c0_28] : memref<1024x512xbf16, #tpu.memory_space<vmem>>, vector<1024x512xbf16>
    %39 = arith.extf %38 : vector<1024x512xbf16> to vector<1024x512xf32>
    %cst_29 = arith.constant dense<0.000000e+00> : vector<4x512xf32>
    %40 = tpu.matmul %37, %39, %cst_29 {dimension_numbers = #tpu.dot_dimension_numbers<[1], [0], [0], [1], [0, 0, 1, 1], [], []>} : vector<4x1024xf32>, vector<1024x512xf32>, vector<4x512xf32> -> vector<4x512xf32>
    %c0_30 = arith.constant 0 : index
    %c0_31 = arith.constant 0 : index
    %41 = vector.load %arg11[%c0_30, %c0_31] : memref<1x512xf32, #tpu.memory_space<vmem>>, vector<1x512xf32>
    %42 = vector.broadcast %41 : vector<1x512xf32> to vector<4x512xf32>
    %43 = arith.addf %40, %42 : vector<4x512xf32>
    %cst_32 = arith.constant 0.000000e+00 : f32
    %44 = vector.broadcast %cst_32 : f32 to vector<4x512xf32>
    %45 = arith.cmpf oge, %43, %44 : vector<4x512xf32>
    %cst_33 = arith.constant 0.00999999977 : f32
    %46 = vector.broadcast %cst_33 : f32 to vector<4x512xf32>
    %47 = arith.mulf %46, %43 : vector<4x512xf32>
    %48 = arith.select %45, %43, %47 : vector<4x512xi1>, vector<4x512xf32>
    %c0_34 = arith.constant 0 : index
    %c0_35 = arith.constant 0 : index
    %49 = vector.load %arg12[%c0_34, %c0_35] : memref<512x256xbf16, #tpu.memory_space<vmem>>, vector<512x256xbf16>
    %50 = arith.extf %49 : vector<512x256xbf16> to vector<512x256xf32>
    %cst_36 = arith.constant dense<0.000000e+00> : vector<4x256xf32>
    %51 = tpu.matmul %48, %50, %cst_36 {dimension_numbers = #tpu.dot_dimension_numbers<[1], [0], [0], [1], [0, 0, 1, 1], [], []>} : vector<4x512xf32>, vector<512x256xf32>, vector<4x256xf32> -> vector<4x256xf32>
    %c0_37 = arith.constant 0 : index
    %c0_38 = arith.constant 0 : index
    %52 = vector.load %arg13[%c0_37, %c0_38] : memref<1x256xf32, #tpu.memory_space<vmem>>, vector<1x256xf32>
    %53 = vector.broadcast %52 : vector<1x256xf32> to vector<4x256xf32>
    %54 = arith.addf %51, %53 : vector<4x256xf32>
    %cst_39 = arith.constant 0.000000e+00 : f32
    %55 = vector.broadcast %cst_39 : f32 to vector<4x256xf32>
    %56 = arith.cmpf oge, %54, %55 : vector<4x256xf32>
    %cst_40 = arith.constant 0.00999999977 : f32
    %57 = vector.broadcast %cst_40 : f32 to vector<4x256xf32>
    %58 = arith.mulf %57, %54 : vector<4x256xf32>
    %59 = arith.select %56, %54, %58 : vector<4x256xi1>, vector<4x256xf32>
    %c0_41 = arith.constant 0 : index
    %c0_42 = arith.constant 0 : index
    %60 = vector.load %arg14[%c0_41, %c0_42] : memref<1x256xbf16, #tpu.memory_space<vmem>>, vector<1x256xbf16>
    %61 = arith.extf %60 : vector<1x256xbf16> to vector<1x256xf32>
    %62 = vector.broadcast %61 : vector<1x256xf32> to vector<4x256xf32>
    %63 = arith.mulf %59, %62 : vector<4x256xf32>
    %cst_43 = arith.constant dense<0.000000e+00> : vector<4xf32>
    %64 = vector.multi_reduction <add>, %63, %cst_43 [1] : vector<4x256xf32> to vector<4xf32>
    %65 = vector.shape_cast %64 : vector<4xf32> to vector<4x1xf32>
    %c0_44 = arith.constant 0 : index
    %c0_45 = arith.constant 0 : index
    %66 = vector.load %arg15[%c0_44, %c0_45] : memref<1x1xf32, #tpu.memory_space<vmem>>, vector<1x1xf32>
    %67 = vector.broadcast %66 : vector<1x1xf32> to vector<4x1xf32>
    %68 = arith.addf %65, %67 : vector<4x1xf32>
    %cst_46 = arith.constant 0.000000e+00 : f32
    %69 = vector.broadcast %cst_46 : f32 to vector<4x1xf32>
    %70 = arith.subf %69, %68 : vector<4x1xf32>
    %71 = math.exp %70 : vector<4x1xf32>
    %cst_47 = arith.constant 1.000000e+00 : f32
    %72 = vector.broadcast %cst_47 : f32 to vector<4x1xf32>
    %73 = arith.addf %72, %71 : vector<4x1xf32>
    %cst_48 = arith.constant 1.000000e+00 : f32
    %74 = vector.broadcast %cst_48 : f32 to vector<4x1xf32>
    %75 = arith.divf %74, %73 : vector<4x1xf32>
    %c0_49 = arith.constant 0 : index
    %c0_50 = arith.constant 0 : index
    %76 = vector.load %arg6[%c0_49, %c0_50] : memref<2x4xf32, #tpu.memory_space<vmem>>, vector<2x4xf32>
    %77 = vector.broadcast %75 : vector<4x1xf32> to vector<4x2xf32>
    %78 = arith.mulf %26, %77 : vector<4x2xf32>
    %cst_51 = arith.constant dense<0.000000e+00> : vector<2x2xf32>
    %79 = tpu.matmul %76, %78, %cst_51 {dimension_numbers = #tpu.dot_dimension_numbers<[1], [0], [0], [1], [0, 0, 1, 1], [], []>} : vector<2x4xf32>, vector<4x2xf32>, vector<2x2xf32> -> vector<2x2xf32>
    %cst_52 = arith.constant dense<0xFF800000> : vector<2xf32>
    %80 = vector.multi_reduction <maximumf>, %18, %cst_52 [1] : vector<2x2xf32> to vector<2xf32>
    %81 = vector.shape_cast %80 : vector<2xf32> to vector<2x1xf32>
    %82 = vector.broadcast %81 : vector<2x1xf32> to vector<2x2xf32>
    %83 = arith.subf %18, %82 : vector<2x2xf32>
    %84 = math.exp %83 : vector<2x2xf32>
    %cst_53 = arith.constant dense<0.000000e+00> : vector<2xf32>
    %85 = vector.multi_reduction <add>, %84, %cst_53 [1] : vector<2x2xf32> to vector<2xf32>
    %86 = vector.shape_cast %85 : vector<2xf32> to vector<2x1xf32>
    %87 = vector.broadcast %86 : vector<2x1xf32> to vector<2x2xf32>
    %88 = arith.divf %84, %87 : vector<2x2xf32>
    %cst_54 = arith.constant dense<0xFF800000> : vector<2xf32>
    %89 = vector.multi_reduction <maximumf>, %79, %cst_54 [1] : vector<2x2xf32> to vector<2xf32>
    %90 = vector.shape_cast %89 : vector<2xf32> to vector<2x1xf32>
    %91 = vector.broadcast %90 : vector<2x1xf32> to vector<2x2xf32>
    %92 = arith.subf %79, %91 : vector<2x2xf32>
    %93 = math.exp %92 : vector<2x2xf32>
    %cst_55 = arith.constant dense<0.000000e+00> : vector<2xf32>
    %94 = vector.multi_reduction <add>, %93, %cst_55 [1] : vector<2x2xf32> to vector<2xf32>
    %95 = vector.shape_cast %94 : vector<2xf32> to vector<2x1xf32>
    %96 = vector.broadcast %95 : vector<2x1xf32> to vector<2x2xf32>
    %97 = arith.divf %93, %96 : vector<2x2xf32>
    %98 = tpu.iota {dimensions = array<i32: 0>} : vector<2x2xi32>
    %99 = tpu.iota {dimensions = array<i32: 1>} : vector<2x2xi32>
    %100 = arith.cmpi eq, %98, %99 : vector<2x2xi32>
    %101 = arith.extui %100 : vector<2x2xi1> to vector<2x2xi32>
    %102 = arith.sitofp %101 : vector<2x2xi32> to vector<2x2xf32>
    %cst_56 = arith.constant 1.000000e+00 : f32
    %103 = vector.broadcast %cst_56 : f32 to vector<2x2xf32>
    %104 = arith.subf %103, %102 : vector<2x2xf32>
    %105 = arith.mulf %102, %88 : vector<2x2xf32>
    %cst_57 = arith.constant dense<0.000000e+00> : vector<2xf32>
    %106 = vector.multi_reduction <add>, %105, %cst_57 [1] : vector<2x2xf32> to vector<2xf32>
    %107 = vector.shape_cast %106 : vector<2xf32> to vector<2x1xf32>
    %cst_58 = arith.constant dense<0.000000e+00> : vector<1xf32>
    %108 = vector.multi_reduction <add>, %107, %cst_58 [0] : vector<2x1xf32> to vector<1xf32>
    %109 = vector.shape_cast %108 : vector<1xf32> to vector<1x1xf32>
    %110 = arith.mulf %104, %88 : vector<2x2xf32>
    %cst_59 = arith.constant dense<0.000000e+00> : vector<2xf32>
    %111 = vector.multi_reduction <add>, %110, %cst_59 [1] : vector<2x2xf32> to vector<2xf32>
    %112 = vector.shape_cast %111 : vector<2xf32> to vector<2x1xf32>
    %cst_60 = arith.constant dense<0.000000e+00> : vector<1xf32>
    %113 = vector.multi_reduction <add>, %112, %cst_60 [0] : vector<2x1xf32> to vector<1xf32>
    %114 = vector.shape_cast %113 : vector<1xf32> to vector<1x1xf32>
    %115 = arith.mulf %104, %97 : vector<2x2xf32>
    %cst_61 = arith.constant dense<0.000000e+00> : vector<2xf32>
    %116 = vector.multi_reduction <add>, %115, %cst_61 [1] : vector<2x2xf32> to vector<2xf32>
    %117 = vector.shape_cast %116 : vector<2xf32> to vector<2x1xf32>
    %cst_62 = arith.constant dense<0.000000e+00> : vector<1xf32>
    %118 = vector.multi_reduction <add>, %117, %cst_62 [0] : vector<2x1xf32> to vector<1xf32>
    %119 = vector.shape_cast %118 : vector<1xf32> to vector<1x1xf32>
    %120 = arith.subf %114, %109 : vector<1x1xf32>
    %121 = arith.subf %119, %109 : vector<1x1xf32>
    %122 = arith.addf %120, %121 : vector<1x1xf32>
    %c0_63 = arith.constant 0 : index
    %c0_64 = arith.constant 0 : index
    %123 = vector.load %arg16[%c0_63, %c0_64] : memref<1x1xf32, #tpu.memory_space<vmem>>, vector<1x1xf32>
    tpu.vector_store %arg16[%c0_63, %c0_64], %122 {strides = array<i32>} : memref<1x1xf32, #tpu.memory_space<vmem>>, vector<1x1xf32>,
    return
  }
}

</mosaic_0001>

<llo_original>
// kernel: total_mi_forward.1
$region0: #{total_mi_forward.1}
  #allocation0 [shape = 'u32[]', space=smem, size = 0x4, offset = 0x4, fixed_abs, tag = 'smem constant byte address 0x4 - core index']
  #allocation1 [shape = 'u32[144,128]{1,0:T(1,128)}', space=vmem, size = 0x12000, scoped, tag = 'internal scratch']
  #allocation2 [shape = 'f32[1,1]{1,0:T(1,128)S(1)}', space=vmem, size = 0x200, scoped, tag = 'scoped memory for total_mi_forward.1']
  %s0 = inlined_call_operand.vmem [shape: f32[4,128], index: 0, kind: input, shape index: {}]
  %s1 = inlined_call_operand.vmem [shape: bf16[2,256], index: 1, kind: input, shape index: {}]
  %s2 = inlined_call_operand.vmem [shape: f32[2,4], index: 2, kind: input, shape index: {}]
  %s3 = inlined_call_operand.vmem [shape: f32[2,128], index: 3, kind: input, shape index: {}]
  %s4 = inlined_call_operand.vmem [shape: f32[4,2], index: 4, kind: input, shape index: {}]
  %s5 = inlined_call_operand.vmem [shape: f32[4,2], index: 5, kind: input, shape index: {}]
  %s6 = inlined_call_operand.vmem [shape: f32[2,4], index: 6, kind: input, shape index: {}]
  %s7 = inlined_call_operand.vmem [shape: bf16[256,1024], index: 7, kind: input, shape index: {}]
  %s8 = inlined_call_operand.vmem [shape: bf16[4,1024], index: 8, kind: input, shape index: {}]
  %s9 = inlined_call_operand.vmem [shape: f32[1,1024], index: 9, kind: input, shape index: {}]
  %s10 = inlined_call_operand.vmem [shape: bf16[1024,512], index: 10, kind: input, shape index: {}]
  %s11 = inlined_call_operand.vmem [shape: f32[1,512], index: 11, kind: input, shape index: {}]
  %s12 = inlined_call_operand.vmem [shape: bf16[512,256], index: 12, kind: input, shape index: {}]
  %s13 = inlined_call_operand.vmem [shape: f32[1,256], index: 13, kind: input, shape index: {}]
  %s14 = inlined_call_operand.vmem [shape: bf16[1,256], index: 14, kind: input, shape index: {}]
  %s15 = inlined_call_operand.<no memory space> [shape: f32[1,1], index: 15, kind: input, shape index: {}]
  %s16 = inlined_call_operand.hbm [shape: f32[1,1], index: 16, kind: output, shape index: {}]
  %s17 = sld [smem:[#allocation0]]
  $region74: #{total_mi_forward.1} parent=0
    _
  %s19 = ssub.s32 1, %s17
  %s20 = scalar_select 0, %s19, %s17
  %v21 = vstv %s15
  %22 = vst [vmem:[#allocation2] sm:$0x1] %v21
  $region1: #{total_mi_forward.1} parent=0
    #allocation3 [shape = 'u8[512]{0}', space=vmem, size = 0x400, scoped, tag = 'output window, operand 0, single buffered']
    #allocation4 [shape = 's32[1]{0}', space=sflag, size = 0x4, scoped, tag = 'scoped memory for total_mi_forward.1']
    %23 = vsyncpa [#allocation4], 0
    // Predicated region
    $region2: #{total_mi_forward.1} parent=1 // pred_check
      _
    $region3: #{total_mi_forward.1} parent=1 // pred_check_branch
      %25 = sbr.rel (0) target = $region5
    $region4: #{total_mi_forward.1} parent=1 // pred_region
      _
    $region5: #{total_mi_forward.1} parent=1 // pred_fallthru
      _
    // Predicated region
    $region6: #{total_mi_forward.1} parent=1 // pred_check
      _
    $region7: #{total_mi_forward.1} parent=1 // pred_check_branch
      %27 = sbr.rel (0) target = $region9
    $region8: #{total_mi_forward.1} parent=1 // pred_region
      _
    $region9: #{total_mi_forward.1} parent=1 // pred_fallthru
      _
    // Predicated region
    $region10: #{total_mi_forward.1} parent=1 // pred_check
      _
    $region11: #{total_mi_forward.1} parent=1 // pred_check_branch
      %29 = sbr.rel (0) target = $region13
    $region12: #{total_mi_forward.1} parent=1 // pred_region
      _
    $region13: #{total_mi_forward.1} parent=1 // pred_fallthru
      _
    // Predicated region
    $region14: #{total_mi_forward.1} parent=1 // pred_check
      _
    $region15: #{total_mi_forward.1} parent=1 // pred_check_branch
      %31 = sbr.rel (0) target = $region17
    $region16: #{total_mi_forward.1} parent=1 // pred_region
      _
    $region17: #{total_mi_forward.1} parent=1 // pred_fallthru
      _
    // Predicated region
    $region18: #{total_mi_forward.1} parent=1 // pred_check
      _
    $region19: #{total_mi_forward.1} parent=1 // pred_check_branch
      %33 = sbr.rel (0) target = $region21
    $region20: #{total_mi_forward.1} parent=1 // pred_region
      _
    $region21: #{total_mi_forward.1} parent=1 // pred_fallthru
      _
    // Predicated region
    $region22: #{total_mi_forward.1} parent=1 // pred_check
      _
    $region23: #{total_mi_forward.1} parent=1 // pred_check_branch
      %35 = sbr.rel (0) target = $region25
    $region24: #{total_mi_forward.1} parent=1 // pred_region
      _
    $region25: #{total_mi_forward.1} parent=1 // pred_fallthru
      _
    // Predicated region
    $region26: #{total_mi_forward.1} parent=1 // pred_check
      _
    $region27: #{total_mi_forward.1} parent=1 // pred_check_branch
      %37 = sbr.rel (0) target = $region29
    $region28: #{total_mi_forward.1} parent=1 // pred_region
      _
    $region29: #{total_mi_forward.1} parent=1 // pred_fallthru
      _
    // Predicated region
    $region30: #{total_mi_forward.1} parent=1 // pred_check
      _
    $region31: #{total_mi_forward.1} parent=1 // pred_check_branch
      %39 = sbr.rel (0) target = $region33
    $region32: #{total_mi_forward.1} parent=1 // pred_region
      _
    $region33: #{total_mi_forward.1} parent=1 // pred_fallthru
      _
    // Predicated region
    $region34: #{total_mi_forward.1} parent=1 // pred_check
      _
    $region35: #{total_mi_forward.1} parent=1 // pred_check_branch
      %41 = sbr.rel (0) target = $region37
    $region36: #{total_mi_forward.1} parent=1 // pred_region
      _
    $region37: #{total_mi_forward.1} parent=1 // pred_fallthru
      _
    // Predicated region
    $region38: #{total_mi_forward.1} parent=1 // pred_check
      _
    $region39: #{total_mi_forward.1} parent=1 // pred_check_branch
      %43 = sbr.rel (0) target = $region41
    $region40: #{total_mi_forward.1} parent=1 // pred_region
      _
    $region41: #{total_mi_forward.1} parent=1 // pred_fallthru
      _
    // Predicated region
    $region42: #{total_mi_forward.1} parent=1 // pred_check
      _
    $region43: #{total_mi_forward.1} parent=1 // pred_check_branch
      %45 = sbr.rel (0) target = $region45
    $region44: #{total_mi_forward.1} parent=1 // pred_region
      _
    $region45: #{total_mi_forward.1} parent=1 // pred_fallthru
      _
    // Predicated region
    $region46: #{total_mi_forward.1} parent=1 // pred_check
      _
    $region47: #{total_mi_forward.1} parent=1 // pred_check_branch
      %47 = sbr.rel (0) target = $region49
    $region48: #{total_mi_forward.1} parent=1 // pred_region
      _
    $region49: #{total_mi_forward.1} parent=1 // pred_fallthru
      _
    // Predicated region
    $region50: #{total_mi_forward.1} parent=1 // pred_check
      _
    $region51: #{total_mi_forward.1} parent=1 // pred_check_branch
      %49 = sbr.rel (0) target = $region53
    $region52: #{total_mi_forward.1} parent=1 // pred_region
      _
    $region53: #{total_mi_forward.1} parent=1 // pred_fallthru
      _
    // Predicated region
    $region54: #{total_mi_forward.1} parent=1 // pred_check
      _
    $region55: #{total_mi_forward.1} parent=1 // pred_check_branch
      %51 = sbr.rel (0) target = $region57
    $region56: #{total_mi_forward.1} parent=1 // pred_region
      _
    $region57: #{total_mi_forward.1} parent=1 // pred_fallthru
      _
    // Predicated region
    $region58: #{total_mi_forward.1} parent=1 // pred_check
      _
    $region59: #{total_mi_forward.1} parent=1 // pred_check_branch
      %53 = sbr.rel (0) target = $region61
    $region60: #{total_mi_forward.1} parent=1 // pred_region
      _
    $region61: #{total_mi_forward.1} parent=1 // pred_fallthru
      _
    // Predicated region
    $region62: #{total_mi_forward.1} parent=1 // pred_check
      _
    $region63: #{total_mi_forward.1} parent=1 // pred_check_branch
      %55 = sbr.rel (0) target = $region65
    $region64: #{total_mi_forward.1} parent=1 // pred_region
      _
    $region65: #{total_mi_forward.1} parent=1 // pred_fallthru
      _
    %v56 = vld [vmem:[%s2] sm:$0x3]
    %v57 = vld [vmem:[%s0] sm:$0xf]
    %v58 = vmul.f32 %v57, %v57
    %vm59 = vcmask 1043456
    %v60 = vsel %vm59, %v58, 0.0
    %v61 = vrot.slane %v60, 4
    %v62 = vadd.f32 %v60, %v61
    %v63 = vrot.slane %v62, 2
    %v64 = vadd.f32 %v62, %v63
    %v65 = vrot.slane %v64, 1
    %v66 = vadd.f32 %v64, %v65
    %v67 = vrsqrt.pop %v66
    %v68 = vmul.f32 %v57, %v67
    %v69 = vmul.f32 %v56, %v56
    %vm70 = vcmask 25600
    %v71 = vsel %vm70, %v69, 0.0
    %72 = vadd.xlane.f32.xlu0 %v71
    %v73 = vpop.xlane.xlu0 %72
    %v74 = vrsqrt.pop %v73
    %v75 = vmul.f32 %v56, %v74
    %v76 = vld [vmem:[%s3] sm:$0x3]
    %77 = vmatprep.subr.mxu0 0.0
    %78 = vmatpush1.xpose.msra.mxu0 0.0
    %79 = vmatprep.subr.mxu0 0.0
    %80 = vmatpush1.xpose.msra.mxu0 0.0
    %81 = vmatprep.subr.mxu0 0.0
    %82 = vmatpush1.xpose.msra.mxu0 0.0
    %83 = vmatprep.subr.mxu0 0.0
    %84 = vmatpush1.xpose.msra.mxu0 0.0
    %85 = vmatprep.subr.mxu0 0.0
    %86 = vmatpush1.xpose.msra.mxu0 0.0
    %87 = vmatprep.subr.mxu0 0.0
    %88 = vmatpush1.xpose.msra.mxu0 0.0
    %89 = vmatprep.subr.mxu0 0.0
    %90 = vmatpush1.xpose.msra.mxu0 0.0
    %91 = vmatprep.subr.mxu0 0.0
    %92 = vmatpush1.xpose.msra.mxu0 0.0
    %93 = vmatprep.subr.mxu0 0.0
    %94 = vmatpush1.xpose.msra.mxu0 0.0
    %95 = vmatprep.subr.mxu0 0.0
    %96 = vmatpush1.xpose.msra.mxu0 0.0
    %97 = vmatprep.subr.mxu0 0.0
    %98 = vmatpush1.xpose.msra.mxu0 0.0
    %99 = vmatprep.subr.mxu0 0.0
    %100 = vmatpush1.xpose.msra.mxu0 0.0
    %101 = vmatprep.subr.mxu0 0.0
    %102 = vmatpush1.xpose.msra.mxu0 0.0
    %103 = vmatprep.subr.mxu0 0.0
    %104 = vmatpush1.xpose.msra.mxu0 0.0
    %105 = vmatprep.subr.mxu0 0.0
    %106 = vmatpush1.xpose.msra.mxu0 0.0
    %107 = vmatprep.subr.mxu0 0.0
    %108 = vmatpush1.xpose.msra.mxu0 %v68
    %109 = vmatprep.subr.mxu0 0.0
    %110 = vmatpush2.xpose.msra.mxu0 0.0
    %111 = vmatprep.subr.mxu0 0.0
    %112 = vmatpush2.xpose.msra.mxu0 0.0
    %113 = vmatprep.subr.mxu0 0.0
    %114 = vmatpush2.xpose.msra.mxu0 0.0
    %115 = vmatprep.subr.mxu0 0.0
    %116 = vmatpush2.xpose.msra.mxu0 0.0
    %117 = vmatprep.subr.mxu0 0.0
    %118 = vmatpush2.xpose.msra.mxu0 0.0
    %119 = vmatprep.subr.mxu0 0.0
    %120 = vmatpush2.xpose.msra.mxu0 0.0
    %121 = vmatprep.subr.mxu0 0.0
    %122 = vmatpush2.xpose.msra.mxu0 0.0
    %123 = vmatprep.subr.mxu0 0.0
    %124 = vmatpush2.xpose.msra.mxu0 0.0
    %125 = vmatprep.subr.mxu0 0.0
    %126 = vmatpush2.xpose.msra.mxu0 0.0
    %127 = vmatprep.subr.mxu0 0.0
    %128 = vmatpush2.xpose.msra.mxu0 0.0
    %129 = vmatprep.subr.mxu0 0.0
    %130 = vmatpush2.xpose.msra.mxu0 0.0
    %131 = vmatprep.subr.mxu0 0.0
    %132 = vmatpush2.xpose.msra.mxu0 0.0
    %133 = vmatprep.subr.mxu0 0.0
    %134 = vmatpush2.xpose.msra.mxu0 0.0
    %135 = vmatprep.subr.mxu0 0.0
    %136 = vmatpush2.xpose.msra.mxu0 0.0
    %137 = vmatprep.subr.mxu0 0.0
    %138 = vmatpush2.xpose.msra.mxu0 0.0
    %139 = vmatprep.subr.mxu0 0.0
    %140 = vmatpush2.xpose.msra.mxu0 0.0
    %141 = vmatprep.mubr.f32.mxu0 0.0
    %142 = vmatmul.mubr.f32.gmra.mxu0 %v76
    %v143 = vpop.f32.mrf.mxu0
    %v144 = vadd.f32 0.0, %v143
    %v145 = vpop.f32.mrf.mxu0
    %146 = vdwg.mxu0
    %vm147 = vcmask 31744
    %v149 = vsel %vm147, %v144, 0
    %v152 = vsel %vm147, %v75, 0
    %154 = vmatprep.subr.mxu0 0.0
    %155 = vmatpush1.xpose.msra.mxu0 0.0
    %156 = vmatprep.subr.mxu0 0.0
    %157 = vmatpush1.xpose.msra.mxu0 0.0
    %158 = vmatprep.subr.mxu0 0.0
    %159 = vmatpush1.xpose.msra.mxu0 0.0
    %160 = vmatprep.subr.mxu0 0.0
    %161 = vmatpush1.xpose.msra.mxu0 0.0
    %162 = vmatprep.subr.mxu0 0.0
    %163 = vmatpush1.xpose.msra.mxu0 0.0
    %164 = vmatprep.subr.mxu0 0.0
    %165 = vmatpush1.xpose.msra.mxu0 0.0
    %166 = vmatprep.subr.mxu0 0.0
    %167 = vmatpush1.xpose.msra.mxu0 0.0
    %168 = vmatprep.subr.mxu0 0.0
    %169 = vmatpush1.xpose.msra.mxu0 0.0
    %170 = vmatprep.subr.mxu0 0.0
    %171 = vmatpush1.xpose.msra.mxu0 0.0
    %172 = vmatprep.subr.mxu0 0.0
    %173 = vmatpush1.xpose.msra.mxu0 0.0
    %174 = vmatprep.subr.mxu0 0.0
    %175 = vmatpush1.xpose.msra.mxu0 0.0
    %176 = vmatprep.subr.mxu0 0.0
    %177 = vmatpush1.xpose.msra.mxu0 0.0
    %178 = vmatprep.subr.mxu0 0.0
    %179 = vmatpush1.xpose.msra.mxu0 0.0
    %180 = vmatprep.subr.mxu0 0.0
    %181 = vmatpush1.xpose.msra.mxu0 0.0
    %182 = vmatprep.subr.mxu0 0.0
    %183 = vmatpush1.xpose.msra.mxu0 0.0
    %184 = vmatprep.subr.mxu0 0.0
    %185 = vmatpush1.xpose.msra.mxu0 %v152
    %186 = vmatprep.subr.mxu0 0.0
    %187 = vmatpush2.xpose.msra.mxu0 0.0
    %188 = vmatprep.subr.mxu0 0.0
    %189 = vmatpush2.xpose.msra.mxu0 0.0
    %190 = vmatprep.subr.mxu0 0.0
    %191 = vmatpush2.xpose.msra.mxu0 0.0
    %192 = vmatprep.subr.mxu0 0.0
    %193 = vmatpush2.xpose.msra.mxu0 0.0
    %194 = vmatprep.subr.mxu0 0.0
    %195 = vmatpush2.xpose.msra.mxu0 0.0
    %196 = vmatprep.subr.mxu0 0.0
    %197 = vmatpush2.xpose.msra.mxu0 0.0
    %198 = vmatprep.subr.mxu0 0.0
    %199 = vmatpush2.xpose.msra.mxu0 0.0
    %200 = vmatprep.subr.mxu0 0.0
    %201 = vmatpush2.xpose.msra.mxu0 0.0
    %202 = vmatprep.subr.mxu0 0.0
    %203 = vmatpush2.xpose.msra.mxu0 0.0
    %204 = vmatprep.subr.mxu0 0.0
    %205 = vmatpush2.xpose.msra.mxu0 0.0
    %206 = vmatprep.subr.mxu0 0.0
    %207 = vmatpush2.xpose.msra.mxu0 0.0
    %208 = vmatprep.subr.mxu0 0.0
    %209 = vmatpush2.xpose.msra.mxu0 0.0
    %210 = vmatprep.subr.mxu0 0.0
    %211 = vmatpush2.xpose.msra.mxu0 0.0
    %212 = vmatprep.subr.mxu0 0.0
    %213 = vmatpush2.xpose.msra.mxu0 0.0
    %214 = vmatprep.subr.mxu0 0.0
    %215 = vmatpush2.xpose.msra.mxu0 0.0
    %216 = vmatprep.subr.mxu0 0.0
    %217 = vmatpush2.xpose.msra.mxu0 0.0
    %218 = vmatprep.mubr.f32.mxu0 0.0
    %219 = vmatmul.mubr.f32.gmra.mxu0 %v149
    %v220 = vpop.f32.mrf.mxu0
    %v221 = vadd.f32 0.0, %v220
    %v222 = vpop.f32.mrf.mxu0
    %223 = vdwg.mxu0
    %v224 = vmul.f32 %v221, 0.015625
    %v225 = vld [vmem:[%s1] sm:$0x3]
    %v226 = vld [vmem:[%s7] sm:$0xff]
    %v227 = vld [vmem:[%s7 + $0x8] sm:$0xff]
    %v228 = vld [vmem:[%s7 + $0x10] sm:$0xff]
    %v229 = vld [vmem:[%s7 + $0x18] sm:$0xff]
    %v230 = vld [vmem:[%s7 + $0x20] sm:$0xff]
    %v231 = vld [vmem:[%s7 + $0x28] sm:$0xff]
    %v232 = vld [vmem:[%s7 + $0x30] sm:$0xff]
    %v233 = vld [vmem:[%s7 + $0x38] sm:$0xff]
    %v234 = vld [vmem:[%s7 + $0x40] sm:$0xff]
    %v235 = vld [vmem:[%s7 + $0x48] sm:$0xff]
    %v236 = vld [vmem:[%s7 + $0x50] sm:$0xff]
    %v237 = vld [vmem:[%s7 + $0x58] sm:$0xff]
    %v238 = vld [vmem:[%s7 + $0x60] sm:$0xff]
    %v239 = vld [vmem:[%s7 + $0x68] sm:$0xff]
    %v240 = vld [vmem:[%s7 + $0x70] sm:$0xff]
    %v241 = vld [vmem:[%s7 + $0x78] sm:$0xff]
    %v242 = vld [vmem:[%s7 + $0x80] sm:$0xff]
    %v243 = vld [vmem:[%s7 + $0x88] sm:$0xff]
    %v244 = vld [vmem:[%s7 + $0x90] sm:$0xff]
    %v245 = vld [vmem:[%s7 + $0x98] sm:$0xff]
    %v246 = vld [vmem:[%s7 + $0xa0] sm:$0xff]
    %v247 = vld [vmem:[%s7 + $0xa8] sm:$0xff]
    %v248 = vld [vmem:[%s7 + $0xb0] sm:$0xff]
    %v249 = vld [vmem:[%s7 + $0xb8] sm:$0xff]
    %v250 = vld [vmem:[%s7 + $0xc0] sm:$0xff]
    %v251 = vld [vmem:[%s7 + $0xc8] sm:$0xff]
    %v252 = vld [vmem:[%s7 + $0xd0] sm:$0xff]
    %v253 = vld [vmem:[%s7 + $0xd8] sm:$0xff]
    %v254 = vld [vmem:[%s7 + $0xe0] sm:$0xff]
    %v255 = vld [vmem:[%s7 + $0xe8] sm:$0xff]
    %v256 = vld [vmem:[%s7 + $0xf0] sm:$0xff]
    %v257 = vld [vmem:[%s7 + $0xf8] sm:$0xff]
    %v258 = vld [vmem:[%s7 + $0x100] sm:$0xff]
    %v259 = vld [vmem:[%s7 + $0x108] sm:$0xff]
    %v260 = vld [vmem:[%s7 + $0x110] sm:$0xff]
    %v261 = vld [vmem:[%s7 + $0x118] sm:$0xff]
    %v262 = vld [vmem:[%s7 + $0x120] sm:$0xff]
    %v263 = vld [vmem:[%s7 + $0x128] sm:$0xff]
    %v264 = vld [vmem:[%s7 + $0x130] sm:$0xff]
    %v265 = vld [vmem:[%s7 + $0x138] sm:$0xff]
    %v266 = vld [vmem:[%s7 + $0x140] sm:$0xff]
    %v267 = vld [vmem:[%s7 + $0x148] sm:$0xff]
    %v268 = vld [vmem:[%s7 + $0x150] sm:$0xff]
    %v269 = vld [vmem:[%s7 + $0x158] sm:$0xff]
    %v270 = vld [vmem:[%s7 + $0x160] sm:$0xff]
    %v271 = vld [vmem:[%s7 + $0x168] sm:$0xff]
    %v272 = vld [vmem:[%s7 + $0x170] sm:$0xff]
    %v273 = vld [vmem:[%s7 + $0x178] sm:$0xff]
    %v274 = vld [vmem:[%s7 + $0x180] sm:$0xff]
    %v275 = vld [vmem:[%s7 + $0x188] sm:$0xff]
    %v276 = vld [vmem:[%s7 + $0x190] sm:$0xff]
    %v277 = vld [vmem:[%s7 + $0x198] sm:$0xff]
    %v278 = vld [vmem:[%s7 + $0x1a0] sm:$0xff]
    %v279 = vld [vmem:[%s7 + $0x1a8] sm:$0xff]
    %v280 = vld [vmem:[%s7 + $0x1b0] sm:$0xff]
    %v281 = vld [vmem:[%s7 + $0x1b8] sm:$0xff]
    %v282 = vld [vmem:[%s7 + $0x1c0] sm:$0xff]
    %v283 = vld [vmem:[%s7 + $0x1c8] sm:$0xff]
    %v284 = vld [vmem:[%s7 + $0x1d0] sm:$0xff]
    %v285 = vld [vmem:[%s7 + $0x1d8] sm:$0xff]
    %v286 = vld [vmem:[%s7 + $0x1e0] sm:$0xff]
    %v287 = vld [vmem:[%s7 + $0x1e8] sm:$0xff]
    %v288 = vld [vmem:[%s7 + $0x1f0] sm:$0xff]
    %v289 = vld [vmem:[%s7 + $0x1f8] sm:$0xff]
    %v290 = vld [vmem:[%s7 + $0x200] sm:$0xff]
    %v291 = vld [vmem:[%s7 + $0x208] sm:$0xff]
    %v292 = vld [vmem:[%s7 + $0x210] sm:$0xff]
    %v293 = vld [vmem:[%s7 + $0x218] sm:$0xff]
    %v294 = vld [vmem:[%s7 + $0x220] sm:$0xff]
    %v295 = vld [vmem:[%s7 + $0x228] sm:$0xff]
    %v296 = vld [vmem:[%s7 + $0x230] sm:$0xff]
    %v297 = vld [vmem:[%s7 + $0x238] sm:$0xff]
    %v298 = vld [vmem:[%s7 + $0x240] sm:$0xff]
    %v299 = vld [vmem:[%s7 + $0x248] sm:$0xff]
    %v300 = vld [vmem:[%s7 + $0x250] sm:$0xff]
    %v301 = vld [vmem:[%s7 + $0x258] sm:$0xff]
    %v302 = vld [vmem:[%s7 + $0x260] sm:$0xff]
    %v303 = vld [vmem:[%s7 + $0x268] sm:$0xff]
    %v304 = vld [vmem:[%s7 + $0x270] sm:$0xff]
    %v305 = vld [vmem:[%s7 + $0x278] sm:$0xff]
    %v306 = vld [vmem:[%s7 + $0x280] sm:$0xff]
    %v307 = vld [vmem:[%s7 + $0x288] sm:$0xff]
    %v308 = vld [vmem:[%s7 + $0x290] sm:$0xff]
    %v309 = vld [vmem:[%s7 + $0x298] sm:$0xff]
    %v310 = vld [vmem:[%s7 + $0x2a0] sm:$0xff]
    %v311 = vld [vmem:[%s7 + $0x2a8] sm:$0xff]
    %v312 = vld [vmem:[%s7 + $0x2b0] sm:$0xff]
    %v313 = vld [vmem:[%s7 + $0x2b8] sm:$0xff]
    %v314 = vld [vmem:[%s7 + $0x2c0] sm:$0xff]
    %v315 = vld [vmem:[%s7 + $0x2c8] sm:$0xff]
    %v316 = vld [vmem:[%s7 + $0x2d0] sm:$0xff]
    %v317 = vld [vmem:[%s7 + $0x2d8] sm:$0xff]
    %v318 = vld [vmem:[%s7 + $0x2e0] sm:$0xff]
    %v319 = vld [vmem:[%s7 + $0x2e8] sm:$0xff]
    %v320 = vld [vmem:[%s7 + $0x2f0] sm:$0xff]
    %v321 = vld [vmem:[%s7 + $0x2f8] sm:$0xff]
    %v322 = vld [vmem:[%s7 + $0x300] sm:$0xff]
    %v323 = vld [vmem:[%s7 + $0x308] sm:$0xff]
    %v324 = vld [vmem:[%s7 + $0x310] sm:$0xff]
    %v325 = vld [vmem:[%s7 + $0x318] sm:$0xff]
    %v326 = vld [vmem:[%s7 + $0x320] sm:$0xff]
    %v327 = vld [vmem:[%s7 + $0x328] sm:$0xff]
    %v328 = vld [vmem:[%s7 + $0x330] sm:$0xff]
    %v329 = vld [vmem:[%s7 + $0x338] sm:$0xff]
    %v330 = vld [vmem:[%s7 + $0x340] sm:$0xff]
    %v331 = vld [vmem:[%s7 + $0x348] sm:$0xff]
    %v332 = vld [vmem:[%s7 + $0x350] sm:$0xff]
    %v333 = vld [vmem:[%s7 + $0x358] sm:$0xff]
    %v334 = vld [vmem:[%s7 + $0x360] sm:$0xff]
    %v335 = vld [vmem:[%s7 + $0x368] sm:$0xff]
    %v336 = vld [vmem:[%s7 + $0x370] sm:$0xff]
    %v337 = vld [vmem:[%s7 + $0x378] sm:$0xff]
    %v338 = vld [vmem:[%s7 + $0x380] sm:$0xff]
    %v339 = vld [vmem:[%s7 + $0x388] sm:$0xff]
    %v340 = vld [vmem:[%s7 + $0x390] sm:$0xff]
    %v341 = vld [vmem:[%s7 + $0x398] sm:$0xff]
    %v342 = vld [vmem:[%s7 + $0x3a0] sm:$0xff]
    %v343 = vld [vmem:[%s7 + $0x3a8] sm:$0xff]
    %v344 = vld [vmem:[%s7 + $0x3b0] sm:$0xff]
    %v345 = vld [vmem:[%s7 + $0x3b8] sm:$0xff]
    %v346 = vld [vmem:[%s7 + $0x3c0] sm:$0xff]
    %v347 = vld [vmem:[%s7 + $0x3c8] sm:$0xff]
    %v348 = vld [vmem:[%s7 + $0x3d0] sm:$0xff]
    %v349 = vld [vmem:[%s7 + $0x3d8] sm:$0xff]
    %v350 = vld [vmem:[%s7 + $0x3e0] sm:$0xff]
    %v351 = vld [vmem:[%s7 + $0x3e8] sm:$0xff]
    %v352 = vld [vmem:[%s7 + $0x3f0] sm:$0xff]
    %v353 = vld [vmem:[%s7 + $0x3f8] sm:$0xff]
    %v356 = vunpack.c.l.s4 1966171168
    %v357 = vunpack.c.0.s8 %v356
    %v358 = vlaneseq
    %v359 = vshrl.u32 %v358, 7
    %v360 = vsub.s32 %v357, %v359
    %v361 = vrot.slane %v225, %v360
    %v362 = vcombine.high %v361, %v361
    %v364 = vunpack.c.l.s4 1966171168
    %v365 = vunpack.c.0.s8 %v364
    %v366 = vlaneseq
    %v367 = vshrl.u32 %v366, 7
    %v368 = vsub.s32 %v365, %v367
    %v369 = vrot.slane %v361, %v368
    %v371 = vunpack.c.l.s4 1966171168
    %v372 = vunpack.c.0.s8 %v371
    %v373 = vlaneseq
    %v374 = vshrl.u32 %v373, 7
    %v375 = vsub.s32 %v372, %v374
    %v376 = vrot.slane %v362, %v375
    %v507 = vunpack.c.l.b16 %v226
    %v508 = vunpack.c.h.b16 %v226
    %v509 = vunpack.c.l.b16 %v227
    %v510 = vunpack.c.h.b16 %v227
    %v511 = vunpack.c.l.b16 %v228
    %v512 = vunpack.c.h.b16 %v228
    %v513 = vunpack.c.l.b16 %v229
    %v514 = vunpack.c.h.b16 %v229
    %v515 = vunpack.c.l.b16 %v230
    %v516 = vunpack.c.h.b16 %v230
    %v517 = vunpack.c.l.b16 %v231
    %v518 = vunpack.c.h.b16 %v231
    %v519 = vunpack.c.l.b16 %v232
    %v520 = vunpack.c.h.b16 %v232
    %v521 = vunpack.c.l.b16 %v233
    %v522 = vunpack.c.h.b16 %v233
    %v523 = vunpack.c.l.b16 %v234
    %v524 = vunpack.c.h.b16 %v234
    %v525 = vunpack.c.l.b16 %v235
    %v526 = vunpack.c.h.b16 %v235
    %v527 = vunpack.c.l.b16 %v236
    %v528 = vunpack.c.h.b16 %v236
    %v529 = vunpack.c.l.b16 %v237
    %v530 = vunpack.c.h.b16 %v237
    %v531 = vunpack.c.l.b16 %v238
    %v532 = vunpack.c.h.b16 %v238
    %v533 = vunpack.c.l.b16 %v239
    %v534 = vunpack.c.h.b16 %v239
    %v535 = vunpack.c.l.b16 %v240
    %v536 = vunpack.c.h.b16 %v240
    %v537 = vunpack.c.l.b16 %v241
    %v538 = vunpack.c.h.b16 %v241
    %v539 = vunpack.c.l.b16 %v242
    %v540 = vunpack.c.h.b16 %v242
    %v541 = vunpack.c.l.b16 %v243
    %v542 = vunpack.c.h.b16 %v243
    %v543 = vunpack.c.l.b16 %v244
    %v544 = vunpack.c.h.b16 %v244
    %v545 = vunpack.c.l.b16 %v245
    %v546 = vunpack.c.h.b16 %v245
    %v547 = vunpack.c.l.b16 %v246
    %v548 = vunpack.c.h.b16 %v246
    %v549 = vunpack.c.l.b16 %v247
    %v550 = vunpack.c.h.b16 %v247
    %v551 = vunpack.c.l.b16 %v248
    %v552 = vunpack.c.h.b16 %v248
    %v553 = vunpack.c.l.b16 %v249
    %v554 = vunpack.c.h.b16 %v249
    %v555 = vunpack.c.l.b16 %v250
    %v556 = vunpack.c.h.b16 %v250
    %v557 = vunpack.c.l.b16 %v251
    %v558 = vunpack.c.h.b16 %v251
    %v559 = vunpack.c.l.b16 %v252
    %v560 = vunpack.c.h.b16 %v252
    %v561 = vunpack.c.l.b16 %v253
    %v562 = vunpack.c.h.b16 %v253
    %v563 = vunpack.c.l.b16 %v254
    %v564 = vunpack.c.h.b16 %v254
    %v565 = vunpack.c.l.b16 %v255
    %v566 = vunpack.c.h.b16 %v255
    %v567 = vunpack.c.l.b16 %v256
    %v568 = vunpack.c.h.b16 %v256
    %v569 = vunpack.c.l.b16 %v257
    %v570 = vunpack.c.h.b16 %v257
    %v571 = vunpack.c.l.b16 %v258
    %v572 = vunpack.c.h.b16 %v258
    %v573 = vunpack.c.l.b16 %v259
    %v574 = vunpack.c.h.b16 %v259
    %v575 = vunpack.c.l.b16 %v260
    %v576 = vunpack.c.h.b16 %v260
    %v577 = vunpack.c.l.b16 %v261
    %v578 = vunpack.c.h.b16 %v261
    %v579 = vunpack.c.l.b16 %v262
    %v580 = vunpack.c.h.b16 %v262
    %v581 = vunpack.c.l.b16 %v263
    %v582 = vunpack.c.h.b16 %v263
    %v583 = vunpack.c.l.b16 %v264
    %v584 = vunpack.c.h.b16 %v264
    %v585 = vunpack.c.l.b16 %v265
    %v586 = vunpack.c.h.b16 %v265
    %v587 = vunpack.c.l.b16 %v266
    %v588 = vunpack.c.h.b16 %v266
    %v589 = vunpack.c.l.b16 %v267
    %v590 = vunpack.c.h.b16 %v267
    %v591 = vunpack.c.l.b16 %v268
    %v592 = vunpack.c.h.b16 %v268
    %v593 = vunpack.c.l.b16 %v269
    %v594 = vunpack.c.h.b16 %v269
    %v595 = vunpack.c.l.b16 %v270
    %v596 = vunpack.c.h.b16 %v270
    %v597 = vunpack.c.l.b16 %v271
    %v598 = vunpack.c.h.b16 %v271
    %v599 = vunpack.c.l.b16 %v272
    %v600 = vunpack.c.h.b16 %v272
    %v601 = vunpack.c.l.b16 %v273
    %v602 = vunpack.c.h.b16 %v273
    %v603 = vunpack.c.l.b16 %v274
    %v604 = vunpack.c.h.b16 %v274
    %v605 = vunpack.c.l.b16 %v275
    %v606 = vunpack.c.h.b16 %v275
    %v607 = vunpack.c.l.b16 %v276
    %v608 = vunpack.c.h.b16 %v276
    %v609 = vunpack.c.l.b16 %v277
    %v610 = vunpack.c.h.b16 %v277
    %v611 = vunpack.c.l.b16 %v278
    %v612 = vunpack.c.h.b16 %v278
    %v613 = vunpack.c.l.b16 %v279
    %v614 = vunpack.c.h.b16 %v279
    %v615 = vunpack.c.l.b16 %v280
    %v616 = vunpack.c.h.b16 %v280
    %v617 = vunpack.c.l.b16 %v281
    %v618 = vunpack.c.h.b16 %v281
    %v619 = vunpack.c.l.b16 %v282
    %v620 = vunpack.c.h.b16 %v282
    %v621 = vunpack.c.l.b16 %v283
    %v622 = vunpack.c.h.b16 %v283
    %v623 = vunpack.c.l.b16 %v284
    %v624 = vunpack.c.h.b16 %v284
    %v625 = vunpack.c.l.b16 %v285
    %v626 = vunpack.c.h.b16 %v285
    %v627 = vunpack.c.l.b16 %v286
    %v628 = vunpack.c.h.b16 %v286
    %v629 = vunpack.c.l.b16 %v287
    %v630 = vunpack.c.h.b16 %v287
    %v631 = vunpack.c.l.b16 %v288
    %v632 = vunpack.c.h.b16 %v288
    %v633 = vunpack.c.l.b16 %v289
    %v634 = vunpack.c.h.b16 %v289
    %v635 = vunpack.c.l.b16 %v290
    %v636 = vunpack.c.h.b16 %v290
    %v637 = vunpack.c.l.b16 %v291
    %v638 = vunpack.c.h.b16 %v291
    %v639 = vunpack.c.l.b16 %v292
    %v640 = vunpack.c.h.b16 %v292
    %v641 = vunpack.c.l.b16 %v293
    %v642 = vunpack.c.h.b16 %v293
    %v643 = vunpack.c.l.b16 %v294
    %v644 = vunpack.c.h.b16 %v294
    %v645 = vunpack.c.l.b16 %v295
    %v646 = vunpack.c.h.b16 %v295
    %v647 = vunpack.c.l.b16 %v296
    %v648 = vunpack.c.h.b16 %v296
    %v649 = vunpack.c.l.b16 %v297
    %v650 = vunpack.c.h.b16 %v297
    %v651 = vunpack.c.l.b16 %v298
    %v652 = vunpack.c.h.b16 %v298
    %v653 = vunpack.c.l.b16 %v299
    %v654 = vunpack.c.h.b16 %v299
    %v655 = vunpack.c.l.b16 %v300
    %v656 = vunpack.c.h.b16 %v300
    %v657 = vunpack.c.l.b16 %v301
    %v658 = vunpack.c.h.b16 %v301
    %v659 = vunpack.c.l.b16 %v302
    %v660 = vunpack.c.h.b16 %v302
    %v661 = vunpack.c.l.b16 %v303
    %v662 = vunpack.c.h.b16 %v303
    %v663 = vunpack.c.l.b16 %v304
    %v664 = vunpack.c.h.b16 %v304
    %v665 = vunpack.c.l.b16 %v305
    %v666 = vunpack.c.h.b16 %v305
    %v667 = vunpack.c.l.b16 %v306
    %v668 = vunpack.c.h.b16 %v306
    %v669 = vunpack.c.l.b16 %v307
    %v670 = vunpack.c.h.b16 %v307
    %v671 = vunpack.c.l.b16 %v308
    %v672 = vunpack.c.h.b16 %v308
    %v673 = vunpack.c.l.b16 %v309
    %v674 = vunpack.c.h.b16 %v309
    %v675 = vunpack.c.l.b16 %v310
    %v676 = vunpack.c.h.b16 %v310
    %v677 = vunpack.c.l.b16 %v311
    %v678 = vunpack.c.h.b16 %v311
    %v679 = vunpack.c.l.b16 %v312
    %v680 = vunpack.c.h.b16 %v312
    %v681 = vunpack.c.l.b16 %v313
    %v682 = vunpack.c.h.b16 %v313
    %v683 = vunpack.c.l.b16 %v314
    %v684 = vunpack.c.h.b16 %v314
    %v685 = vunpack.c.l.b16 %v315
    %v686 = vunpack.c.h.b16 %v315
    %v687 = vunpack.c.l.b16 %v316
    %v688 = vunpack.c.h.b16 %v316
    %v689 = vunpack.c.l.b16 %v317
    %v690 = vunpack.c.h.b16 %v317
    %v691 = vunpack.c.l.b16 %v318
    %v692 = vunpack.c.h.b16 %v318
    %v693 = vunpack.c.l.b16 %v319
    %v694 = vunpack.c.h.b16 %v319
    %v695 = vunpack.c.l.b16 %v320
    %v696 = vunpack.c.h.b16 %v320
    %v697 = vunpack.c.l.b16 %v321
    %v698 = vunpack.c.h.b16 %v321
    %v699 = vunpack.c.l.b16 %v322
    %v700 = vunpack.c.h.b16 %v322
    %v701 = vunpack.c.l.b16 %v323
    %v702 = vunpack.c.h.b16 %v323
    %v703 = vunpack.c.l.b16 %v324
    %v704 = vunpack.c.h.b16 %v324
    %v705 = vunpack.c.l.b16 %v325
    %v706 = vunpack.c.h.b16 %v325
    %v707 = vunpack.c.l.b16 %v326
    %v708 = vunpack.c.h.b16 %v326
    %v709 = vunpack.c.l.b16 %v327
    %v710 = vunpack.c.h.b16 %v327
    %v711 = vunpack.c.l.b16 %v328
    %v712 = vunpack.c.h.b16 %v328
    %v713 = vunpack.c.l.b16 %v329
    %v714 = vunpack.c.h.b16 %v329
    %v715 = vunpack.c.l.b16 %v330
    %v716 = vunpack.c.h.b16 %v330
    %v717 = vunpack.c.l.b16 %v331
    %v718 = vunpack.c.h.b16 %v331
    %v719 = vunpack.c.l.b16 %v332
    %v720 = vunpack.c.h.b16 %v332
    %v721 = vunpack.c.l.b16 %v333
    %v722 = vunpack.c.h.b16 %v333
    %v723 = vunpack.c.l.b16 %v334
    %v724 = vunpack.c.h.b16 %v334
    %v725 = vunpack.c.l.b16 %v335
    %v726 = vunpack.c.h.b16 %v335
    %v727 = vunpack.c.l.b16 %v336
    %v728 = vunpack.c.h.b16 %v336
    %v729 = vunpack.c.l.b16 %v337
    %v730 = vunpack.c.h.b16 %v337
    %v731 = vunpack.c.l.b16 %v338
    %v732 = vunpack.c.h.b16 %v338
    %v733 = vunpack.c.l.b16 %v339
    %v734 = vunpack.c.h.b16 %v339
    %v735 = vunpack.c.l.b16 %v340
    %v736 = vunpack.c.h.b16 %v340
    %v737 = vunpack.c.l.b16 %v341
    %v738 = vunpack.c.h.b16 %v341
    %v739 = vunpack.c.l.b16 %v342
    %v740 = vunpack.c.h.b16 %v342
    %v741 = vunpack.c.l.b16 %v343
    %v742 = vunpack.c.h.b16 %v343
    %v743 = vunpack.c.l.b16 %v344
    %v744 = vunpack.c.h.b16 %v344
    %v745 = vunpack.c.l.b16 %v345
    %v746 = vunpack.c.h.b16 %v345
    %v747 = vunpack.c.l.b16 %v346
    %v748 = vunpack.c.h.b16 %v346
    %v749 = vunpack.c.l.b16 %v347
    %v750 = vunpack.c.h.b16 %v347
    %v751 = vunpack.c.l.b16 %v348
    %v752 = vunpack.c.h.b16 %v348
    %v753 = vunpack.c.l.b16 %v349
    %v754 = vunpack.c.h.b16 %v349
    %v755 = vunpack.c.l.b16 %v350
    %v756 = vunpack.c.h.b16 %v350
    %v757 = vunpack.c.l.b16 %v351
    %v758 = vunpack.c.h.b16 %v351
    %v759 = vunpack.c.l.b16 %v352
    %v760 = vunpack.c.h.b16 %v352
    %v761 = vunpack.c.l.b16 %v353
    %v762 = vunpack.c.h.b16 %v353
    %v763 = vpack.c.b16 %v515, %v507
    %v764 = vpack.c.b16 %v516, %v508
    %v765 = vpack.c.b16 %v517, %v509
    %v766 = vpack.c.b16 %v518, %v510
    %v767 = vpack.c.b16 %v519, %v511
    %v768 = vpack.c.b16 %v520, %v512
    %v769 = vpack.c.b16 %v521, %v513
    %v770 = vpack.c.b16 %v522, %v514
    %v771 = vpack.c.b16 %v531, %v523
    %v772 = vpack.c.b16 %v532, %v524
    %v773 = vpack.c.b16 %v533, %v525
    %v774 = vpack.c.b16 %v534, %v526
    %v775 = vpack.c.b16 %v535, %v527
    %v776 = vpack.c.b16 %v536, %v528
    %v777 = vpack.c.b16 %v537, %v529
    %v778 = vpack.c.b16 %v538, %v530
    %v779 = vpack.c.b16 %v547, %v539
    %v780 = vpack.c.b16 %v548, %v540
    %v781 = vpack.c.b16 %v549, %v541
    %v782 = vpack.c.b16 %v550, %v542
    %v783 = vpack.c.b16 %v551, %v543
    %v784 = vpack.c.b16 %v552, %v544
    %v785 = vpack.c.b16 %v553, %v545
    %v786 = vpack.c.b16 %v554, %v546
    %v787 = vpack.c.b16 %v563, %v555
    %v788 = vpack.c.b16 %v564, %v556
    %v789 = vpack.c.b16 %v565, %v557
    %v790 = vpack.c.b16 %v566, %v558
    %v791 = vpack.c.b16 %v567, %v559
    %v792 = vpack.c.b16 %v568, %v560
    %v793 = vpack.c.b16 %v569, %v561
    %v794 = vpack.c.b16 %v570, %v562
    %v795 = vpack.c.b16 %v579, %v571
    %v796 = vpack.c.b16 %v580, %v572
    %v797 = vpack.c.b16 %v581, %v573
    %v798 = vpack.c.b16 %v582, %v574
    %v799 = vpack.c.b16 %v583, %v575
    %v800 = vpack.c.b16 %v584, %v576
    %v801 = vpack.c.b16 %v585, %v577
    %v802 = vpack.c.b16 %v586, %v578
    %v803 = vpack.c.b16 %v595, %v587
    %v804 = vpack.c.b16 %v596, %v588
    %v805 = vpack.c.b16 %v597, %v589
    %v806 = vpack.c.b16 %v598, %v590
    %v807 = vpack.c.b16 %v599, %v591
    %v808 = vpack.c.b16 %v600, %v592
    %v809 = vpack.c.b16 %v601, %v593
    %v810 = vpack.c.b16 %v602, %v594
    %v811 = vpack.c.b16 %v611, %v603
    %v812 = vpack.c.b16 %v612, %v604
    %v813 = vpack.c.b16 %v613, %v605
    %v814 = vpack.c.b16 %v614, %v606
    %v815 = vpack.c.b16 %v615, %v607
    %v816 = vpack.c.b16 %v616, %v608
    %v817 = vpack.c.b16 %v617, %v609
    %v818 = vpack.c.b16 %v618, %v610
    %v819 = vpack.c.b16 %v627, %v619
    %v820 = vpack.c.b16 %v628, %v620
    %v821 = vpack.c.b16 %v629, %v621
    %v822 = vpack.c.b16 %v630, %v622
    %v823 = vpack.c.b16 %v631, %v623
    %v824 = vpack.c.b16 %v632, %v624
    %v825 = vpack.c.b16 %v633, %v625
    %v826 = vpack.c.b16 %v634, %v626
    %v827 = vpack.c.b16 %v643, %v635
    %v828 = vpack.c.b16 %v644, %v636
    %v829 = vpack.c.b16 %v645, %v637
    %v830 = vpack.c.b16 %v646, %v638
    %v831 = vpack.c.b16 %v647, %v639
    %v832 = vpack.c.b16 %v648, %v640
    %v833 = vpack.c.b16 %v649, %v641
    %v834 = vpack.c.b16 %v650, %v642
    %v835 = vpack.c.b16 %v659, %v651
    %v836 = vpack.c.b16 %v660, %v652
    %v837 = vpack.c.b16 %v661, %v653
    %v838 = vpack.c.b16 %v662, %v654
    %v839 = vpack.c.b16 %v663, %v655
    %v840 = vpack.c.b16 %v664, %v656
    %v841 = vpack.c.b16 %v665, %v657
    %v842 = vpack.c.b16 %v666, %v658
    %v843 = vpack.c.b16 %v675, %v667
    %v844 = vpack.c.b16 %v676, %v668
    %v845 = vpack.c.b16 %v677, %v669
    %v846 = vpack.c.b16 %v678, %v670
    %v847 = vpack.c.b16 %v679, %v671
    %v848 = vpack.c.b16 %v680, %v672
    %v849 = vpack.c.b16 %v681, %v673
    %v850 = vpack.c.b16 %v682, %v674
    %v851 = vpack.c.b16 %v691, %v683
    %v852 = vpack.c.b16 %v692, %v684
    %v853 = vpack.c.b16 %v693, %v685
    %v854 = vpack.c.b16 %v694, %v686
    %v855 = vpack.c.b16 %v695, %v687
    %v856 = vpack.c.b16 %v696, %v688
    %v857 = vpack.c.b16 %v697, %v689
    %v858 = vpack.c.b16 %v698, %v690
    %v859 = vpack.c.b16 %v707, %v699
    %v860 = vpack.c.b16 %v708, %v700
    %v861 = vpack.c.b16 %v709, %v701
    %v862 = vpack.c.b16 %v710, %v702
    %v863 = vpack.c.b16 %v711, %v703
    %v864 = vpack.c.b16 %v712, %v704
    %v865 = vpack.c.b16 %v713, %v705
    %v866 = vpack.c.b16 %v714, %v706
    %v867 = vpack.c.b16 %v723, %v715
    %v868 = vpack.c.b16 %v724, %v716
    %v869 = vpack.c.b16 %v725, %v717
    %v870 = vpack.c.b16 %v726, %v718
    %v871 = vpack.c.b16 %v727, %v719
    %v872 = vpack.c.b16 %v728, %v720
    %v873 = vpack.c.b16 %v729, %v721
    %v874 = vpack.c.b16 %v730, %v722
    %v875 = vpack.c.b16 %v739, %v731
    %v876 = vpack.c.b16 %v740, %v732
    %v877 = vpack.c.b16 %v741, %v733
    %v878 = vpack.c.b16 %v742, %v734
    %v879 = vpack.c.b16 %v743, %v735
    %v880 = vpack.c.b16 %v744, %v736
    %v881 = vpack.c.b16 %v745, %v737
    %v882 = vpack.c.b16 %v746, %v738
    %v883 = vpack.c.b16 %v755, %v747
    %v884 = vpack.c.b16 %v756, %v748
    %v885 = vpack.c.b16 %v757, %v749
    %v886 = vpack.c.b16 %v758, %v750
    %v887 = vpack.c.b16 %v759, %v751
    %v888 = vpack.c.b16 %v760, %v752
    %v889 = vpack.c.b16 %v761, %v753
    %v890 = vpack.c.b16 %v762, %v754
    %1019 = vmatprep.subr.bf16.mxu0 %v820
    %1020 = vmatpush1.bf16.msra.mxu0 %v819
    %1021 = vmatprep.subr.bf16.mxu0 %v812
    %1022 = vmatpush1.bf16.msra.mxu0 %v811
    %1023 = vmatprep.subr.bf16.mxu0 %v804
    %1024 = vmatpush1.bf16.msra.mxu0 %v803
    %1025 = vmatprep.subr.bf16.mxu0 %v796
    %1026 = vmatpush1.bf16.msra.mxu0 %v795
    %1027 = vmatprep.subr.bf16.mxu0 %v788
    %1028 = vmatpush1.bf16.msra.mxu0 %v787
    %1029 = vmatprep.subr.bf16.mxu0 %v780
    %1030 = vmatpush1.bf16.msra.mxu0 %v779
    %1031 = vmatprep.subr.bf16.mxu0 %v772
    %1032 = vmatpush1.bf16.msra.mxu0 %v771
    %1033 = vmatprep.subr.bf16.mxu0 %v764
    %1034 = vmatpush1.bf16.msra.mxu0 %v763
    %1035 = vmatprep.subr.bf16.mxu0 %v884
    %1036 = vmatpush2.bf16.msra.mxu0 %v883
    %1037 = vmatprep.subr.bf16.mxu0 %v876
    %1038 = vmatpush2.bf16.msra.mxu0 %v875
    %1039 = vmatprep.subr.bf16.mxu0 %v868
    %1040 = vmatpush2.bf16.msra.mxu0 %v867
    %1041 = vmatprep.subr.bf16.mxu0 %v860
    %1042 = vmatpush2.bf16.msra.mxu0 %v859
    %1043 = vmatprep.subr.bf16.mxu0 %v852
    %1044 = vmatpush2.bf16.msra.mxu0 %v851
    %1045 = vmatprep.subr.bf16.mxu0 %v844
    %1046 = vmatpush2.bf16.msra.mxu0 %v843
    %1047 = vmatprep.subr.bf16.mxu0 %v836
    %1048 = vmatpush2.bf16.msra.mxu0 %v835
    %1049 = vmatprep.subr.bf16.mxu0 %v828
    %1050 = vmatpush2.bf16.msra.mxu0 %v827
    %1051 = vmatprep.mubr.bf16.mxu0 %v376
    %1052 = vmatmul.mubr.bf16.gmra.mxu0 %v369
    %v1053 = vpop.f32.mrf.mxu0
    %v1054 = vadd.f32 0.0, %v1053
    %v1055 = vpop.f32.mrf.mxu0
    %v1056 = vadd.f32 0.0, %v1055
    %v1057 = vpop.f32.mrf.mxu0
    %v1058 = vpop.f32.mrf.mxu0
    %1059 = vdwg.mxu0
    %1060 = vmatprep.subr.bf16.mxu0 %v822
    %1061 = vmatpush1.bf16.msra.mxu0 %v821
    %1062 = vmatprep.subr.bf16.mxu0 %v814
    %1063 = vmatpush1.bf16.msra.mxu0 %v813
    %1064 = vmatprep.subr.bf16.mxu0 %v806
    %1065 = vmatpush1.bf16.msra.mxu0 %v805
    %1066 = vmatprep.subr.bf16.mxu0 %v798
    %1067 = vmatpush1.bf16.msra.mxu0 %v797
    %1068 = vmatprep.subr.bf16.mxu0 %v790
    %1069 = vmatpush1.bf16.msra.mxu0 %v789
    %1070 = vmatprep.subr.bf16.mxu0 %v782
    %1071 = vmatpush1.bf16.msra.mxu0 %v781
    %1072 = vmatprep.subr.bf16.mxu0 %v774
    %1073 = vmatpush1.bf16.msra.mxu0 %v773
    %1074 = vmatprep.subr.bf16.mxu0 %v766
    %1075 = vmatpush1.bf16.msra.mxu0 %v765
    %1076 = vmatprep.subr.bf16.mxu0 %v886
    %1077 = vmatpush2.bf16.msra.mxu0 %v885
    %1078 = vmatprep.subr.bf16.mxu0 %v878
    %1079 = vmatpush2.bf16.msra.mxu0 %v877
    %1080 = vmatprep.subr.bf16.mxu0 %v870
    %1081 = vmatpush2.bf16.msra.mxu0 %v869
    %1082 = vmatprep.subr.bf16.mxu0 %v862
    %1083 = vmatpush2.bf16.msra.mxu0 %v861
    %1084 = vmatprep.subr.bf16.mxu0 %v854
    %1085 = vmatpush2.bf16.msra.mxu0 %v853
    %1086 = vmatprep.subr.bf16.mxu0 %v846
    %1087 = vmatpush2.bf16.msra.mxu0 %v845
    %1088 = vmatprep.subr.bf16.mxu0 %v838
    %1089 = vmatpush2.bf16.msra.mxu0 %v837
    %1090 = vmatprep.subr.bf16.mxu0 %v830
    %1091 = vmatpush2.bf16.msra.mxu0 %v829
    %1092 = vmatprep.mubr.bf16.mxu0 %v376
    %1093 = vmatmul.mubr.bf16.gmra.mxu0 %v369
    %v1094 = vpop.f32.mrf.mxu0
    %v1095 = vadd.f32 0.0, %v1094
    %v1096 = vpop.f32.mrf.mxu0
    %v1097 = vadd.f32 0.0, %v1096
    %v1098 = vpop.f32.mrf.mxu0
    %v1099 = vpop.f32.mrf.mxu0
    %1100 = vdwg.mxu0
    %1101 = vmatprep.subr.bf16.mxu0 %v824
    %1102 = vmatpush1.bf16.msra.mxu0 %v823
    %1103 = vmatprep.subr.bf16.mxu0 %v816
    %1104 = vmatpush1.bf16.msra.mxu0 %v815
    %1105 = vmatprep.subr.bf16.mxu0 %v808
    %1106 = vmatpush1.bf16.msra.mxu0 %v807
    %1107 = vmatprep.subr.bf16.mxu0 %v800
    %1108 = vmatpush1.bf16.msra.mxu0 %v799
    %1109 = vmatprep.subr.bf16.mxu0 %v792
    %1110 = vmatpush1.bf16.msra.mxu0 %v791
    %1111 = vmatprep.subr.bf16.mxu0 %v784
    %1112 = vmatpush1.bf16.msra.mxu0 %v783
    %1113 = vmatprep.subr.bf16.mxu0 %v776
    %1114 = vmatpush1.bf16.msra.mxu0 %v775
    %1115 = vmatprep.subr.bf16.mxu0 %v768
    %1116 = vmatpush1.bf16.msra.mxu0 %v767
    %1117 = vmatprep.subr.bf16.mxu0 %v888
    %1118 = vmatpush2.bf16.msra.mxu0 %v887
    %1119 = vmatprep.subr.bf16.mxu0 %v880
    %1120 = vmatpush2.bf16.msra.mxu0 %v879
    %1121 = vmatprep.subr.bf16.mxu0 %v872
    %1122 = vmatpush2.bf16.msra.mxu0 %v871
    %1123 = vmatprep.subr.bf16.mxu0 %v864
    %1124 = vmatpush2.bf16.msra.mxu0 %v863
    %1125 = vmatprep.subr.bf16.mxu0 %v856
    %1126 = vmatpush2.bf16.msra.mxu0 %v855
    %1127 = vmatprep.subr.bf16.mxu0 %v848
    %1128 = vmatpush2.bf16.msra.mxu0 %v847
    %1129 = vmatprep.subr.bf16.mxu0 %v840
    %1130 = vmatpush2.bf16.msra.mxu0 %v839
    %1131 = vmatprep.subr.bf16.mxu0 %v832
    %1132 = vmatpush2.bf16.msra.mxu0 %v831
    %1133 = vmatprep.mubr.bf16.mxu0 %v376
    %1134 = vmatmul.mubr.bf16.gmra.mxu0 %v369
    %v1135 = vpop.f32.mrf.mxu0
    %v1136 = vadd.f32 0.0, %v1135
    %v1137 = vpop.f32.mrf.mxu0
    %v1138 = vadd.f32 0.0, %v1137
    %v1139 = vpop.f32.mrf.mxu0
    %v1140 = vpop.f32.mrf.mxu0
    %1141 = vdwg.mxu0
    %1142 = vmatprep.subr.bf16.mxu0 %v826
    %1143 = vmatpush1.bf16.msra.mxu0 %v825
    %1144 = vmatprep.subr.bf16.mxu0 %v818
    %1145 = vmatpush1.bf16.msra.mxu0 %v817
    %1146 = vmatprep.subr.bf16.mxu0 %v810
    %1147 = vmatpush1.bf16.msra.mxu0 %v809
    %1148 = vmatprep.subr.bf16.mxu0 %v802
    %1149 = vmatpush1.bf16.msra.mxu0 %v801
    %1150 = vmatprep.subr.bf16.mxu0 %v794
    %1151 = vmatpush1.bf16.msra.mxu0 %v793
    %1152 = vmatprep.subr.bf16.mxu0 %v786
    %1153 = vmatpush1.bf16.msra.mxu0 %v785
    %1154 = vmatprep.subr.bf16.mxu0 %v778
    %1155 = vmatpush1.bf16.msra.mxu0 %v777
    %1156 = vmatprep.subr.bf16.mxu0 %v770
    %1157 = vmatpush1.bf16.msra.mxu0 %v769
    %1158 = vmatprep.subr.bf16.mxu0 %v890
    %1159 = vmatpush2.bf16.msra.mxu0 %v889
    %1160 = vmatprep.subr.bf16.mxu0 %v882
    %1161 = vmatpush2.bf16.msra.mxu0 %v881
    %1162 = vmatprep.subr.bf16.mxu0 %v874
    %1163 = vmatpush2.bf16.msra.mxu0 %v873
    %1164 = vmatprep.subr.bf16.mxu0 %v866
    %1165 = vmatpush2.bf16.msra.mxu0 %v865
    %1166 = vmatprep.subr.bf16.mxu0 %v858
    %1167 = vmatpush2.bf16.msra.mxu0 %v857
    %1168 = vmatprep.subr.bf16.mxu0 %v850
    %1169 = vmatpush2.bf16.msra.mxu0 %v849
    %1170 = vmatprep.subr.bf16.mxu0 %v842
    %1171 = vmatpush2.bf16.msra.mxu0 %v841
    %1172 = vmatprep.subr.bf16.mxu0 %v834
    %1173 = vmatpush2.bf16.msra.mxu0 %v833
    %1174 = vmatprep.mubr.bf16.mxu0 %v376
    %1175 = vmatmul.mubr.bf16.gmra.mxu0 %v369
    %v1176 = vpop.f32.mrf.mxu0
    %v1177 = vadd.f32 0.0, %v1176
    %v1178 = vpop.f32.mrf.mxu0
    %v1179 = vadd.f32 0.0, %v1178
    %v1180 = vpop.f32.mrf.mxu0
    %v1181 = vpop.f32.mrf.mxu0
    %1182 = vdwg.mxu0
    %v1183 = vld [vmem:[%s8] sm:$0xff]
    %v1184 = vld [vmem:[%s8 + $0x8] sm:$0xff]
    %v1185 = vunpack.c.l.bf16 %v1183
    %v1186 = vunpack.c.h.bf16 %v1183
    %v1187 = vunpack.c.l.bf16 %v1184
    %v1188 = vunpack.c.h.bf16 %v1184
    %v1193 = vcombine.high %v1185, %v1185
    %v1194 = vcombine.high %v1186, %v1186
    %v1195 = vcombine.high %v1187, %v1187
    %v1196 = vcombine.high %v1188, %v1188
    %v1198 = vsel %vm147, %v56, 0
    %v1200 = vsel %vm59, %v1185, 0
    %v1202 = vsel %vm59, %v1193, 0
    %v1204 = vsel %vm59, %v1186, 0
    %v1206 = vsel %vm59, %v1194, 0
    %v1208 = vsel %vm59, %v1187, 0
    %v1210 = vsel %vm59, %v1195, 0
    %v1212 = vsel %vm59, %v1188, 0
    %v1214 = vsel %vm59, %v1196, 0
    %1216 = vmatprep.subr.mxu0 0.0
    %1217 = vmatpush1.msra.mxu0 0.0
    %1218 = vmatprep.subr.mxu0 0.0
    %1219 = vmatpush1.msra.mxu0 0.0
    %1220 = vmatprep.subr.mxu0 0.0
    %1221 = vmatpush1.msra.mxu0 0.0
    %1222 = vmatprep.subr.mxu0 0.0
    %1223 = vmatpush1.msra.mxu0 0.0
    %1224 = vmatprep.subr.mxu0 0.0
    %1225 = vmatpush1.msra.mxu0 0.0
    %1226 = vmatprep.subr.mxu0 0.0
    %1227 = vmatpush1.msra.mxu0 0.0
    %1228 = vmatprep.subr.mxu0 0.0
    %1229 = vmatpush1.msra.mxu0 0.0
    %1230 = vmatprep.subr.mxu0 0.0
    %1231 = vmatpush1.msra.mxu0 0.0
    %1232 = vmatprep.subr.mxu0 0.0
    %1233 = vmatpush1.msra.mxu0 0.0
    %1234 = vmatprep.subr.mxu0 0.0
    %1235 = vmatpush1.msra.mxu0 0.0
    %1236 = vmatprep.subr.mxu0 0.0
    %1237 = vmatpush1.msra.mxu0 0.0
    %1238 = vmatprep.subr.mxu0 0.0
    %1239 = vmatpush1.msra.mxu0 0.0
    %1240 = vmatprep.subr.mxu0 0.0
    %1241 = vmatpush1.msra.mxu0 0.0
    %1242 = vmatprep.subr.mxu0 0.0
    %1243 = vmatpush1.msra.mxu0 0.0
    %1244 = vmatprep.subr.mxu0 0.0
    %1245 = vmatpush1.msra.mxu0 0.0
    %1246 = vmatprep.subr.mxu0 %v1202
    %1247 = vmatpush1.msra.mxu0 %v1200
    %1248 = vmatprep.subr.mxu0 0.0
    %1249 = vmatpush2.msra.mxu0 0.0
    %1250 = vmatprep.subr.mxu0 0.0
    %1251 = vmatpush2.msra.mxu0 0.0
    %1252 = vmatprep.subr.mxu0 0.0
    %1253 = vmatpush2.msra.mxu0 0.0
    %1254 = vmatprep.subr.mxu0 0.0
    %1255 = vmatpush2.msra.mxu0 0.0
    %1256 = vmatprep.subr.mxu0 0.0
    %1257 = vmatpush2.msra.mxu0 0.0
    %1258 = vmatprep.subr.mxu0 0.0
    %1259 = vmatpush2.msra.mxu0 0.0
    %1260 = vmatprep.subr.mxu0 0.0
    %1261 = vmatpush2.msra.mxu0 0.0
    %1262 = vmatprep.subr.mxu0 0.0
    %1263 = vmatpush2.msra.mxu0 0.0
    %1264 = vmatprep.subr.mxu0 0.0
    %1265 = vmatpush2.msra.mxu0 0.0
    %1266 = vmatprep.subr.mxu0 0.0
    %1267 = vmatpush2.msra.mxu0 0.0
    %1268 = vmatprep.subr.mxu0 0.0
    %1269 = vmatpush2.msra.mxu0 0.0
    %1270 = vmatprep.subr.mxu0 0.0
    %1271 = vmatpush2.msra.mxu0 0.0
    %1272 = vmatprep.subr.mxu0 0.0
    %1273 = vmatpush2.msra.mxu0 0.0
    %1274 = vmatprep.subr.mxu0 0.0
    %1275 = vmatpush2.msra.mxu0 0.0
    %1276 = vmatprep.subr.mxu0 0.0
    %1277 = vmatpush2.msra.mxu0 0.0
    %1278 = vmatprep.subr.mxu0 0.0
    %1279 = vmatpush2.msra.mxu0 0.0
    %1280 = vmatprep.mubr.f32.mxu0 0.0
    %1281 = vmatmul.mubr.f32.gmra.mxu0 %v1198
    %v1282 = vpop.f32.mrf.mxu0
    %v1283 = vadd.f32 0.0, %v1282
    %v1284 = vpop.f32.mrf.mxu0
    %v1285 = vadd.f32 0.0, %v1284
    %1286 = vdwg.mxu0
    %1287 = vmatprep.subr.mxu0 0.0
    %1288 = vmatpush1.msra.mxu0 0.0
    %1289 = vmatprep.subr.mxu0 0.0
    %1290 = vmatpush1.msra.mxu0 0.0
    %1291 = vmatprep.subr.mxu0 0.0
    %1292 = vmatpush1.msra.mxu0 0.0
    %1293 = vmatprep.subr.mxu0 0.0
    %1294 = vmatpush1.msra.mxu0 0.0
    %1295 = vmatprep.subr.mxu0 0.0
    %1296 = vmatpush1.msra.mxu0 0.0
    %1297 = vmatprep.subr.mxu0 0.0
    %1298 = vmatpush1.msra.mxu0 0.0
    %1299 = vmatprep.subr.mxu0 0.0
    %1300 = vmatpush1.msra.mxu0 0.0
    %1301 = vmatprep.subr.mxu0 0.0
    %1302 = vmatpush1.msra.mxu0 0.0
    %1303 = vmatprep.subr.mxu0 0.0
    %1304 = vmatpush1.msra.mxu0 0.0
    %1305 = vmatprep.subr.mxu0 0.0
    %1306 = vmatpush1.msra.mxu0 0.0
    %1307 = vmatprep.subr.mxu0 0.0
    %1308 = vmatpush1.msra.mxu0 0.0
    %1309 = vmatprep.subr.mxu0 0.0
    %1310 = vmatpush1.msra.mxu0 0.0
    %1311 = vmatprep.subr.mxu0 0.0
    %1312 = vmatpush1.msra.mxu0 0.0
    %1313 = vmatprep.subr.mxu0 0.0
    %1314 = vmatpush1.msra.mxu0 0.0
    %1315 = vmatprep.subr.mxu0 0.0
    %1316 = vmatpush1.msra.mxu0 0.0
    %1317 = vmatprep.subr.mxu0 %v1206
    %1318 = vmatpush1.msra.mxu0 %v1204
    %1319 = vmatprep.subr.mxu0 0.0
    %1320 = vmatpush2.msra.mxu0 0.0
    %1321 = vmatprep.subr.mxu0 0.0
    %1322 = vmatpush2.msra.mxu0 0.0
    %1323 = vmatprep.subr.mxu0 0.0
    %1324 = vmatpush2.msra.mxu0 0.0
    %1325 = vmatprep.subr.mxu0 0.0
    %1326 = vmatpush2.msra.mxu0 0.0
    %1327 = vmatprep.subr.mxu0 0.0
    %1328 = vmatpush2.msra.mxu0 0.0
    %1329 = vmatprep.subr.mxu0 0.0
    %1330 = vmatpush2.msra.mxu0 0.0
    %1331 = vmatprep.subr.mxu0 0.0
    %1332 = vmatpush2.msra.mxu0 0.0
    %1333 = vmatprep.subr.mxu0 0.0
    %1334 = vmatpush2.msra.mxu0 0.0
    %1335 = vmatprep.subr.mxu0 0.0
    %1336 = vmatpush2.msra.mxu0 0.0
    %1337 = vmatprep.subr.mxu0 0.0
    %1338 = vmatpush2.msra.mxu0 0.0
    %1339 = vmatprep.subr.mxu0 0.0
    %1340 = vmatpush2.msra.mxu0 0.0
    %1341 = vmatprep.subr.mxu0 0.0
    %1342 = vmatpush2.msra.mxu0 0.0
    %1343 = vmatprep.subr.mxu0 0.0
    %1344 = vmatpush2.msra.mxu0 0.0
    %1345 = vmatprep.subr.mxu0 0.0
    %1346 = vmatpush2.msra.mxu0 0.0
    %1347 = vmatprep.subr.mxu0 0.0
    %1348 = vmatpush2.msra.mxu0 0.0
    %1349 = vmatprep.subr.mxu0 0.0
    %1350 = vmatpush2.msra.mxu0 0.0
    %1351 = vmatprep.mubr.f32.mxu0 0.0
    %1352 = vmatmul.mubr.f32.gmra.mxu0 %v1198
    %v1353 = vpop.f32.mrf.mxu0
    %v1354 = vadd.f32 0.0, %v1353
    %v1355 = vpop.f32.mrf.mxu0
    %v1356 = vadd.f32 0.0, %v1355
    %1357 = vdwg.mxu0
    %1358 = vmatprep.subr.mxu0 0.0
    %1359 = vmatpush1.msra.mxu0 0.0
    %1360 = vmatprep.subr.mxu0 0.0
    %1361 = vmatpush1.msra.mxu0 0.0
    %1362 = vmatprep.subr.mxu0 0.0
    %1363 = vmatpush1.msra.mxu0 0.0
    %1364 = vmatprep.subr.mxu0 0.0
    %1365 = vmatpush1.msra.mxu0 0.0
    %1366 = vmatprep.subr.mxu0 0.0
    %1367 = vmatpush1.msra.mxu0 0.0
    %1368 = vmatprep.subr.mxu0 0.0
    %1369 = vmatpush1.msra.mxu0 0.0
    %1370 = vmatprep.subr.mxu0 0.0
    %1371 = vmatpush1.msra.mxu0 0.0
    %1372 = vmatprep.subr.mxu0 0.0
    %1373 = vmatpush1.msra.mxu0 0.0
    %1374 = vmatprep.subr.mxu0 0.0
    %1375 = vmatpush1.msra.mxu0 0.0
    %1376 = vmatprep.subr.mxu0 0.0
    %1377 = vmatpush1.msra.mxu0 0.0
    %1378 = vmatprep.subr.mxu0 0.0
    %1379 = vmatpush1.msra.mxu0 0.0
    %1380 = vmatprep.subr.mxu0 0.0
    %1381 = vmatpush1.msra.mxu0 0.0
    %1382 = vmatprep.subr.mxu0 0.0
    %1383 = vmatpush1.msra.mxu0 0.0
    %1384 = vmatprep.subr.mxu0 0.0
    %1385 = vmatpush1.msra.mxu0 0.0
    %1386 = vmatprep.subr.mxu0 0.0
    %1387 = vmatpush1.msra.mxu0 0.0
    %1388 = vmatprep.subr.mxu0 %v1210
    %1389 = vmatpush1.msra.mxu0 %v1208
    %1390 = vmatprep.subr.mxu0 0.0
    %1391 = vmatpush2.msra.mxu0 0.0
    %1392 = vmatprep.subr.mxu0 0.0
    %1393 = vmatpush2.msra.mxu0 0.0
    %1394 = vmatprep.subr.mxu0 0.0
    %1395 = vmatpush2.msra.mxu0 0.0
    %1396 = vmatprep.subr.mxu0 0.0
    %1397 = vmatpush2.msra.mxu0 0.0
    %1398 = vmatprep.subr.mxu0 0.0
    %1399 = vmatpush2.msra.mxu0 0.0
    %1400 = vmatprep.subr.mxu0 0.0
    %1401 = vmatpush2.msra.mxu0 0.0
    %1402 = vmatprep.subr.mxu0 0.0
    %1403 = vmatpush2.msra.mxu0 0.0
    %1404 = vmatprep.subr.mxu0 0.0
    %1405 = vmatpush2.msra.mxu0 0.0
    %1406 = vmatprep.subr.mxu0 0.0
    %1407 = vmatpush2.msra.mxu0 0.0
    %1408 = vmatprep.subr.mxu0 0.0
    %1409 = vmatpush2.msra.mxu0 0.0
    %1410 = vmatprep.subr.mxu0 0.0
    %1411 = vmatpush2.msra.mxu0 0.0
    %1412 = vmatprep.subr.mxu0 0.0
    %1413 = vmatpush2.msra.mxu0 0.0
    %1414 = vmatprep.subr.mxu0 0.0
    %1415 = vmatpush2.msra.mxu0 0.0
    %1416 = vmatprep.subr.mxu0 0.0
    %1417 = vmatpush2.msra.mxu0 0.0
    %1418 = vmatprep.subr.mxu0 0.0
    %1419 = vmatpush2.msra.mxu0 0.0
    %1420 = vmatprep.subr.mxu0 0.0
    %1421 = vmatpush2.msra.mxu0 0.0
    %1422 = vmatprep.mubr.f32.mxu0 0.0
    %1423 = vmatmul.mubr.f32.gmra.mxu0 %v1198
    %v1424 = vpop.f32.mrf.mxu0
    %v1425 = vadd.f32 0.0, %v1424
    %v1426 = vpop.f32.mrf.mxu0
    %v1427 = vadd.f32 0.0, %v1426
    %1428 = vdwg.mxu0
    %1429 = vmatprep.subr.mxu0 0.0
    %1430 = vmatpush1.msra.mxu0 0.0
    %1431 = vmatprep.subr.mxu0 0.0
    %1432 = vmatpush1.msra.mxu0 0.0
    %1433 = vmatprep.subr.mxu0 0.0
    %1434 = vmatpush1.msra.mxu0 0.0
    %1435 = vmatprep.subr.mxu0 0.0
    %1436 = vmatpush1.msra.mxu0 0.0
    %1437 = vmatprep.subr.mxu0 0.0
    %1438 = vmatpush1.msra.mxu0 0.0
    %1439 = vmatprep.subr.mxu0 0.0
    %1440 = vmatpush1.msra.mxu0 0.0
    %1441 = vmatprep.subr.mxu0 0.0
    %1442 = vmatpush1.msra.mxu0 0.0
    %1443 = vmatprep.subr.mxu0 0.0
    %1444 = vmatpush1.msra.mxu0 0.0
    %1445 = vmatprep.subr.mxu0 0.0
    %1446 = vmatpush1.msra.mxu0 0.0
    %1447 = vmatprep.subr.mxu0 0.0
    %1448 = vmatpush1.msra.mxu0 0.0
    %1449 = vmatprep.subr.mxu0 0.0
    %1450 = vmatpush1.msra.mxu0 0.0
    %1451 = vmatprep.subr.mxu0 0.0
    %1452 = vmatpush1.msra.mxu0 0.0
    %1453 = vmatprep.subr.mxu0 0.0
    %1454 = vmatpush1.msra.mxu0 0.0
    %1455 = vmatprep.subr.mxu0 0.0
    %1456 = vmatpush1.msra.mxu0 0.0
    %1457 = vmatprep.subr.mxu0 0.0
    %1458 = vmatpush1.msra.mxu0 0.0
    %1459 = vmatprep.subr.mxu0 %v1214
    %1460 = vmatpush1.msra.mxu0 %v1212
    %1461 = vmatprep.subr.mxu0 0.0
    %1462 = vmatpush2.msra.mxu0 0.0
    %1463 = vmatprep.subr.mxu0 0.0
    %1464 = vmatpush2.msra.mxu0 0.0
    %1465 = vmatprep.subr.mxu0 0.0
    %1466 = vmatpush2.msra.mxu0 0.0
    %1467 = vmatprep.subr.mxu0 0.0
    %1468 = vmatpush2.msra.mxu0 0.0
    %1469 = vmatprep.subr.mxu0 0.0
    %1470 = vmatpush2.msra.mxu0 0.0
    %1471 = vmatprep.subr.mxu0 0.0
    %1472 = vmatpush2.msra.mxu0 0.0
    %1473 = vmatprep.subr.mxu0 0.0
    %1474 = vmatpush2.msra.mxu0 0.0
    %1475 = vmatprep.subr.mxu0 0.0
    %1476 = vmatpush2.msra.mxu0 0.0
    %1477 = vmatprep.subr.mxu0 0.0
    %1478 = vmatpush2.msra.mxu0 0.0
    %1479 = vmatprep.subr.mxu0 0.0
    %1480 = vmatpush2.msra.mxu0 0.0
    %1481 = vmatprep.subr.mxu0 0.0
    %1482 = vmatpush2.msra.mxu0 0.0
    %1483 = vmatprep.subr.mxu0 0.0
    %1484 = vmatpush2.msra.mxu0 0.0
    %1485 = vmatprep.subr.mxu0 0.0
    %1486 = vmatpush2.msra.mxu0 0.0
    %1487 = vmatprep.subr.mxu0 0.0
    %1488 = vmatpush2.msra.mxu0 0.0
    %1489 = vmatprep.subr.mxu0 0.0
    %1490 = vmatpush2.msra.mxu0 0.0
    %1491 = vmatprep.subr.mxu0 0.0
    %1492 = vmatpush2.msra.mxu0 0.0
    %1493 = vmatprep.mubr.f32.mxu0 0.0
    %1494 = vmatmul.mubr.f32.gmra.mxu0 %v1198
    %v1495 = vpop.f32.mrf.mxu0
    %v1496 = vadd.f32 0.0, %v1495
    %v1497 = vpop.f32.mrf.mxu0
    %v1498 = vadd.f32 0.0, %v1497
    %1499 = vdwg.mxu0
    %v1500 = vld [vmem:[%s4] sm:$0xf]
    %v1501 = vld [vmem:[%s5] sm:$0xf]
    %vm1502 = vcmask 15360
    %v1504 = vsel %vm1502, %v1501, 0
    %vm1506 = vcmask 1041408
    %v1508 = vsel %vm1506, %v1283, 0
    %v1511 = vsel %vm1506, %v1285, 0
    %v1514 = vsel %vm1506, %v1354, 0
    %v1517 = vsel %vm1506, %v1356, 0
    %v1520 = vsel %vm1506, %v1425, 0
    %v1523 = vsel %vm1506, %v1427, 0
    %v1526 = vsel %vm1506, %v1496, 0
    %v1529 = vsel %vm1506, %v1498, 0
    %1531 = vmatprep.subr.mxu0 0.0
    %1532 = vmatpush1.msra.mxu0 0.0
    %1533 = vmatprep.subr.mxu0 0.0
    %1534 = vmatpush1.msra.mxu0 0.0
    %1535 = vmatprep.subr.mxu0 0.0
    %1536 = vmatpush1.msra.mxu0 0.0
    %1537 = vmatprep.subr.mxu0 0.0
    %1538 = vmatpush1.msra.mxu0 0.0
    %1539 = vmatprep.subr.mxu0 0.0
    %1540 = vmatpush1.msra.mxu0 0.0
    %1541 = vmatprep.subr.mxu0 0.0
    %1542 = vmatpush1.msra.mxu0 0.0
    %1543 = vmatprep.subr.mxu0 0.0
    %1544 = vmatpush1.msra.mxu0 0.0
    %1545 = vmatprep.subr.mxu0 0.0
    %1546 = vmatpush1.msra.mxu0 0.0
    %1547 = vmatprep.subr.mxu0 0.0
    %1548 = vmatpush1.msra.mxu0 0.0
    %1549 = vmatprep.subr.mxu0 0.0
    %1550 = vmatpush1.msra.mxu0 0.0
    %1551 = vmatprep.subr.mxu0 0.0
    %1552 = vmatpush1.msra.mxu0 0.0
    %1553 = vmatprep.subr.mxu0 0.0
    %1554 = vmatpush1.msra.mxu0 0.0
    %1555 = vmatprep.subr.mxu0 0.0
    %1556 = vmatpush1.msra.mxu0 0.0
    %1557 = vmatprep.subr.mxu0 0.0
    %1558 = vmatpush1.msra.mxu0 0.0
    %1559 = vmatprep.subr.mxu0 0.0
    %1560 = vmatpush1.msra.mxu0 0.0
    %1561 = vmatprep.subr.mxu0 %v1511
    %1562 = vmatpush1.msra.mxu0 %v1508
    %1563 = vmatprep.subr.mxu0 0.0
    %1564 = vmatpush2.msra.mxu0 0.0
    %1565 = vmatprep.subr.mxu0 0.0
    %1566 = vmatpush2.msra.mxu0 0.0
    %1567 = vmatprep.subr.mxu0 0.0
    %1568 = vmatpush2.msra.mxu0 0.0
    %1569 = vmatprep.subr.mxu0 0.0
    %1570 = vmatpush2.msra.mxu0 0.0
    %1571 = vmatprep.subr.mxu0 0.0
    %1572 = vmatpush2.msra.mxu0 0.0
    %1573 = vmatprep.subr.mxu0 0.0
    %1574 = vmatpush2.msra.mxu0 0.0
    %1575 = vmatprep.subr.mxu0 0.0
    %1576 = vmatpush2.msra.mxu0 0.0
    %1577 = vmatprep.subr.mxu0 0.0
    %1578 = vmatpush2.msra.mxu0 0.0
    %1579 = vmatprep.subr.mxu0 0.0
    %1580 = vmatpush2.msra.mxu0 0.0
    %1581 = vmatprep.subr.mxu0 0.0
    %1582 = vmatpush2.msra.mxu0 0.0
    %1583 = vmatprep.subr.mxu0 0.0
    %1584 = vmatpush2.msra.mxu0 0.0
    %1585 = vmatprep.subr.mxu0 0.0
    %1586 = vmatpush2.msra.mxu0 0.0
    %1587 = vmatprep.subr.mxu0 0.0
    %1588 = vmatpush2.msra.mxu0 0.0
    %1589 = vmatprep.subr.mxu0 0.0
    %1590 = vmatpush2.msra.mxu0 0.0
    %1591 = vmatprep.subr.mxu0 0.0
    %1592 = vmatpush2.msra.mxu0 0.0
    %1593 = vmatprep.subr.mxu0 0.0
    %1594 = vmatpush2.msra.mxu0 0.0
    %1595 = vmatprep.mubr.f32.mxu0 0.0
    %1596 = vmatmul.mubr.f32.gmra.mxu0 %v1504
    %v1597 = vpop.f32.mrf.mxu0
    %v1598 = vadd.f32 0.0, %v1597
    %v1599 = vpop.f32.mrf.mxu0
    %v1600 = vadd.f32 0.0, %v1599
    %1601 = vdwg.mxu0
    %1602 = vmatprep.subr.mxu0 0.0
    %1603 = vmatpush1.msra.mxu0 0.0
    %1604 = vmatprep.subr.mxu0 0.0
    %1605 = vmatpush1.msra.mxu0 0.0
    %1606 = vmatprep.subr.mxu0 0.0
    %1607 = vmatpush1.msra.mxu0 0.0
    %1608 = vmatprep.subr.mxu0 0.0
    %1609 = vmatpush1.msra.mxu0 0.0
    %1610 = vmatprep.subr.mxu0 0.0
    %1611 = vmatpush1.msra.mxu0 0.0
    %1612 = vmatprep.subr.mxu0 0.0
    %1613 = vmatpush1.msra.mxu0 0.0
    %1614 = vmatprep.subr.mxu0 0.0
    %1615 = vmatpush1.msra.mxu0 0.0
    %1616 = vmatprep.subr.mxu0 0.0
    %1617 = vmatpush1.msra.mxu0 0.0
    %1618 = vmatprep.subr.mxu0 0.0
    %1619 = vmatpush1.msra.mxu0 0.0
    %1620 = vmatprep.subr.mxu0 0.0
    %1621 = vmatpush1.msra.mxu0 0.0
    %1622 = vmatprep.subr.mxu0 0.0
    %1623 = vmatpush1.msra.mxu0 0.0
    %1624 = vmatprep.subr.mxu0 0.0
    %1625 = vmatpush1.msra.mxu0 0.0
    %1626 = vmatprep.subr.mxu0 0.0
    %1627 = vmatpush1.msra.mxu0 0.0
    %1628 = vmatprep.subr.mxu0 0.0
    %1629 = vmatpush1.msra.mxu0 0.0
    %1630 = vmatprep.subr.mxu0 0.0
    %1631 = vmatpush1.msra.mxu0 0.0
    %1632 = vmatprep.subr.mxu0 %v1517
    %1633 = vmatpush1.msra.mxu0 %v1514
    %1634 = vmatprep.subr.mxu0 0.0
    %1635 = vmatpush2.msra.mxu0 0.0
    %1636 = vmatprep.subr.mxu0 0.0
    %1637 = vmatpush2.msra.mxu0 0.0
    %1638 = vmatprep.subr.mxu0 0.0
    %1639 = vmatpush2.msra.mxu0 0.0
    %1640 = vmatprep.subr.mxu0 0.0
    %1641 = vmatpush2.msra.mxu0 0.0
    %1642 = vmatprep.subr.mxu0 0.0
    %1643 = vmatpush2.msra.mxu0 0.0
    %1644 = vmatprep.subr.mxu0 0.0
    %1645 = vmatpush2.msra.mxu0 0.0
    %1646 = vmatprep.subr.mxu0 0.0
    %1647 = vmatpush2.msra.mxu0 0.0
    %1648 = vmatprep.subr.mxu0 0.0
    %1649 = vmatpush2.msra.mxu0 0.0
    %1650 = vmatprep.subr.mxu0 0.0
    %1651 = vmatpush2.msra.mxu0 0.0
    %1652 = vmatprep.subr.mxu0 0.0
    %1653 = vmatpush2.msra.mxu0 0.0
    %1654 = vmatprep.subr.mxu0 0.0
    %1655 = vmatpush2.msra.mxu0 0.0
    %1656 = vmatprep.subr.mxu0 0.0
    %1657 = vmatpush2.msra.mxu0 0.0
    %1658 = vmatprep.subr.mxu0 0.0
    %1659 = vmatpush2.msra.mxu0 0.0
    %1660 = vmatprep.subr.mxu0 0.0
    %1661 = vmatpush2.msra.mxu0 0.0
    %1662 = vmatprep.subr.mxu0 0.0
    %1663 = vmatpush2.msra.mxu0 0.0
    %1664 = vmatprep.subr.mxu0 0.0
    %1665 = vmatpush2.msra.mxu0 0.0
    %1666 = vmatprep.mubr.f32.mxu0 0.0
    %1667 = vmatmul.mubr.f32.gmra.mxu0 %v1504
    %v1668 = vpop.f32.mrf.mxu0
    %v1669 = vadd.f32 0.0, %v1668
    %v1670 = vpop.f32.mrf.mxu0
    %v1671 = vadd.f32 0.0, %v1670
    %1672 = vdwg.mxu0
    %1673 = vmatprep.subr.mxu0 0.0
    %1674 = vmatpush1.msra.mxu0 0.0
    %1675 = vmatprep.subr.mxu0 0.0
    %1676 = vmatpush1.msra.mxu0 0.0
    %1677 = vmatprep.subr.mxu0 0.0
    %1678 = vmatpush1.msra.mxu0 0.0
    %1679 = vmatprep.subr.mxu0 0.0
    %1680 = vmatpush1.msra.mxu0 0.0
    %1681 = vmatprep.subr.mxu0 0.0
    %1682 = vmatpush1.msra.mxu0 0.0
    %1683 = vmatprep.subr.mxu0 0.0
    %1684 = vmatpush1.msra.mxu0 0.0
    %1685 = vmatprep.subr.mxu0 0.0
    %1686 = vmatpush1.msra.mxu0 0.0
    %1687 = vmatprep.subr.mxu0 0.0
    %1688 = vmatpush1.msra.mxu0 0.0
    %1689 = vmatprep.subr.mxu0 0.0
    %1690 = vmatpush1.msra.mxu0 0.0
    %1691 = vmatprep.subr.mxu0 0.0
    %1692 = vmatpush1.msra.mxu0 0.0
    %1693 = vmatprep.subr.mxu0 0.0
    %1694 = vmatpush1.msra.mxu0 0.0
    %1695 = vmatprep.subr.mxu0 0.0
    %1696 = vmatpush1.msra.mxu0 0.0
    %1697 = vmatprep.subr.mxu0 0.0
    %1698 = vmatpush1.msra.mxu0 0.0
    %1699 = vmatprep.subr.mxu0 0.0
    %1700 = vmatpush1.msra.mxu0 0.0
    %1701 = vmatprep.subr.mxu0 0.0
    %1702 = vmatpush1.msra.mxu0 0.0
    %1703 = vmatprep.subr.mxu0 %v1523
    %1704 = vmatpush1.msra.mxu0 %v1520
    %1705 = vmatprep.subr.mxu0 0.0
    %1706 = vmatpush2.msra.mxu0 0.0
    %1707 = vmatprep.subr.mxu0 0.0
    %1708 = vmatpush2.msra.mxu0 0.0
    %1709 = vmatprep.subr.mxu0 0.0
    %1710 = vmatpush2.msra.mxu0 0.0
    %1711 = vmatprep.subr.mxu0 0.0
    %1712 = vmatpush2.msra.mxu0 0.0
    %1713 = vmatprep.subr.mxu0 0.0
    %1714 = vmatpush2.msra.mxu0 0.0
    %1715 = vmatprep.subr.mxu0 0.0
    %1716 = vmatpush2.msra.mxu0 0.0
    %1717 = vmatprep.subr.mxu0 0.0
    %1718 = vmatpush2.msra.mxu0 0.0
    %1719 = vmatprep.subr.mxu0 0.0
    %1720 = vmatpush2.msra.mxu0 0.0
    %1721 = vmatprep.subr.mxu0 0.0
    %1722 = vmatpush2.msra.mxu0 0.0
    %1723 = vmatprep.subr.mxu0 0.0
    %1724 = vmatpush2.msra.mxu0 0.0
    %1725 = vmatprep.subr.mxu0 0.0
    %1726 = vmatpush2.msra.mxu0 0.0
    %1727 = vmatprep.subr.mxu0 0.0
    %1728 = vmatpush2.msra.mxu0 0.0
    %1729 = vmatprep.subr.mxu0 0.0
    %1730 = vmatpush2.msra.mxu0 0.0
    %1731 = vmatprep.subr.mxu0 0.0
    %1732 = vmatpush2.msra.mxu0 0.0
    %1733 = vmatprep.subr.mxu0 0.0
    %1734 = vmatpush2.msra.mxu0 0.0
    %1735 = vmatprep.subr.mxu0 0.0
    %1736 = vmatpush2.msra.mxu0 0.0
    %1737 = vmatprep.mubr.f32.mxu0 0.0
    %1738 = vmatmul.mubr.f32.gmra.mxu0 %v1504
    %v1739 = vpop.f32.mrf.mxu0
    %v1740 = vadd.f32 0.0, %v1739
    %v1741 = vpop.f32.mrf.mxu0
    %v1742 = vadd.f32 0.0, %v1741
    %1743 = vdwg.mxu0
    %1744 = vmatprep.subr.mxu0 0.0
    %1745 = vmatpush1.msra.mxu0 0.0
    %1746 = vmatprep.subr.mxu0 0.0
    %1747 = vmatpush1.msra.mxu0 0.0
    %1748 = vmatprep.subr.mxu0 0.0
    %1749 = vmatpush1.msra.mxu0 0.0
    %1750 = vmatprep.subr.mxu0 0.0
    %1751 = vmatpush1.msra.mxu0 0.0
    %1752 = vmatprep.subr.mxu0 0.0
    %1753 = vmatpush1.msra.mxu0 0.0
    %1754 = vmatprep.subr.mxu0 0.0
    %1755 = vmatpush1.msra.mxu0 0.0
    %1756 = vmatprep.subr.mxu0 0.0
    %1757 = vmatpush1.msra.mxu0 0.0
    %1758 = vmatprep.subr.mxu0 0.0
    %1759 = vmatpush1.msra.mxu0 0.0
    %1760 = vmatprep.subr.mxu0 0.0
    %1761 = vmatpush1.msra.mxu0 0.0
    %1762 = vmatprep.subr.mxu0 0.0
    %1763 = vmatpush1.msra.mxu0 0.0
    %1764 = vmatprep.subr.mxu0 0.0
    %1765 = vmatpush1.msra.mxu0 0.0
    %1766 = vmatprep.subr.mxu0 0.0
    %1767 = vmatpush1.msra.mxu0 0.0
    %1768 = vmatprep.subr.mxu0 0.0
    %1769 = vmatpush1.msra.mxu0 0.0
    %1770 = vmatprep.subr.mxu0 0.0
    %1771 = vmatpush1.msra.mxu0 0.0
    %1772 = vmatprep.subr.mxu0 0.0
    %1773 = vmatpush1.msra.mxu0 0.0
    %1774 = vmatprep.subr.mxu0 %v1529
    %1775 = vmatpush1.msra.mxu0 %v1526
    %1776 = vmatprep.subr.mxu0 0.0
    %1777 = vmatpush2.msra.mxu0 0.0
    %1778 = vmatprep.subr.mxu0 0.0
    %1779 = vmatpush2.msra.mxu0 0.0
    %1780 = vmatprep.subr.mxu0 0.0
    %1781 = vmatpush2.msra.mxu0 0.0
    %1782 = vmatprep.subr.mxu0 0.0
    %1783 = vmatpush2.msra.mxu0 0.0
    %1784 = vmatprep.subr.mxu0 0.0
    %1785 = vmatpush2.msra.mxu0 0.0
    %1786 = vmatprep.subr.mxu0 0.0
    %1787 = vmatpush2.msra.mxu0 0.0
    %1788 = vmatprep.subr.mxu0 0.0
    %1789 = vmatpush2.msra.mxu0 0.0
    %1790 = vmatprep.subr.mxu0 0.0
    %1791 = vmatpush2.msra.mxu0 0.0
    %1792 = vmatprep.subr.mxu0 0.0
    %1793 = vmatpush2.msra.mxu0 0.0
    %1794 = vmatprep.subr.mxu0 0.0
    %1795 = vmatpush2.msra.mxu0 0.0
    %1796 = vmatprep.subr.mxu0 0.0
    %1797 = vmatpush2.msra.mxu0 0.0
    %1798 = vmatprep.subr.mxu0 0.0
    %1799 = vmatpush2.msra.mxu0 0.0
    %1800 = vmatprep.subr.mxu0 0.0
    %1801 = vmatpush2.msra.mxu0 0.0
    %1802 = vmatprep.subr.mxu0 0.0
    %1803 = vmatpush2.msra.mxu0 0.0
    %1804 = vmatprep.subr.mxu0 0.0
    %1805 = vmatpush2.msra.mxu0 0.0
    %1806 = vmatprep.subr.mxu0 0.0
    %1807 = vmatpush2.msra.mxu0 0.0
    %1808 = vmatprep.mubr.f32.mxu0 0.0
    %1809 = vmatmul.mubr.f32.gmra.mxu0 %v1504
    %v1810 = vpop.f32.mrf.mxu0
    %v1811 = vadd.f32 0.0, %v1810
    %v1812 = vpop.f32.mrf.mxu0
    %v1813 = vadd.f32 0.0, %v1812
    %1814 = vdwg.mxu0
    %v1816 = vsel %vm1502, %v1500, 0
    %v1819 = vsel %vm1506, %v1054, 0
    %v1822 = vsel %vm1506, %v1056, 0
    %v1825 = vsel %vm1506, %v1095, 0
    %v1828 = vsel %vm1506, %v1097, 0
    %v1831 = vsel %vm1506, %v1136, 0
    %v1834 = vsel %vm1506, %v1138, 0
    %v1837 = vsel %vm1506, %v1177, 0
    %v1840 = vsel %vm1506, %v1179, 0
    %1842 = vmatprep.subr.mxu0 0.0
    %1843 = vmatpush1.msra.mxu0 0.0
    %1844 = vmatprep.subr.mxu0 0.0
    %1845 = vmatpush1.msra.mxu0 0.0
    %1846 = vmatprep.subr.mxu0 0.0
    %1847 = vmatpush1.msra.mxu0 0.0
    %1848 = vmatprep.subr.mxu0 0.0
    %1849 = vmatpush1.msra.mxu0 0.0
    %1850 = vmatprep.subr.mxu0 0.0
    %1851 = vmatpush1.msra.mxu0 0.0
    %1852 = vmatprep.subr.mxu0 0.0
    %1853 = vmatpush1.msra.mxu0 0.0
    %1854 = vmatprep.subr.mxu0 0.0
    %1855 = vmatpush1.msra.mxu0 0.0
    %1856 = vmatprep.subr.mxu0 0.0
    %1857 = vmatpush1.msra.mxu0 0.0
    %1858 = vmatprep.subr.mxu0 0.0
    %1859 = vmatpush1.msra.mxu0 0.0
    %1860 = vmatprep.subr.mxu0 0.0
    %1861 = vmatpush1.msra.mxu0 0.0
    %1862 = vmatprep.subr.mxu0 0.0
    %1863 = vmatpush1.msra.mxu0 0.0
    %1864 = vmatprep.subr.mxu0 0.0
    %1865 = vmatpush1.msra.mxu0 0.0
    %1866 = vmatprep.subr.mxu0 0.0
    %1867 = vmatpush1.msra.mxu0 0.0
    %1868 = vmatprep.subr.mxu0 0.0
    %1869 = vmatpush1.msra.mxu0 0.0
    %1870 = vmatprep.subr.mxu0 0.0
    %1871 = vmatpush1.msra.mxu0 0.0
    %1872 = vmatprep.subr.mxu0 %v1822
    %1873 = vmatpush1.msra.mxu0 %v1819
    %1874 = vmatprep.subr.mxu0 0.0
    %1875 = vmatpush2.msra.mxu0 0.0
    %1876 = vmatprep.subr.mxu0 0.0
    %1877 = vmatpush2.msra.mxu0 0.0
    %1878 = vmatprep.subr.mxu0 0.0
    %1879 = vmatpush2.msra.mxu0 0.0
    %1880 = vmatprep.subr.mxu0 0.0
    %1881 = vmatpush2.msra.mxu0 0.0
    %1882 = vmatprep.subr.mxu0 0.0
    %1883 = vmatpush2.msra.mxu0 0.0
    %1884 = vmatprep.subr.mxu0 0.0
    %1885 = vmatpush2.msra.mxu0 0.0
    %1886 = vmatprep.subr.mxu0 0.0
    %1887 = vmatpush2.msra.mxu0 0.0
    %1888 = vmatprep.subr.mxu0 0.0
    %1889 = vmatpush2.msra.mxu0 0.0
    %1890 = vmatprep.subr.mxu0 0.0
    %1891 = vmatpush2.msra.mxu0 0.0
    %1892 = vmatprep.subr.mxu0 0.0
    %1893 = vmatpush2.msra.mxu0 0.0
    %1894 = vmatprep.subr.mxu0 0.0
    %1895 = vmatpush2.msra.mxu0 0.0
    %1896 = vmatprep.subr.mxu0 0.0
    %1897 = vmatpush2.msra.mxu0 0.0
    %1898 = vmatprep.subr.mxu0 0.0
    %1899 = vmatpush2.msra.mxu0 0.0
    %1900 = vmatprep.subr.mxu0 0.0
    %1901 = vmatpush2.msra.mxu0 0.0
    %1902 = vmatprep.subr.mxu0 0.0
    %1903 = vmatpush2.msra.mxu0 0.0
    %1904 = vmatprep.subr.mxu0 0.0
    %1905 = vmatpush2.msra.mxu0 0.0
    %1906 = vmatprep.mubr.f32.mxu0 0.0
    %1907 = vmatmul.mubr.f32.gmra.mxu0 %v1816
    %v1908 = vpop.f32.mrf.mxu0
    %v1909 = vadd.f32 %v1598, %v1908
    %v1910 = vpop.f32.mrf.mxu0
    %v1911 = vadd.f32 %v1600, %v1910
    %1912 = vdwg.mxu0
    %1913 = vmatprep.subr.mxu0 0.0
    %1914 = vmatpush1.msra.mxu0 0.0
    %1915 = vmatprep.subr.mxu0 0.0
    %1916 = vmatpush1.msra.mxu0 0.0
    %1917 = vmatprep.subr.mxu0 0.0
    %1918 = vmatpush1.msra.mxu0 0.0
    %1919 = vmatprep.subr.mxu0 0.0
    %1920 = vmatpush1.msra.mxu0 0.0
    %1921 = vmatprep.subr.mxu0 0.0
    %1922 = vmatpush1.msra.mxu0 0.0
    %1923 = vmatprep.subr.mxu0 0.0
    %1924 = vmatpush1.msra.mxu0 0.0
    %1925 = vmatprep.subr.mxu0 0.0
    %1926 = vmatpush1.msra.mxu0 0.0
    %1927 = vmatprep.subr.mxu0 0.0
    %1928 = vmatpush1.msra.mxu0 0.0
    %1929 = vmatprep.subr.mxu0 0.0
    %1930 = vmatpush1.msra.mxu0 0.0
    %1931 = vmatprep.subr.mxu0 0.0
    %1932 = vmatpush1.msra.mxu0 0.0
    %1933 = vmatprep.subr.mxu0 0.0
    %1934 = vmatpush1.msra.mxu0 0.0
    %1935 = vmatprep.subr.mxu0 0.0
    %1936 = vmatpush1.msra.mxu0 0.0
    %1937 = vmatprep.subr.mxu0 0.0
    %1938 = vmatpush1.msra.mxu0 0.0
    %1939 = vmatprep.subr.mxu0 0.0
    %1940 = vmatpush1.msra.mxu0 0.0
    %1941 = vmatprep.subr.mxu0 0.0
    %1942 = vmatpush1.msra.mxu0 0.0
    %1943 = vmatprep.subr.mxu0 %v1828
    %1944 = vmatpush1.msra.mxu0 %v1825
    %1945 = vmatprep.subr.mxu0 0.0
    %1946 = vmatpush2.msra.mxu0 0.0
    %1947 = vmatprep.subr.mxu0 0.0
    %1948 = vmatpush2.msra.mxu0 0.0
    %1949 = vmatprep.subr.mxu0 0.0
    %1950 = vmatpush2.msra.mxu0 0.0
    %1951 = vmatprep.subr.mxu0 0.0
    %1952 = vmatpush2.msra.mxu0 0.0
    %1953 = vmatprep.subr.mxu0 0.0
    %1954 = vmatpush2.msra.mxu0 0.0
    %1955 = vmatprep.subr.mxu0 0.0
    %1956 = vmatpush2.msra.mxu0 0.0
    %1957 = vmatprep.subr.mxu0 0.0
    %1958 = vmatpush2.msra.mxu0 0.0
    %1959 = vmatprep.subr.mxu0 0.0
    %1960 = vmatpush2.msra.mxu0 0.0
    %1961 = vmatprep.subr.mxu0 0.0
    %1962 = vmatpush2.msra.mxu0 0.0
    %1963 = vmatprep.subr.mxu0 0.0
    %1964 = vmatpush2.msra.mxu0 0.0
    %1965 = vmatprep.subr.mxu0 0.0
    %1966 = vmatpush2.msra.mxu0 0.0
    %1967 = vmatprep.subr.mxu0 0.0
    %1968 = vmatpush2.msra.mxu0 0.0
    %1969 = vmatprep.subr.mxu0 0.0
    %1970 = vmatpush2.msra.mxu0 0.0
    %1971 = vmatprep.subr.mxu0 0.0
    %1972 = vmatpush2.msra.mxu0 0.0
    %1973 = vmatprep.subr.mxu0 0.0
    %1974 = vmatpush2.msra.mxu0 0.0
    %1975 = vmatprep.subr.mxu0 0.0
    %1976 = vmatpush2.msra.mxu0 0.0
    %1977 = vmatprep.mubr.f32.mxu0 0.0
    %1978 = vmatmul.mubr.f32.gmra.mxu0 %v1816
    %v1979 = vpop.f32.mrf.mxu0
    %v1980 = vadd.f32 %v1669, %v1979
    %v1981 = vpop.f32.mrf.mxu0
    %v1982 = vadd.f32 %v1671, %v1981
    %1983 = vdwg.mxu0
    %1984 = vmatprep.subr.mxu0 0.0
    %1985 = vmatpush1.msra.mxu0 0.0
    %1986 = vmatprep.subr.mxu0 0.0
    %1987 = vmatpush1.msra.mxu0 0.0
    %1988 = vmatprep.subr.mxu0 0.0
    %1989 = vmatpush1.msra.mxu0 0.0
    %1990 = vmatprep.subr.mxu0 0.0
    %1991 = vmatpush1.msra.mxu0 0.0
    %1992 = vmatprep.subr.mxu0 0.0
    %1993 = vmatpush1.msra.mxu0 0.0
    %1994 = vmatprep.subr.mxu0 0.0
    %1995 = vmatpush1.msra.mxu0 0.0
    %1996 = vmatprep.subr.mxu0 0.0
    %1997 = vmatpush1.msra.mxu0 0.0
    %1998 = vmatprep.subr.mxu0 0.0
    %1999 = vmatpush1.msra.mxu0 0.0
    %2000 = vmatprep.subr.mxu0 0.0
    %2001 = vmatpush1.msra.mxu0 0.0
    %2002 = vmatprep.subr.mxu0 0.0
    %2003 = vmatpush1.msra.mxu0 0.0
    %2004 = vmatprep.subr.mxu0 0.0
    %2005 = vmatpush1.msra.mxu0 0.0
    %2006 = vmatprep.subr.mxu0 0.0
    %2007 = vmatpush1.msra.mxu0 0.0
    %2008 = vmatprep.subr.mxu0 0.0
    %2009 = vmatpush1.msra.mxu0 0.0
    %2010 = vmatprep.subr.mxu0 0.0
    %2011 = vmatpush1.msra.mxu0 0.0
    %2012 = vmatprep.subr.mxu0 0.0
    %2013 = vmatpush1.msra.mxu0 0.0
    %2014 = vmatprep.subr.mxu0 %v1834
    %2015 = vmatpush1.msra.mxu0 %v1831
    %2016 = vmatprep.subr.mxu0 0.0
    %2017 = vmatpush2.msra.mxu0 0.0
    %2018 = vmatprep.subr.mxu0 0.0
    %2019 = vmatpush2.msra.mxu0 0.0
    %2020 = vmatprep.subr.mxu0 0.0
    %2021 = vmatpush2.msra.mxu0 0.0
    %2022 = vmatprep.subr.mxu0 0.0
    %2023 = vmatpush2.msra.mxu0 0.0
    %2024 = vmatprep.subr.mxu0 0.0
    %2025 = vmatpush2.msra.mxu0 0.0
    %2026 = vmatprep.subr.mxu0 0.0
    %2027 = vmatpush2.msra.mxu0 0.0
    %2028 = vmatprep.subr.mxu0 0.0
    %2029 = vmatpush2.msra.mxu0 0.0
    %2030 = vmatprep.subr.mxu0 0.0
    %2031 = vmatpush2.msra.mxu0 0.0
    %2032 = vmatprep.subr.mxu0 0.0
    %2033 = vmatpush2.msra.mxu0 0.0
    %2034 = vmatprep.subr.mxu0 0.0
    %2035 = vmatpush2.msra.mxu0 0.0
    %2036 = vmatprep.subr.mxu0 0.0
    %2037 = vmatpush2.msra.mxu0 0.0
    %2038 = vmatprep.subr.mxu0 0.0
    %2039 = vmatpush2.msra.mxu0 0.0
    %2040 = vmatprep.subr.mxu0 0.0
    %2041 = vmatpush2.msra.mxu0 0.0
    %2042 = vmatprep.subr.mxu0 0.0
    %2043 = vmatpush2.msra.mxu0 0.0
    %2044 = vmatprep.subr.mxu0 0.0
    %2045 = vmatpush2.msra.mxu0 0.0
    %2046 = vmatprep.subr.mxu0 0.0
    %2047 = vmatpush2.msra.mxu0 0.0
    %2048 = vmatprep.mubr.f32.mxu0 0.0
    %2049 = vmatmul.mubr.f32.gmra.mxu0 %v1816
    %v2050 = vpop.f32.mrf.mxu0
    %v2051 = vadd.f32 %v1740, %v2050
    %v2052 = vpop.f32.mrf.mxu0
    %v2053 = vadd.f32 %v1742, %v2052
    %2054 = vdwg.mxu0
    %2055 = vmatprep.subr.mxu0 0.0
    %2056 = vmatpush1.msra.mxu0 0.0
    %2057 = vmatprep.subr.mxu0 0.0
    %2058 = vmatpush1.msra.mxu0 0.0
    %2059 = vmatprep.subr.mxu0 0.0
    %2060 = vmatpush1.msra.mxu0 0.0
    %2061 = vmatprep.subr.mxu0 0.0
    %2062 = vmatpush1.msra.mxu0 0.0
    %2063 = vmatprep.subr.mxu0 0.0
    %2064 = vmatpush1.msra.mxu0 0.0
    %2065 = vmatprep.subr.mxu0 0.0
    %2066 = vmatpush1.msra.mxu0 0.0
    %2067 = vmatprep.subr.mxu0 0.0
    %2068 = vmatpush1.msra.mxu0 0.0
    %2069 = vmatprep.subr.mxu0 0.0
    %2070 = vmatpush1.msra.mxu0 0.0
    %2071 = vmatprep.subr.mxu0 0.0
    %2072 = vmatpush1.msra.mxu0 0.0
    %2073 = vmatprep.subr.mxu0 0.0
    %2074 = vmatpush1.msra.mxu0 0.0
    %2075 = vmatprep.subr.mxu0 0.0
    %2076 = vmatpush1.msra.mxu0 0.0
    %2077 = vmatprep.subr.mxu0 0.0
    %2078 = vmatpush1.msra.mxu0 0.0
    %2079 = vmatprep.subr.mxu0 0.0
    %2080 = vmatpush1.msra.mxu0 0.0
    %2081 = vmatprep.subr.mxu0 0.0
    %2082 = vmatpush1.msra.mxu0 0.0
    %2083 = vmatprep.subr.mxu0 0.0
    %2084 = vmatpush1.msra.mxu0 0.0
    %2085 = vmatprep.subr.mxu0 %v1840
    %2086 = vmatpush1.msra.mxu0 %v1837
    %2087 = vmatprep.subr.mxu0 0.0
    %2088 = vmatpush2.msra.mxu0 0.0
    %2089 = vmatprep.subr.mxu0 0.0
    %2090 = vmatpush2.msra.mxu0 0.0
    %2091 = vmatprep.subr.mxu0 0.0
    %2092 = vmatpush2.msra.mxu0 0.0
    %2093 = vmatprep.subr.mxu0 0.0
    %2094 = vmatpush2.msra.mxu0 0.0
    %2095 = vmatprep.subr.mxu0 0.0
    %2096 = vmatpush2.msra.mxu0 0.0
    %2097 = vmatprep.subr.mxu0 0.0
    %2098 = vmatpush2.msra.mxu0 0.0
    %2099 = vmatprep.subr.mxu0 0.0
    %2100 = vmatpush2.msra.mxu0 0.0
    %2101 = vmatprep.subr.mxu0 0.0
    %2102 = vmatpush2.msra.mxu0 0.0
    %2103 = vmatprep.subr.mxu0 0.0
    %2104 = vmatpush2.msra.mxu0 0.0
    %2105 = vmatprep.subr.mxu0 0.0
    %2106 = vmatpush2.msra.mxu0 0.0
    %2107 = vmatprep.subr.mxu0 0.0
    %2108 = vmatpush2.msra.mxu0 0.0
    %2109 = vmatprep.subr.mxu0 0.0
    %2110 = vmatpush2.msra.mxu0 0.0
    %2111 = vmatprep.subr.mxu0 0.0
    %2112 = vmatpush2.msra.mxu0 0.0
    %2113 = vmatprep.subr.mxu0 0.0
    %2114 = vmatpush2.msra.mxu0 0.0
    %2115 = vmatprep.subr.mxu0 0.0
    %2116 = vmatpush2.msra.mxu0 0.0
    %2117 = vmatprep.subr.mxu0 0.0
    %2118 = vmatpush2.msra.mxu0 0.0
    %2119 = vmatprep.mubr.f32.mxu0 0.0
    %2120 = vmatmul.mubr.f32.gmra.mxu0 %v1816
    %v2121 = vpop.f32.mrf.mxu0
    %v2122 = vadd.f32 %v1811, %v2121
    %v2123 = vpop.f32.mrf.mxu0
    %v2124 = vadd.f32 %v1813, %v2123
    %2125 = vdwg.mxu0
    %v2126 = vld [vmem:[%s9] sm:$0xff]
    %v2128 = vlaneseq
    %v2129 = vshrl.u32 %v2128, 7
    %v2130 = vsub.s32 0, %v2129
    %v2131 = vrot.slane %v2126, %v2130
    %v2132 = vlaneseq
    %v2133 = vshrl.u32 %v2132, 7
    %v2134 = vsub.s32 1, %v2133
    %v2135 = vrot.slane %v2126, %v2134
    %v2136 = vlaneseq
    %v2137 = vshrl.u32 %v2136, 7
    %v2138 = vsub.s32 2, %v2137
    %v2139 = vrot.slane %v2126, %v2138
    %v2140 = vlaneseq
    %v2141 = vshrl.u32 %v2140, 7
    %v2142 = vsub.s32 3, %v2141
    %v2143 = vrot.slane %v2126, %v2142
    %v2144 = vlaneseq
    %v2145 = vshrl.u32 %v2144, 7
    %v2146 = vsub.s32 4, %v2145
    %v2147 = vrot.slane %v2126, %v2146
    %v2148 = vlaneseq
    %v2149 = vshrl.u32 %v2148, 7
    %v2150 = vsub.s32 5, %v2149
    %v2151 = vrot.slane %v2126, %v2150
    %v2152 = vlaneseq
    %v2153 = vshrl.u32 %v2152, 7
    %v2154 = vsub.s32 6, %v2153
    %v2155 = vrot.slane %v2126, %v2154
    %v2156 = vlaneseq
    %v2157 = vshrl.u32 %v2156, 7
    %v2158 = vsub.s32 7, %v2157
    %v2159 = vrot.slane %v2126, %v2158
    %v2168 = vadd.f32 %v1909, %v2131
    %v2169 = vadd.f32 %v1911, %v2135
    %v2170 = vadd.f32 %v1980, %v2139
    %v2171 = vadd.f32 %v1982, %v2143
    %v2172 = vadd.f32 %v2051, %v2147
    %v2173 = vadd.f32 %v2053, %v2151
    %v2174 = vadd.f32 %v2122, %v2155
    %v2175 = vadd.f32 %v2124, %v2159
    %vm2176 = vcmp.ge.f32.partialorder %v2168, 0.0
    %vm2177 = vcmp.ge.f32.partialorder %v2169, 0.0
    %vm2178 = vcmp.ge.f32.partialorder %v2170, 0.0
    %vm2179 = vcmp.ge.f32.partialorder %v2171, 0.0
    %vm2180 = vcmp.ge.f32.partialorder %v2172, 0.0
    %vm2181 = vcmp.ge.f32.partialorder %v2173, 0.0
    %vm2182 = vcmp.ge.f32.partialorder %v2174, 0.0
    %vm2183 = vcmp.ge.f32.partialorder %v2175, 0.0
    %v2184 = vmul.f32 %v2168, 0.01
    %v2185 = vmul.f32 %v2169, 0.01
    %v2186 = vmul.f32 %v2170, 0.01
    %v2187 = vmul.f32 %v2171, 0.01
    %v2188 = vmul.f32 %v2172, 0.01
    %v2189 = vmul.f32 %v2173, 0.01
    %v2190 = vmul.f32 %v2174, 0.01
    %v2191 = vmul.f32 %v2175, 0.01
    %v2192 = vsel %vm2176, %v2168, %v2184
    %v2193 = vsel %vm2177, %v2169, %v2185
    %v2194 = vsel %vm2178, %v2170, %v2186
    %v2195 = vsel %vm2179, %v2171, %v2187
    %v2196 = vsel %vm2180, %v2172, %v2188
    %v2197 = vsel %vm2181, %v2173, %v2189
    %v2198 = vsel %vm2182, %v2174, %v2190
    %v2199 = vsel %vm2183, %v2175, %v2191
    %v2200 = vld [vmem:[%s10] sm:$0xff]
    %v2201 = vld [vmem:[%s10 + $0x8] sm:$0xff]
    %v2202 = vld [vmem:[%s10 + $0x10] sm:$0xff]
    %v2203 = vld [vmem:[%s10 + $0x18] sm:$0xff]
    %v2204 = vld [vmem:[%s10 + $0x20] sm:$0xff]
    %v2205 = vld [vmem:[%s10 + $0x28] sm:$0xff]
    %v2206 = vld [vmem:[%s10 + $0x30] sm:$0xff]
    %v2207 = vld [vmem:[%s10 + $0x38] sm:$0xff]
    %v2208 = vld [vmem:[%s10 + $0x40] sm:$0xff]
    %v2209 = vld [vmem:[%s10 + $0x48] sm:$0xff]
    %v2210 = vld [vmem:[%s10 + $0x50] sm:$0xff]
    %v2211 = vld [vmem:[%s10 + $0x58] sm:$0xff]
    %v2212 = vld [vmem:[%s10 + $0x60] sm:$0xff]
    %v2213 = vld [vmem:[%s10 + $0x68] sm:$0xff]
    %v2214 = vld [vmem:[%s10 + $0x70] sm:$0xff]
    %v2215 = vld [vmem:[%s10 + $0x78] sm:$0xff]
    %v2216 = vld [vmem:[%s10 + $0x80] sm:$0xff]
    %v2217 = vld [vmem:[%s10 + $0x88] sm:$0xff]
    %v2218 = vld [vmem:[%s10 + $0x90] sm:$0xff]
    %v2219 = vld [vmem:[%s10 + $0x98] sm:$0xff]
    %v2220 = vld [vmem:[%s10 + $0xa0] sm:$0xff]
    %v2221 = vld [vmem:[%s10 + $0xa8] sm:$0xff]
    %v2222 = vld [vmem:[%s10 + $0xb0] sm:$0xff]
    %v2223 = vld [vmem:[%s10 + $0xb8] sm:$0xff]
    %v2224 = vld [vmem:[%s10 + $0xc0] sm:$0xff]
    %v2225 = vld [vmem:[%s10 + $0xc8] sm:$0xff]
    %v2226 = vld [vmem:[%s10 + $0xd0] sm:$0xff]
    %v2227 = vld [vmem:[%s10 + $0xd8] sm:$0xff]
    %v2228 = vld [vmem:[%s10 + $0xe0] sm:$0xff]
    %v2229 = vld [vmem:[%s10 + $0xe8] sm:$0xff]
    %v2230 = vld [vmem:[%s10 + $0xf0] sm:$0xff]
    %v2231 = vld [vmem:[%s10 + $0xf8] sm:$0xff]
    %v2232 = vld [vmem:[%s10 + $0x100] sm:$0xff]
    %v2233 = vld [vmem:[%s10 + $0x108] sm:$0xff]
    %v2234 = vld [vmem:[%s10 + $0x110] sm:$0xff]
    %v2235 = vld [vmem:[%s10 + $0x118] sm:$0xff]
    %v2236 = vld [vmem:[%s10 + $0x120] sm:$0xff]
    %v2237 = vld [vmem:[%s10 + $0x128] sm:$0xff]
    %v2238 = vld [vmem:[%s10 + $0x130] sm:$0xff]
    %v2239 = vld [vmem:[%s10 + $0x138] sm:$0xff]
    %v2240 = vld [vmem:[%s10 + $0x140] sm:$0xff]
    %v2241 = vld [vmem:[%s10 + $0x148] sm:$0xff]
    %v2242 = vld [vmem:[%s10 + $0x150] sm:$0xff]
    %v2243 = vld [vmem:[%s10 + $0x158] sm:$0xff]
    %v2244 = vld [vmem:[%s10 + $0x160] sm:$0xff]
    %v2245 = vld [vmem:[%s10 + $0x168] sm:$0xff]
    %v2246 = vld [vmem:[%s10 + $0x170] sm:$0xff]
    %v2247 = vld [vmem:[%s10 + $0x178] sm:$0xff]
    %v2248 = vld [vmem:[%s10 + $0x180] sm:$0xff]
    %v2249 = vld [vmem:[%s10 + $0x188] sm:$0xff]
    %v2250 = vld [vmem:[%s10 + $0x190] sm:$0xff]
    %v2251 = vld [vmem:[%s10 + $0x198] sm:$0xff]
    %v2252 = vld [vmem:[%s10 + $0x1a0] sm:$0xff]
    %v2253 = vld [vmem:[%s10 + $0x1a8] sm:$0xff]
    %v2254 = vld [vmem:[%s10 + $0x1b0] sm:$0xff]
    %v2255 = vld [vmem:[%s10 + $0x1b8] sm:$0xff]
    %v2256 = vld [vmem:[%s10 + $0x1c0] sm:$0xff]
    %v2257 = vld [vmem:[%s10 + $0x1c8] sm:$0xff]
    %v2258 = vld [vmem:[%s10 + $0x1d0] sm:$0xff]
    %v2259 = vld [vmem:[%s10 + $0x1d8] sm:$0xff]
    %v2260 = vld [vmem:[%s10 + $0x1e0] sm:$0xff]
    %v2261 = vld [vmem:[%s10 + $0x1e8] sm:$0xff]
    %v2262 = vld [vmem:[%s10 + $0x1f0] sm:$0xff]
    %v2263 = vld [vmem:[%s10 + $0x1f8] sm:$0xff]
    %v2264 = vld [vmem:[%s10 + $0x200] sm:$0xff]
    %v2265 = vld [vmem:[%s10 + $0x208] sm:$0xff]
    %v2266 = vld [vmem:[%s10 + $0x210] sm:$0xff]
    %v2267 = vld [vmem:[%s10 + $0x218] sm:$0xff]
    %v2268 = vld [vmem:[%s10 + $0x220] sm:$0xff]
    %v2269 = vld [vmem:[%s10 + $0x228] sm:$0xff]
    %v2270 = vld [vmem:[%s10 + $0x230] sm:$0xff]
    %v2271 = vld [vmem:[%s10 + $0x238] sm:$0xff]
    %v2272 = vld [vmem:[%s10 + $0x240] sm:$0xff]
    %v2273 = vld [vmem:[%s10 + $0x248] sm:$0xff]
    %v2274 = vld [vmem:[%s10 + $0x250] sm:$0xff]
    %v2275 = vld [vmem:[%s10 + $0x258] sm:$0xff]
    %v2276 = vld [vmem:[%s10 + $0x260] sm:$0xff]
    %v2277 = vld [vmem:[%s10 + $0x268] sm:$0xff]
    %v2278 = vld [vmem:[%s10 + $0x270] sm:$0xff]
    %v2279 = vld [vmem:[%s10 + $0x278] sm:$0xff]
    %v2280 = vld [vmem:[%s10 + $0x280] sm:$0xff]
    %v2281 = vld [vmem:[%s10 + $0x288] sm:$0xff]
    %v2282 = vld [vmem:[%s10 + $0x290] sm:$0xff]
    %v2283 = vld [vmem:[%s10 + $0x298] sm:$0xff]
    %v2284 = vld [vmem:[%s10 + $0x2a0] sm:$0xff]
    %v2285 = vld [vmem:[%s10 + $0x2a8] sm:$0xff]
    %v2286 = vld [vmem:[%s10 + $0x2b0] sm:$0xff]
    %v2287 = vld [vmem:[%s10 + $0x2b8] sm:$0xff]
    %v2288 = vld [vmem:[%s10 + $0x2c0] sm:$0xff]
    %v2289 = vld [vmem:[%s10 + $0x2c8] sm:$0xff]
    %v2290 = vld [vmem:[%s10 + $0x2d0] sm:$0xff]
    %v2291 = vld [vmem:[%s10 + $0x2d8] sm:$0xff]
    %v2292 = vld [vmem:[%s10 + $0x2e0] sm:$0xff]
    %v2293 = vld [vmem:[%s10 + $0x2e8] sm:$0xff]
    %v2294 = vld [vmem:[%s10 + $0x2f0] sm:$0xff]
    %v2295 = vld [vmem:[%s10 + $0x2f8] sm:$0xff]
    %v2296 = vld [vmem:[%s10 + $0x300] sm:$0xff]
    %v2297 = vld [vmem:[%s10 + $0x308] sm:$0xff]
    %v2298 = vld [vmem:[%s10 + $0x310] sm:$0xff]
    %v2299 = vld [vmem:[%s10 + $0x318] sm:$0xff]
    %v2300 = vld [vmem:[%s10 + $0x320] sm:$0xff]
    %v2301 = vld [vmem:[%s10 + $0x328] sm:$0xff]
    %v2302 = vld [vmem:[%s10 + $0x330] sm:$0xff]
    %v2303 = vld [vmem:[%s10 + $0x338] sm:$0xff]
    %v2304 = vld [vmem:[%s10 + $0x340] sm:$0xff]
    %v2305 = vld [vmem:[%s10 + $0x348] sm:$0xff]
    %v2306 = vld [vmem:[%s10 + $0x350] sm:$0xff]
    %v2307 = vld [vmem:[%s10 + $0x358] sm:$0xff]
    %v2308 = vld [vmem:[%s10 + $0x360] sm:$0xff]
    %v2309 = vld [vmem:[%s10 + $0x368] sm:$0xff]
    %v2310 = vld [vmem:[%s10 + $0x370] sm:$0xff]
    %v2311 = vld [vmem:[%s10 + $0x378] sm:$0xff]
    %v2312 = vld [vmem:[%s10 + $0x380] sm:$0xff]
    %v2313 = vld [vmem:[%s10 + $0x388] sm:$0xff]
    %v2314 = vld [vmem:[%s10 + $0x390] sm:$0xff]
    %v2315 = vld [vmem:[%s10 + $0x398] sm:$0xff]
    %v2316 = vld [vmem:[%s10 + $0x3a0] sm:$0xff]
    %v2317 = vld [vmem:[%s10 + $0x3a8] sm:$0xff]
    %v2318 = vld [vmem:[%s10 + $0x3b0] sm:$0xff]
    %v2319 = vld [vmem:[%s10 + $0x3b8] sm:$0xff]
    %v2320 = vld [vmem:[%s10 + $0x3c0] sm:$0xff]
    %v2321 = vld [vmem:[%s10 + $0x3c8] sm:$0xff]
    %v2322 = vld [vmem:[%s10 + $0x3d0] sm:$0xff]
    %v2323 = vld [vmem:[%s10 + $0x3d8] sm:$0xff]
    %v2324 = vld [vmem:[%s10 + $0x3e0] sm:$0xff]
    %v2325 = vld [vmem:[%s10 + $0x3e8] sm:$0xff]
    %v2326 = vld [vmem:[%s10 + $0x3f0] sm:$0xff]
    %v2327 = vld [vmem:[%s10 + $0x3f8] sm:$0xff]
    %v2328 = vld [vmem:[%s10 + $0x400] sm:$0xff]
    %v2329 = vld [vmem:[%s10 + $0x408] sm:$0xff]
    %v2330 = vld [vmem:[%s10 + $0x410] sm:$0xff]
    %v2331 = vld [vmem:[%s10 + $0x418] sm:$0xff]
    %v2332 = vld [vmem:[%s10 + $0x420] sm:$0xff]
    %v2333 = vld [vmem:[%s10 + $0x428] sm:$0xff]
    %v2334 = vld [vmem:[%s10 + $0x430] sm:$0xff]
    %v2335 = vld [vmem:[%s10 + $0x438] sm:$0xff]
    %v2336 = vld [vmem:[%s10 + $0x440] sm:$0xff]
    %v2337 = vld [vmem:[%s10 + $0x448] sm:$0xff]
    %v2338 = vld [vmem:[%s10 + $0x450] sm:$0xff]
    %v2339 = vld [vmem:[%s10 + $0x458] sm:$0xff]
    %v2340 = vld [vmem:[%s10 + $0x460] sm:$0xff]
    %v2341 = vld [vmem:[%s10 + $0x468] sm:$0xff]
    %v2342 = vld [vmem:[%s10 + $0x470] sm:$0xff]
    %v2343 = vld [vmem:[%s10 + $0x478] sm:$0xff]
    %v2344 = vld [vmem:[%s10 + $0x480] sm:$0xff]
    %v2345 = vld [vmem:[%s10 + $0x488] sm:$0xff]
    %v2346 = vld [vmem:[%s10 + $0x490] sm:$0xff]
    %v2347 = vld [vmem:[%s10 + $0x498] sm:$0xff]
    %v2348 = vld [vmem:[%s10 + $0x4a0] sm:$0xff]
    %v2349 = vld [vmem:[%s10 + $0x4a8] sm:$0xff]
    %v2350 = vld [vmem:[%s10 + $0x4b0] sm:$0xff]
    %v2351 = vld [vmem:[%s10 + $0x4b8] sm:$0xff]
    %v2352 = vld [vmem:[%s10 + $0x4c0] sm:$0xff]
    %v2353 = vld [vmem:[%s10 + $0x4c8] sm:$0xff]
    %v2354 = vld [vmem:[%s10 + $0x4d0] sm:$0xff]
    %v2355 = vld [vmem:[%s10 + $0x4d8] sm:$0xff]
    %v2356 = vld [vmem:[%s10 + $0x4e0] sm:$0xff]
    %v2357 = vld [vmem:[%s10 + $0x4e8] sm:$0xff]
    %v2358 = vld [vmem:[%s10 + $0x4f0] sm:$0xff]
    %v2359 = vld [vmem:[%s10 + $0x4f8] sm:$0xff]
    %v2360 = vld [vmem:[%s10 + $0x500] sm:$0xff]
    %v2361 = vld [vmem:[%s10 + $0x508] sm:$0xff]
    %v2362 = vld [vmem:[%s10 + $0x510] sm:$0xff]
    %v2363 = vld [vmem:[%s10 + $0x518] sm:$0xff]
    %v2364 = vld [vmem:[%s10 + $0x520] sm:$0xff]
    %v2365 = vld [vmem:[%s10 + $0x528] sm:$0xff]
    %v2366 = vld [vmem:[%s10 + $0x530] sm:$0xff]
    %v2367 = vld [vmem:[%s10 + $0x538] sm:$0xff]
    %v2368 = vld [vmem:[%s10 + $0x540] sm:$0xff]
    %v2369 = vld [vmem:[%s10 + $0x548] sm:$0xff]
    %v2370 = vld [vmem:[%s10 + $0x550] sm:$0xff]
    %v2371 = vld [vmem:[%s10 + $0x558] sm:$0xff]
    %v2372 = vld [vmem:[%s10 + $0x560] sm:$0xff]
    %v2373 = vld [vmem:[%s10 + $0x568] sm:$0xff]
    %v2374 = vld [vmem:[%s10 + $0x570] sm:$0xff]
    %v2375 = vld [vmem:[%s10 + $0x578] sm:$0xff]
    %v2376 = vld [vmem:[%s10 + $0x580] sm:$0xff]
    %v2377 = vld [vmem:[%s10 + $0x588] sm:$0xff]
    %v2378 = vld [vmem:[%s10 + $0x590] sm:$0xff]
    %v2379 = vld [vmem:[%s10 + $0x598] sm:$0xff]
    %v2380 = vld [vmem:[%s10 + $0x5a0] sm:$0xff]
    %v2381 = vld [vmem:[%s10 + $0x5a8] sm:$0xff]
    %v2382 = vld [vmem:[%s10 + $0x5b0] sm:$0xff]
    %v2383 = vld [vmem:[%s10 + $0x5b8] sm:$0xff]
    %v2384 = vld [vmem:[%s10 + $0x5c0] sm:$0xff]
    %v2385 = vld [vmem:[%s10 + $0x5c8] sm:$0xff]
    %v2386 = vld [vmem:[%s10 + $0x5d0] sm:$0xff]
    %v2387 = vld [vmem:[%s10 + $0x5d8] sm:$0xff]
    %v2388 = vld [vmem:[%s10 + $0x5e0] sm:$0xff]
    %v2389 = vld [vmem:[%s10 + $0x5e8] sm:$0xff]
    %v2390 = vld [vmem:[%s10 + $0x5f0] sm:$0xff]
    %v2391 = vld [vmem:[%s10 + $0x5f8] sm:$0xff]
    %v2392 = vld [vmem:[%s10 + $0x600] sm:$0xff]
    %v2393 = vld [vmem:[%s10 + $0x608] sm:$0xff]
    %v2394 = vld [vmem:[%s10 + $0x610] sm:$0xff]
    %v2395 = vld [vmem:[%s10 + $0x618] sm:$0xff]
    %v2396 = vld [vmem:[%s10 + $0x620] sm:$0xff]
    %v2397 = vld [vmem:[%s10 + $0x628] sm:$0xff]
    %v2398 = vld [vmem:[%s10 + $0x630] sm:$0xff]
    %v2399 = vld [vmem:[%s10 + $0x638] sm:$0xff]
    %v2400 = vld [vmem:[%s10 + $0x640] sm:$0xff]
    %v2401 = vld [vmem:[%s10 + $0x648] sm:$0xff]
    %v2402 = vld [vmem:[%s10 + $0x650] sm:$0xff]
    %v2403 = vld [vmem:[%s10 + $0x658] sm:$0xff]
    %v2404 = vld [vmem:[%s10 + $0x660] sm:$0xff]
    %v2405 = vld [vmem:[%s10 + $0x668] sm:$0xff]
    %v2406 = vld [vmem:[%s10 + $0x670] sm:$0xff]
    %v2407 = vld [vmem:[%s10 + $0x678] sm:$0xff]
    %v2408 = vld [vmem:[%s10 + $0x680] sm:$0xff]
    %v2409 = vld [vmem:[%s10 + $0x688] sm:$0xff]
    %v2410 = vld [vmem:[%s10 + $0x690] sm:$0xff]
    %v2411 = vld [vmem:[%s10 + $0x698] sm:$0xff]
    %v2412 = vld [vmem:[%s10 + $0x6a0] sm:$0xff]
    %v2413 = vld [vmem:[%s10 + $0x6a8] sm:$0xff]
    %v2414 = vld [vmem:[%s10 + $0x6b0] sm:$0xff]
    %v2415 = vld [vmem:[%s10 + $0x6b8] sm:$0xff]
    %v2416 = vld [vmem:[%s10 + $0x6c0] sm:$0xff]
    %v2417 = vld [vmem:[%s10 + $0x6c8] sm:$0xff]
    %v2418 = vld [vmem:[%s10 + $0x6d0] sm:$0xff]
    %v2419 = vld [vmem:[%s10 + $0x6d8] sm:$0xff]
    %v2420 = vld [vmem:[%s10 + $0x6e0] sm:$0xff]
    %v2421 = vld [vmem:[%s10 + $0x6e8] sm:$0xff]
    %v2422 = vld [vmem:[%s10 + $0x6f0] sm:$0xff]
    %v2423 = vld [vmem:[%s10 + $0x6f8] sm:$0xff]
    %v2424 = vld [vmem:[%s10 + $0x700] sm:$0xff]
    %v2425 = vld [vmem:[%s10 + $0x708] sm:$0xff]
    %v2426 = vld [vmem:[%s10 + $0x710] sm:$0xff]
    %v2427 = vld [vmem:[%s10 + $0x718] sm:$0xff]
    %v2428 = vld [vmem:[%s10 + $0x720] sm:$0xff]
    %v2429 = vld [vmem:[%s10 + $0x728] sm:$0xff]
    %v2430 = vld [vmem:[%s10 + $0x730] sm:$0xff]
    %v2431 = vld [vmem:[%s10 + $0x738] sm:$0xff]
    %v2432 = vld [vmem:[%s10 + $0x740] sm:$0xff]
    %v2433 = vld [vmem:[%s10 + $0x748] sm:$0xff]
    %v2434 = vld [vmem:[%s10 + $0x750] sm:$0xff]
    %v2435 = vld [vmem:[%s10 + $0x758] sm:$0xff]
    %v2436 = vld [vmem:[%s10 + $0x760] sm:$0xff]
    %v2437 = vld [vmem:[%s10 + $0x768] sm:$0xff]
    %v2438 = vld [vmem:[%s10 + $0x770] sm:$0xff]
    %v2439 = vld [vmem:[%s10 + $0x778] sm:$0xff]
    %v2440 = vld [vmem:[%s10 + $0x780] sm:$0xff]
    %v2441 = vld [vmem:[%s10 + $0x788] sm:$0xff]
    %v2442 = vld [vmem:[%s10 + $0x790] sm:$0xff]
    %v2443 = vld [vmem:[%s10 + $0x798] sm:$0xff]
    %v2444 = vld [vmem:[%s10 + $0x7a0] sm:$0xff]
    %v2445 = vld [vmem:[%s10 + $0x7a8] sm:$0xff]
    %v2446 = vld [vmem:[%s10 + $0x7b0] sm:$0xff]
    %v2447 = vld [vmem:[%s10 + $0x7b8] sm:$0xff]
    %v2448 = vld [vmem:[%s10 + $0x7c0] sm:$0xff]
    %v2449 = vld [vmem:[%s10 + $0x7c8] sm:$0xff]
    %v2450 = vld [vmem:[%s10 + $0x7d0] sm:$0xff]
    %v2451 = vld [vmem:[%s10 + $0x7d8] sm:$0xff]
    %v2452 = vld [vmem:[%s10 + $0x7e0] sm:$0xff]
    %v2453 = vld [vmem:[%s10 + $0x7e8] sm:$0xff]
    %v2454 = vld [vmem:[%s10 + $0x7f0] sm:$0xff]
    %v2455 = vld [vmem:[%s10 + $0x7f8] sm:$0xff]
    %v2456 = vunpack.c.l.bf16 %v2200
    %v2457 = vunpack.c.h.bf16 %v2200
    %v2458 = vunpack.c.l.bf16 %v2201
    %v2459 = vunpack.c.h.bf16 %v2201
    %v2460 = vunpack.c.l.bf16 %v2202
    %v2461 = vunpack.c.h.bf16 %v2202
    %v2462 = vunpack.c.l.bf16 %v2203
    %v2463 = vunpack.c.h.bf16 %v2203
    %v2464 = vunpack.c.l.bf16 %v2204
    %v2465 = vunpack.c.h.bf16 %v2204
    %v2466 = vunpack.c.l.bf16 %v2205
    %v2467 = vunpack.c.h.bf16 %v2205
    %v2468 = vunpack.c.l.bf16 %v2206
    %v2469 = vunpack.c.h.bf16 %v2206
    %v2470 = vunpack.c.l.bf16 %v2207
    %v2471 = vunpack.c.h.bf16 %v2207
    %v2472 = vunpack.c.l.bf16 %v2208
    %v2473 = vunpack.c.h.bf16 %v2208
    %v2474 = vunpack.c.l.bf16 %v2209
    %v2475 = vunpack.c.h.bf16 %v2209
    %v2476 = vunpack.c.l.bf16 %v2210
    %v2477 = vunpack.c.h.bf16 %v2210
    %v2478 = vunpack.c.l.bf16 %v2211
    %v2479 = vunpack.c.h.bf16 %v2211
    %v2480 = vunpack.c.l.bf16 %v2212
    %v2481 = vunpack.c.h.bf16 %v2212
    %v2482 = vunpack.c.l.bf16 %v2213
    %v2483 = vunpack.c.h.bf16 %v2213
    %v2484 = vunpack.c.l.bf16 %v2214
    %v2485 = vunpack.c.h.bf16 %v2214
    %v2486 = vunpack.c.l.bf16 %v2215
    %v2487 = vunpack.c.h.bf16 %v2215
    %v2488 = vunpack.c.l.bf16 %v2216
    %v2489 = vunpack.c.h.bf16 %v2216
    %v2490 = vunpack.c.l.bf16 %v2217
    %v2491 = vunpack.c.h.bf16 %v2217
    %v2492 = vunpack.c.l.bf16 %v2218
    %v2493 = vunpack.c.h.bf16 %v2218
    %v2494 = vunpack.c.l.bf16 %v2219
    %v2495 = vunpack.c.h.bf16 %v2219
    %v2496 = vunpack.c.l.bf16 %v2220
    %v2497 = vunpack.c.h.bf16 %v2220
    %v2498 = vunpack.c.l.bf16 %v2221
    %v2499 = vunpack.c.h.bf16 %v2221
    %v2500 = vunpack.c.l.bf16 %v2222
    %v2501 = vunpack.c.h.bf16 %v2222
    %v2502 = vunpack.c.l.bf16 %v2223
    %v2503 = vunpack.c.h.bf16 %v2223
    %v2504 = vunpack.c.l.bf16 %v2224
    %v2505 = vunpack.c.h.bf16 %v2224
    %v2506 = vunpack.c.l.bf16 %v2225
    %v2507 = vunpack.c.h.bf16 %v2225
    %v2508 = vunpack.c.l.bf16 %v2226
    %v2509 = vunpack.c.h.bf16 %v2226
    %v2510 = vunpack.c.l.bf16 %v2227
    %v2511 = vunpack.c.h.bf16 %v2227
    %v2512 = vunpack.c.l.bf16 %v2228
    %v2513 = vunpack.c.h.bf16 %v2228
    %v2514 = vunpack.c.l.bf16 %v2229
    %v2515 = vunpack.c.h.bf16 %v2229
    %v2516 = vunpack.c.l.bf16 %v2230
    %v2517 = vunpack.c.h.bf16 %v2230
    %v2518 = vunpack.c.l.bf16 %v2231
    %v2519 = vunpack.c.h.bf16 %v2231
    %v2520 = vunpack.c.l.bf16 %v2232
    %v2521 = vunpack.c.h.bf16 %v2232
    %v2522 = vunpack.c.l.bf16 %v2233
    %v2523 = vunpack.c.h.bf16 %v2233
    %v2524 = vunpack.c.l.bf16 %v2234
    %v2525 = vunpack.c.h.bf16 %v2234
    %v2526 = vunpack.c.l.bf16 %v2235
    %v2527 = vunpack.c.h.bf16 %v2235
    %v2528 = vunpack.c.l.bf16 %v2236
    %v2529 = vunpack.c.h.bf16 %v2236
    %v2530 = vunpack.c.l.bf16 %v2237
    %v2531 = vunpack.c.h.bf16 %v2237
    %v2532 = vunpack.c.l.bf16 %v2238
    %v2533 = vunpack.c.h.bf16 %v2238
    %v2534 = vunpack.c.l.bf16 %v2239
    %v2535 = vunpack.c.h.bf16 %v2239
    %v2536 = vunpack.c.l.bf16 %v2240
    %v2537 = vunpack.c.h.bf16 %v2240
    %v2538 = vunpack.c.l.bf16 %v2241
    %v2539 = vunpack.c.h.bf16 %v2241
    %v2540 = vunpack.c.l.bf16 %v2242
    %v2541 = vunpack.c.h.bf16 %v2242
    %v2542 = vunpack.c.l.bf16 %v2243
    %v2543 = vunpack.c.h.bf16 %v2243
    %v2544 = vunpack.c.l.bf16 %v2244
    %v2545 = vunpack.c.h.bf16 %v2244
    %v2546 = vunpack.c.l.bf16 %v2245
    %v2547 = vunpack.c.h.bf16 %v2245
    %v2548 = vunpack.c.l.bf16 %v2246
    %v2549 = vunpack.c.h.bf16 %v2246
    %v2550 = vunpack.c.l.bf16 %v2247
    %v2551 = vunpack.c.h.bf16 %v2247
    %v2552 = vunpack.c.l.bf16 %v2248
    %v2553 = vunpack.c.h.bf16 %v2248
    %v2554 = vunpack.c.l.bf16 %v2249
    %v2555 = vunpack.c.h.bf16 %v2249
    %v2556 = vunpack.c.l.bf16 %v2250
    %v2557 = vunpack.c.h.bf16 %v2250
    %v2558 = vunpack.c.l.bf16 %v2251
    %v2559 = vunpack.c.h.bf16 %v2251
    %v2560 = vunpack.c.l.bf16 %v2252
    %v2561 = vunpack.c.h.bf16 %v2252
    %v2562 = vunpack.c.l.bf16 %v2253
    %v2563 = vunpack.c.h.bf16 %v2253
    %v2564 = vunpack.c.l.bf16 %v2254
    %v2565 = vunpack.c.h.bf16 %v2254
    %v2566 = vunpack.c.l.bf16 %v2255
    %v2567 = vunpack.c.h.bf16 %v2255
    %v2568 = vunpack.c.l.bf16 %v2256
    %v2569 = vunpack.c.h.bf16 %v2256
    %v2570 = vunpack.c.l.bf16 %v2257
    %v2571 = vunpack.c.h.bf16 %v2257
    %v2572 = vunpack.c.l.bf16 %v2258
    %v2573 = vunpack.c.h.bf16 %v2258
    %v2574 = vunpack.c.l.bf16 %v2259
    %v2575 = vunpack.c.h.bf16 %v2259
    %v2576 = vunpack.c.l.bf16 %v2260
    %v2577 = vunpack.c.h.bf16 %v2260
    %v2578 = vunpack.c.l.bf16 %v2261
    %v2579 = vunpack.c.h.bf16 %v2261
    %v2580 = vunpack.c.l.bf16 %v2262
    %v2581 = vunpack.c.h.bf16 %v2262
    %v2582 = vunpack.c.l.bf16 %v2263
    %v2583 = vunpack.c.h.bf16 %v2263
    %v2584 = vunpack.c.l.bf16 %v2264
    %v2585 = vunpack.c.h.bf16 %v2264
    %v2586 = vunpack.c.l.bf16 %v2265
    %v2587 = vunpack.c.h.bf16 %v2265
    %v2588 = vunpack.c.l.bf16 %v2266
    %v2589 = vunpack.c.h.bf16 %v2266
    %v2590 = vunpack.c.l.bf16 %v2267
    %v2591 = vunpack.c.h.bf16 %v2267
    %v2592 = vunpack.c.l.bf16 %v2268
    %v2593 = vunpack.c.h.bf16 %v2268
    %v2594 = vunpack.c.l.bf16 %v2269
    %v2595 = vunpack.c.h.bf16 %v2269
    %v2596 = vunpack.c.l.bf16 %v2270
    %v2597 = vunpack.c.h.bf16 %v2270
    %v2598 = vunpack.c.l.bf16 %v2271
    %v2599 = vunpack.c.h.bf16 %v2271
    %v2600 = vunpack.c.l.bf16 %v2272
    %v2601 = vunpack.c.h.bf16 %v2272
    %v2602 = vunpack.c.l.bf16 %v2273
    %v2603 = vunpack.c.h.bf16 %v2273
    %v2604 = vunpack.c.l.bf16 %v2274
    %v2605 = vunpack.c.h.bf16 %v2274
    %v2606 = vunpack.c.l.bf16 %v2275
    %v2607 = vunpack.c.h.bf16 %v2275
    %v2608 = vunpack.c.l.bf16 %v2276
    %v2609 = vunpack.c.h.bf16 %v2276
    %v2610 = vunpack.c.l.bf16 %v2277
    %v2611 = vunpack.c.h.bf16 %v2277
    %v2612 = vunpack.c.l.bf16 %v2278
    %v2613 = vunpack.c.h.bf16 %v2278
    %v2614 = vunpack.c.l.bf16 %v2279
    %v2615 = vunpack.c.h.bf16 %v2279
    %v2616 = vunpack.c.l.bf16 %v2280
    %v2617 = vunpack.c.h.bf16 %v2280
    %v2618 = vunpack.c.l.bf16 %v2281
    %v2619 = vunpack.c.h.bf16 %v2281
    %v2620 = vunpack.c.l.bf16 %v2282
    %v2621 = vunpack.c.h.bf16 %v2282
    %v2622 = vunpack.c.l.bf16 %v2283
    %v2623 = vunpack.c.h.bf16 %v2283
    %v2624 = vunpack.c.l.bf16 %v2284
    %v2625 = vunpack.c.h.bf16 %v2284
    %v2626 = vunpack.c.l.bf16 %v2285
    %v2627 = vunpack.c.h.bf16 %v2285
    %v2628 = vunpack.c.l.bf16 %v2286
    %v2629 = vunpack.c.h.bf16 %v2286
    %v2630 = vunpack.c.l.bf16 %v2287
    %v2631 = vunpack.c.h.bf16 %v2287
    %v2632 = vunpack.c.l.bf16 %v2288
    %v2633 = vunpack.c.h.bf16 %v2288
    %v2634 = vunpack.c.l.bf16 %v2289
    %v2635 = vunpack.c.h.bf16 %v2289
    %v2636 = vunpack.c.l.bf16 %v2290
    %v2637 = vunpack.c.h.bf16 %v2290
    %v2638 = vunpack.c.l.bf16 %v2291
    %v2639 = vunpack.c.h.bf16 %v2291
    %v2640 = vunpack.c.l.bf16 %v2292
    %v2641 = vunpack.c.h.bf16 %v2292
    %v2642 = vunpack.c.l.bf16 %v2293
    %v2643 = vunpack.c.h.bf16 %v2293
    %v2644 = vunpack.c.l.bf16 %v2294
    %v2645 = vunpack.c.h.bf16 %v2294
    %v2646 = vunpack.c.l.bf16 %v2295
    %v2647 = vunpack.c.h.bf16 %v2295
    %v2648 = vunpack.c.l.bf16 %v2296
    %v2649 = vunpack.c.h.bf16 %v2296
    %v2650 = vunpack.c.l.bf16 %v2297
    %v2651 = vunpack.c.h.bf16 %v2297
    %v2652 = vunpack.c.l.bf16 %v2298
    %v2653 = vunpack.c.h.bf16 %v2298
    %v2654 = vunpack.c.l.bf16 %v2299
    %v2655 = vunpack.c.h.bf16 %v2299
    %v2656 = vunpack.c.l.bf16 %v2300
    %v2657 = vunpack.c.h.bf16 %v2300
    %v2658 = vunpack.c.l.bf16 %v2301
    %v2659 = vunpack.c.h.bf16 %v2301
    %v2660 = vunpack.c.l.bf16 %v2302
    %v2661 = vunpack.c.h.bf16 %v2302
    %v2662 = vunpack.c.l.bf16 %v2303
    %v2663 = vunpack.c.h.bf16 %v2303
    %v2664 = vunpack.c.l.bf16 %v2304
    %v2665 = vunpack.c.h.bf16 %v2304
    %v2666 = vunpack.c.l.bf16 %v2305
    %v2667 = vunpack.c.h.bf16 %v2305
    %v2668 = vunpack.c.l.bf16 %v2306
    %v2669 = vunpack.c.h.bf16 %v2306
    %v2670 = vunpack.c.l.bf16 %v2307
    %v2671 = vunpack.c.h.bf16 %v2307
    %v2672 = vunpack.c.l.bf16 %v2308
    %v2673 = vunpack.c.h.bf16 %v2308
    %v2674 = vunpack.c.l.bf16 %v2309
    %v2675 = vunpack.c.h.bf16 %v2309
    %v2676 = vunpack.c.l.bf16 %v2310
    %v2677 = vunpack.c.h.bf16 %v2310
    %v2678 = vunpack.c.l.bf16 %v2311
    %v2679 = vunpack.c.h.bf16 %v2311
    %v2680 = vunpack.c.l.bf16 %v2312
    %v2681 = vunpack.c.h.bf16 %v2312
    %v2682 = vunpack.c.l.bf16 %v2313
    %v2683 = vunpack.c.h.bf16 %v2313
    %v2684 = vunpack.c.l.bf16 %v2314
    %v2685 = vunpack.c.h.bf16 %v2314
    %v2686 = vunpack.c.l.bf16 %v2315
    %v2687 = vunpack.c.h.bf16 %v2315
    %v2688 = vunpack.c.l.bf16 %v2316
    %v2689 = vunpack.c.h.bf16 %v2316
    %v2690 = vunpack.c.l.bf16 %v2317
    %v2691 = vunpack.c.h.bf16 %v2317
    %v2692 = vunpack.c.l.bf16 %v2318
    %v2693 = vunpack.c.h.bf16 %v2318
    %v2694 = vunpack.c.l.bf16 %v2319
    %v2695 = vunpack.c.h.bf16 %v2319
    %v2696 = vunpack.c.l.bf16 %v2320
    %v2697 = vunpack.c.h.bf16 %v2320
    %v2698 = vunpack.c.l.bf16 %v2321
    %v2699 = vunpack.c.h.bf16 %v2321
    %v2700 = vunpack.c.l.bf16 %v2322
    %v2701 = vunpack.c.h.bf16 %v2322
    %v2702 = vunpack.c.l.bf16 %v2323
    %v2703 = vunpack.c.h.bf16 %v2323
    %v2704 = vunpack.c.l.bf16 %v2324
    %v2705 = vunpack.c.h.bf16 %v2324
    %v2706 = vunpack.c.l.bf16 %v2325
    %v2707 = vunpack.c.h.bf16 %v2325
    %v2708 = vunpack.c.l.bf16 %v2326
    %v2709 = vunpack.c.h.bf16 %v2326
    %v2710 = vunpack.c.l.bf16 %v2327
    %v2711 = vunpack.c.h.bf16 %v2327
    %v2712 = vunpack.c.l.bf16 %v2328
    %v2713 = vunpack.c.h.bf16 %v2328
    %v2714 = vunpack.c.l.bf16 %v2329
    %v2715 = vunpack.c.h.bf16 %v2329
    %v2716 = vunpack.c.l.bf16 %v2330
    %v2717 = vunpack.c.h.bf16 %v2330
    %v2718 = vunpack.c.l.bf16 %v2331
    %v2719 = vunpack.c.h.bf16 %v2331
    %v2720 = vunpack.c.l.bf16 %v2332
    %v2721 = vunpack.c.h.bf16 %v2332
    %v2722 = vunpack.c.l.bf16 %v2333
    %v2723 = vunpack.c.h.bf16 %v2333
    %v2724 = vunpack.c.l.bf16 %v2334
    %v2725 = vunpack.c.h.bf16 %v2334
    %v2726 = vunpack.c.l.bf16 %v2335
    %v2727 = vunpack.c.h.bf16 %v2335
    %v2728 = vunpack.c.l.bf16 %v2336
    %v2729 = vunpack.c.h.bf16 %v2336
    %v2730 = vunpack.c.l.bf16 %v2337
    %v2731 = vunpack.c.h.bf16 %v2337
    %v2732 = vunpack.c.l.bf16 %v2338
    %v2733 = vunpack.c.h.bf16 %v2338
    %v2734 = vunpack.c.l.bf16 %v2339
    %v2735 = vunpack.c.h.bf16 %v2339
    %v2736 = vunpack.c.l.bf16 %v2340
    %v2737 = vunpack.c.h.bf16 %v2340
    %v2738 = vunpack.c.l.bf16 %v2341
    %v2739 = vunpack.c.h.bf16 %v2341
    %v2740 = vunpack.c.l.bf16 %v2342
    %v2741 = vunpack.c.h.bf16 %v2342
    %v2742 = vunpack.c.l.bf16 %v2343
    %v2743 = vunpack.c.h.bf16 %v2343
    %v2744 = vunpack.c.l.bf16 %v2344
    %v2745 = vunpack.c.h.bf16 %v2344
    %v2746 = vunpack.c.l.bf16 %v2345
    %v2747 = vunpack.c.h.bf16 %v2345
    %v2748 = vunpack.c.l.bf16 %v2346
    %v2749 = vunpack.c.h.bf16 %v2346
    %v2750 = vunpack.c.l.bf16 %v2347
    %v2751 = vunpack.c.h.bf16 %v2347
    %v2752 = vunpack.c.l.bf16 %v2348
    %v2753 = vunpack.c.h.bf16 %v2348
    %v2754 = vunpack.c.l.bf16 %v2349
    %v2755 = vunpack.c.h.bf16 %v2349
    %v2756 = vunpack.c.l.bf16 %v2350
    %v2757 = vunpack.c.h.bf16 %v2350
    %v2758 = vunpack.c.l.bf16 %v2351
    %v2759 = vunpack.c.h.bf16 %v2351
    %v2760 = vunpack.c.l.bf16 %v2352
    %v2761 = vunpack.c.h.bf16 %v2352
    %v2762 = vunpack.c.l.bf16 %v2353
    %v2763 = vunpack.c.h.bf16 %v2353
    %v2764 = vunpack.c.l.bf16 %v2354
    %v2765 = vunpack.c.h.bf16 %v2354
    %v2766 = vunpack.c.l.bf16 %v2355
    %v2767 = vunpack.c.h.bf16 %v2355
    %v2768 = vunpack.c.l.bf16 %v2356
    %v2769 = vunpack.c.h.bf16 %v2356
    %v2770 = vunpack.c.l.bf16 %v2357
    %v2771 = vunpack.c.h.bf16 %v2357
    %v2772 = vunpack.c.l.bf16 %v2358
    %v2773 = vunpack.c.h.bf16 %v2358
    %v2774 = vunpack.c.l.bf16 %v2359
    %v2775 = vunpack.c.h.bf16 %v2359
    %v2776 = vunpack.c.l.bf16 %v2360
    %v2777 = vunpack.c.h.bf16 %v2360
    %v2778 = vunpack.c.l.bf16 %v2361
    %v2779 = vunpack.c.h.bf16 %v2361
    %v2780 = vunpack.c.l.bf16 %v2362
    %v2781 = vunpack.c.h.bf16 %v2362
    %v2782 = vunpack.c.l.bf16 %v2363
    %v2783 = vunpack.c.h.bf16 %v2363
    %v2784 = vunpack.c.l.bf16 %v2364
    %v2785 = vunpack.c.h.bf16 %v2364
    %v2786 = vunpack.c.l.bf16 %v2365
    %v2787 = vunpack.c.h.bf16 %v2365
    %v2788 = vunpack.c.l.bf16 %v2366
    %v2789 = vunpack.c.h.bf16 %v2366
    %v2790 = vunpack.c.l.bf16 %v2367
    %v2791 = vunpack.c.h.bf16 %v2367
    %v2792 = vunpack.c.l.bf16 %v2368
    %v2793 = vunpack.c.h.bf16 %v2368
    %v2794 = vunpack.c.l.bf16 %v2369
    %v2795 = vunpack.c.h.bf16 %v2369
    %v2796 = vunpack.c.l.bf16 %v2370
    %v2797 = vunpack.c.h.bf16 %v2370
    %v2798 = vunpack.c.l.bf16 %v2371
    %v2799 = vunpack.c.h.bf16 %v2371
    %v2800 = vunpack.c.l.bf16 %v2372
    %v2801 = vunpack.c.h.bf16 %v2372
    %v2802 = vunpack.c.l.bf16 %v2373
    %v2803 = vunpack.c.h.bf16 %v2373
    %v2804 = vunpack.c.l.bf16 %v2374
    %v2805 = vunpack.c.h.bf16 %v2374
    %v2806 = vunpack.c.l.bf16 %v2375
    %v2807 = vunpack.c.h.bf16 %v2375
    %v2808 = vunpack.c.l.bf16 %v2376
    %v2809 = vunpack.c.h.bf16 %v2376
    %v2810 = vunpack.c.l.bf16 %v2377
    %v2811 = vunpack.c.h.bf16 %v2377
    %v2812 = vunpack.c.l.bf16 %v2378
    %v2813 = vunpack.c.h.bf16 %v2378
    %v2814 = vunpack.c.l.bf16 %v2379
    %v2815 = vunpack.c.h.bf16 %v2379
    %v2816 = vunpack.c.l.bf16 %v2380
    %v2817 = vunpack.c.h.bf16 %v2380
    %v2818 = vunpack.c.l.bf16 %v2381
    %v2819 = vunpack.c.h.bf16 %v2381
    %v2820 = vunpack.c.l.bf16 %v2382
    %v2821 = vunpack.c.h.bf16 %v2382
    %v2822 = vunpack.c.l.bf16 %v2383
    %v2823 = vunpack.c.h.bf16 %v2383
    %v2824 = vunpack.c.l.bf16 %v2384
    %v2825 = vunpack.c.h.bf16 %v2384
    %v2826 = vunpack.c.l.bf16 %v2385
    %v2827 = vunpack.c.h.bf16 %v2385
    %v2828 = vunpack.c.l.bf16 %v2386
    %v2829 = vunpack.c.h.bf16 %v2386
    %v2830 = vunpack.c.l.bf16 %v2387
    %v2831 = vunpack.c.h.bf16 %v2387
    %v2832 = vunpack.c.l.bf16 %v2388
    %v2833 = vunpack.c.h.bf16 %v2388
    %v2834 = vunpack.c.l.bf16 %v2389
    %v2835 = vunpack.c.h.bf16 %v2389
    %v2836 = vunpack.c.l.bf16 %v2390
    %v2837 = vunpack.c.h.bf16 %v2390
    %v2838 = vunpack.c.l.bf16 %v2391
    %v2839 = vunpack.c.h.bf16 %v2391
    %v2840 = vunpack.c.l.bf16 %v2392
    %v2841 = vunpack.c.h.bf16 %v2392
    %v2842 = vunpack.c.l.bf16 %v2393
    %v2843 = vunpack.c.h.bf16 %v2393
    %v2844 = vunpack.c.l.bf16 %v2394
    %v2845 = vunpack.c.h.bf16 %v2394
    %v2846 = vunpack.c.l.bf16 %v2395
    %v2847 = vunpack.c.h.bf16 %v2395
    %v2848 = vunpack.c.l.bf16 %v2396
    %v2849 = vunpack.c.h.bf16 %v2396
    %v2850 = vunpack.c.l.bf16 %v2397
    %v2851 = vunpack.c.h.bf16 %v2397
    %v2852 = vunpack.c.l.bf16 %v2398
    %v2853 = vunpack.c.h.bf16 %v2398
    %v2854 = vunpack.c.l.bf16 %v2399
    %v2855 = vunpack.c.h.bf16 %v2399
    %v2856 = vunpack.c.l.bf16 %v2400
    %v2857 = vunpack.c.h.bf16 %v2400
    %v2858 = vunpack.c.l.bf16 %v2401
    %v2859 = vunpack.c.h.bf16 %v2401
    %v2860 = vunpack.c.l.bf16 %v2402
    %v2861 = vunpack.c.h.bf16 %v2402
    %v2862 = vunpack.c.l.bf16 %v2403
    %v2863 = vunpack.c.h.bf16 %v2403
    %v2864 = vunpack.c.l.bf16 %v2404
    %v2865 = vunpack.c.h.bf16 %v2404
    %v2866 = vunpack.c.l.bf16 %v2405
    %v2867 = vunpack.c.h.bf16 %v2405
    %v2868 = vunpack.c.l.bf16 %v2406
    %v2869 = vunpack.c.h.bf16 %v2406
    %v2870 = vunpack.c.l.bf16 %v2407
    %v2871 = vunpack.c.h.bf16 %v2407
    %v2872 = vunpack.c.l.bf16 %v2408
    %v2873 = vunpack.c.h.bf16 %v2408
    %v2874 = vunpack.c.l.bf16 %v2409
    %v2875 = vunpack.c.h.bf16 %v2409
    %v2876 = vunpack.c.l.bf16 %v2410
    %v2877 = vunpack.c.h.bf16 %v2410
    %v2878 = vunpack.c.l.bf16 %v2411
    %v2879 = vunpack.c.h.bf16 %v2411
    %v2880 = vunpack.c.l.bf16 %v2412
    %v2881 = vunpack.c.h.bf16 %v2412
    %v2882 = vunpack.c.l.bf16 %v2413
    %v2883 = vunpack.c.h.bf16 %v2413
    %v2884 = vunpack.c.l.bf16 %v2414
    %v2885 = vunpack.c.h.bf16 %v2414
    %v2886 = vunpack.c.l.bf16 %v2415
    %v2887 = vunpack.c.h.bf16 %v2415
    %v2888 = vunpack.c.l.bf16 %v2416
    %v2889 = vunpack.c.h.bf16 %v2416
    %v2890 = vunpack.c.l.bf16 %v2417
    %v2891 = vunpack.c.h.bf16 %v2417
    %v2892 = vunpack.c.l.bf16 %v2418
    %v2893 = vunpack.c.h.bf16 %v2418
    %v2894 = vunpack.c.l.bf16 %v2419
    %v2895 = vunpack.c.h.bf16 %v2419
    %v2896 = vunpack.c.l.bf16 %v2420
    %v2897 = vunpack.c.h.bf16 %v2420
    %v2898 = vunpack.c.l.bf16 %v2421
    %v2899 = vunpack.c.h.bf16 %v2421
    %v2900 = vunpack.c.l.bf16 %v2422
    %v2901 = vunpack.c.h.bf16 %v2422
    %v2902 = vunpack.c.l.bf16 %v2423
    %v2903 = vunpack.c.h.bf16 %v2423
    %v2904 = vunpack.c.l.bf16 %v2424
    %v2905 = vunpack.c.h.bf16 %v2424
    %v2906 = vunpack.c.l.bf16 %v2425
    %v2907 = vunpack.c.h.bf16 %v2425
    %v2908 = vunpack.c.l.bf16 %v2426
    %v2909 = vunpack.c.h.bf16 %v2426
    %v2910 = vunpack.c.l.bf16 %v2427
    %v2911 = vunpack.c.h.bf16 %v2427
    %v2912 = vunpack.c.l.bf16 %v2428
    %v2913 = vunpack.c.h.bf16 %v2428
    %v2914 = vunpack.c.l.bf16 %v2429
    %v2915 = vunpack.c.h.bf16 %v2429
    %v2916 = vunpack.c.l.bf16 %v2430
    %v2917 = vunpack.c.h.bf16 %v2430
    %v2918 = vunpack.c.l.bf16 %v2431
    %v2919 = vunpack.c.h.bf16 %v2431
    %v2920 = vunpack.c.l.bf16 %v2432
    %v2921 = vunpack.c.h.bf16 %v2432
    %v2922 = vunpack.c.l.bf16 %v2433
    %v2923 = vunpack.c.h.bf16 %v2433
    %v2924 = vunpack.c.l.bf16 %v2434
    %v2925 = vunpack.c.h.bf16 %v2434
    %v2926 = vunpack.c.l.bf16 %v2435
    %v2927 = vunpack.c.h.bf16 %v2435
    %v2928 = vunpack.c.l.bf16 %v2436
    %v2929 = vunpack.c.h.bf16 %v2436
    %v2930 = vunpack.c.l.bf16 %v2437
    %v2931 = vunpack.c.h.bf16 %v2437
    %v2932 = vunpack.c.l.bf16 %v2438
    %v2933 = vunpack.c.h.bf16 %v2438
    %v2934 = vunpack.c.l.bf16 %v2439
    %v2935 = vunpack.c.h.bf16 %v2439
    %v2936 = vunpack.c.l.bf16 %v2440
    %v2937 = vunpack.c.h.bf16 %v2440
    %v2938 = vunpack.c.l.bf16 %v2441
    %v2939 = vunpack.c.h.bf16 %v2441
    %v2940 = vunpack.c.l.bf16 %v2442
    %v2941 = vunpack.c.h.bf16 %v2442
    %v2942 = vunpack.c.l.bf16 %v2443
    %v2943 = vunpack.c.h.bf16 %v2443
    %v2944 = vunpack.c.l.bf16 %v2444
    %v2945 = vunpack.c.h.bf16 %v2444
    %v2946 = vunpack.c.l.bf16 %v2445
    %v2947 = vunpack.c.h.bf16 %v2445
    %v2948 = vunpack.c.l.bf16 %v2446
    %v2949 = vunpack.c.h.bf16 %v2446
    %v2950 = vunpack.c.l.bf16 %v2447
    %v2951 = vunpack.c.h.bf16 %v2447
    %v2952 = vunpack.c.l.bf16 %v2448
    %v2953 = vunpack.c.h.bf16 %v2448
    %v2954 = vunpack.c.l.bf16 %v2449
    %v2955 = vunpack.c.h.bf16 %v2449
    %v2956 = vunpack.c.l.bf16 %v2450
    %v2957 = vunpack.c.h.bf16 %v2450
    %v2958 = vunpack.c.l.bf16 %v2451
    %v2959 = vunpack.c.h.bf16 %v2451
    %v2960 = vunpack.c.l.bf16 %v2452
    %v2961 = vunpack.c.h.bf16 %v2452
    %v2962 = vunpack.c.l.bf16 %v2453
    %v2963 = vunpack.c.h.bf16 %v2453
    %v2964 = vunpack.c.l.bf16 %v2454
    %v2965 = vunpack.c.h.bf16 %v2454
    %v2966 = vunpack.c.l.bf16 %v2455
    %v2967 = vunpack.c.h.bf16 %v2455
    %v2968 = vld [vmem:[%s11] sm:$0xf]
    %v2970 = vlaneseq
    %v2971 = vshrl.u32 %v2970, 7
    %v2972 = vsub.s32 0, %v2971
    %v2973 = vrot.slane %v2968, %v2972
    %v2974 = vlaneseq
    %v2975 = vshrl.u32 %v2974, 7
    %v2976 = vsub.s32 1, %v2975
    %v2977 = vrot.slane %v2968, %v2976
    %v2978 = vlaneseq
    %v2979 = vshrl.u32 %v2978, 7
    %v2980 = vsub.s32 2, %v2979
    %v2981 = vrot.slane %v2968, %v2980
    %v2982 = vlaneseq
    %v2983 = vshrl.u32 %v2982, 7
    %v2984 = vsub.s32 3, %v2983
    %v2985 = vrot.slane %v2968, %v2984
    %2990 = vmatprep.subr.mxu0 %v2517
    %2991 = vmatpush1.msra.mxu0 %v2516
    %2992 = vmatprep.subr.mxu0 %v2513
    %2993 = vmatpush1.msra.mxu0 %v2512
    %2994 = vmatprep.subr.mxu0 %v2509
    %2995 = vmatpush1.msra.mxu0 %v2508
    %2996 = vmatprep.subr.mxu0 %v2505
    %2997 = vmatpush1.msra.mxu0 %v2504
    %2998 = vmatprep.subr.mxu0 %v2501
    %2999 = vmatpush1.msra.mxu0 %v2500
    %3000 = vmatprep.subr.mxu0 %v2497
    %3001 = vmatpush1.msra.mxu0 %v2496
    %3002 = vmatprep.subr.mxu0 %v2493
    %3003 = vmatpush1.msra.mxu0 %v2492
    %3004 = vmatprep.subr.mxu0 %v2489
    %3005 = vmatpush1.msra.mxu0 %v2488
    %3006 = vmatprep.subr.mxu0 %v2485
    %3007 = vmatpush1.msra.mxu0 %v2484
    %3008 = vmatprep.subr.mxu0 %v2481
    %3009 = vmatpush1.msra.mxu0 %v2480
    %3010 = vmatprep.subr.mxu0 %v2477
    %3011 = vmatpush1.msra.mxu0 %v2476
    %3012 = vmatprep.subr.mxu0 %v2473
    %3013 = vmatpush1.msra.mxu0 %v2472
    %3014 = vmatprep.subr.mxu0 %v2469
    %3015 = vmatpush1.msra.mxu0 %v2468
    %3016 = vmatprep.subr.mxu0 %v2465
    %3017 = vmatpush1.msra.mxu0 %v2464
    %3018 = vmatprep.subr.mxu0 %v2461
    %3019 = vmatpush1.msra.mxu0 %v2460
    %3020 = vmatprep.subr.mxu0 %v2457
    %3021 = vmatpush1.msra.mxu0 %v2456
    %3022 = vmatprep.subr.mxu0 %v2581
    %3023 = vmatpush2.msra.mxu0 %v2580
    %3024 = vmatprep.subr.mxu0 %v2577
    %3025 = vmatpush2.msra.mxu0 %v2576
    %3026 = vmatprep.subr.mxu0 %v2573
    %3027 = vmatpush2.msra.mxu0 %v2572
    %3028 = vmatprep.subr.mxu0 %v2569
    %3029 = vmatpush2.msra.mxu0 %v2568
    %3030 = vmatprep.subr.mxu0 %v2565
    %3031 = vmatpush2.msra.mxu0 %v2564
    %3032 = vmatprep.subr.mxu0 %v2561
    %3033 = vmatpush2.msra.mxu0 %v2560
    %3034 = vmatprep.subr.mxu0 %v2557
    %3035 = vmatpush2.msra.mxu0 %v2556
    %3036 = vmatprep.subr.mxu0 %v2553
    %3037 = vmatpush2.msra.mxu0 %v2552
    %3038 = vmatprep.subr.mxu0 %v2549
    %3039 = vmatpush2.msra.mxu0 %v2548
    %3040 = vmatprep.subr.mxu0 %v2545
    %3041 = vmatpush2.msra.mxu0 %v2544
    %3042 = vmatprep.subr.mxu0 %v2541
    %3043 = vmatpush2.msra.mxu0 %v2540
    %3044 = vmatprep.subr.mxu0 %v2537
    %3045 = vmatpush2.msra.mxu0 %v2536
    %3046 = vmatprep.subr.mxu0 %v2533
    %3047 = vmatpush2.msra.mxu0 %v2532
    %3048 = vmatprep.subr.mxu0 %v2529
    %3049 = vmatpush2.msra.mxu0 %v2528
    %3050 = vmatprep.subr.mxu0 %v2525
    %3051 = vmatpush2.msra.mxu0 %v2524
    %3052 = vmatprep.subr.mxu0 %v2521
    %3053 = vmatpush2.msra.mxu0 %v2520
    %3054 = vmatprep.mubr.f32.mxu0 %v2193
    %3055 = vmatmul.mubr.f32.gmra.mxu0 %v2192
    %v3056 = vpop.f32.mrf.mxu0
    %v3057 = vadd.f32 %v2973, %v3056
    %v3058 = vpop.f32.mrf.mxu0
    %v3059 = vadd.f32 %v2977, %v3058
    %3060 = vdwg.mxu0
    %3061 = vmatprep.subr.mxu0 %v2645
    %3062 = vmatpush1.msra.mxu0 %v2644
    %3063 = vmatprep.subr.mxu0 %v2641
    %3064 = vmatpush1.msra.mxu0 %v2640
    %3065 = vmatprep.subr.mxu0 %v2637
    %3066 = vmatpush1.msra.mxu0 %v2636
    %3067 = vmatprep.subr.mxu0 %v2633
    %3068 = vmatpush1.msra.mxu0 %v2632
    %3069 = vmatprep.subr.mxu0 %v2629
    %3070 = vmatpush1.msra.mxu0 %v2628
    %3071 = vmatprep.subr.mxu0 %v2625
    %3072 = vmatpush1.msra.mxu0 %v2624
    %3073 = vmatprep.subr.mxu0 %v2621
    %3074 = vmatpush1.msra.mxu0 %v2620
    %3075 = vmatprep.subr.mxu0 %v2617
    %3076 = vmatpush1.msra.mxu0 %v2616
    %3077 = vmatprep.subr.mxu0 %v2613
    %3078 = vmatpush1.msra.mxu0 %v2612
    %3079 = vmatprep.subr.mxu0 %v2609
    %3080 = vmatpush1.msra.mxu0 %v2608
    %3081 = vmatprep.subr.mxu0 %v2605
    %3082 = vmatpush1.msra.mxu0 %v2604
    %3083 = vmatprep.subr.mxu0 %v2601
    %3084 = vmatpush1.msra.mxu0 %v2600
    %3085 = vmatprep.subr.mxu0 %v2597
    %3086 = vmatpush1.msra.mxu0 %v2596
    %3087 = vmatprep.subr.mxu0 %v2593
    %3088 = vmatpush1.msra.mxu0 %v2592
    %3089 = vmatprep.subr.mxu0 %v2589
    %3090 = vmatpush1.msra.mxu0 %v2588
    %3091 = vmatprep.subr.mxu0 %v2585
    %3092 = vmatpush1.msra.mxu0 %v2584
    %3093 = vmatprep.subr.mxu0 %v2709
    %3094 = vmatpush2.msra.mxu0 %v2708
    %3095 = vmatprep.subr.mxu0 %v2705
    %3096 = vmatpush2.msra.mxu0 %v2704
    %3097 = vmatprep.subr.mxu0 %v2701
    %3098 = vmatpush2.msra.mxu0 %v2700
    %3099 = vmatprep.subr.mxu0 %v2697
    %3100 = vmatpush2.msra.mxu0 %v2696
    %3101 = vmatprep.subr.mxu0 %v2693
    %3102 = vmatpush2.msra.mxu0 %v2692
    %3103 = vmatprep.subr.mxu0 %v2689
    %3104 = vmatpush2.msra.mxu0 %v2688
    %3105 = vmatprep.subr.mxu0 %v2685
    %3106 = vmatpush2.msra.mxu0 %v2684
    %3107 = vmatprep.subr.mxu0 %v2681
    %3108 = vmatpush2.msra.mxu0 %v2680
    %3109 = vmatprep.subr.mxu0 %v2677
    %3110 = vmatpush2.msra.mxu0 %v2676
    %3111 = vmatprep.subr.mxu0 %v2673
    %3112 = vmatpush2.msra.mxu0 %v2672
    %3113 = vmatprep.subr.mxu0 %v2669
    %3114 = vmatpush2.msra.mxu0 %v2668
    %3115 = vmatprep.subr.mxu0 %v2665
    %3116 = vmatpush2.msra.mxu0 %v2664
    %3117 = vmatprep.subr.mxu0 %v2661
    %3118 = vmatpush2.msra.mxu0 %v2660
    %3119 = vmatprep.subr.mxu0 %v2657
    %3120 = vmatpush2.msra.mxu0 %v2656
    %3121 = vmatprep.subr.mxu0 %v2653
    %3122 = vmatpush2.msra.mxu0 %v2652
    %3123 = vmatprep.subr.mxu0 %v2649
    %3124 = vmatpush2.msra.mxu0 %v2648
    %3125 = vmatprep.mubr.f32.mxu0 %v2195
    %3126 = vmatmul.mubr.f32.gmra.mxu0 %v2194
    %v3127 = vpop.f32.mrf.mxu0
    %v3128 = vadd.f32 %v3057, %v3127
    %v3129 = vpop.f32.mrf.mxu0
    %v3130 = vadd.f32 %v3059, %v3129
    %3131 = vdwg.mxu0
    %3132 = vmatprep.subr.mxu0 %v2773
    %3133 = vmatpush1.msra.mxu0 %v2772
    %3134 = vmatprep.subr.mxu0 %v2769
    %3135 = vmatpush1.msra.mxu0 %v2768
    %3136 = vmatprep.subr.mxu0 %v2765
    %3137 = vmatpush1.msra.mxu0 %v2764
    %3138 = vmatprep.subr.mxu0 %v2761
    %3139 = vmatpush1.msra.mxu0 %v2760
    %3140 = vmatprep.subr.mxu0 %v2757
    %3141 = vmatpush1.msra.mxu0 %v2756
    %3142 = vmatprep.subr.mxu0 %v2753
    %3143 = vmatpush1.msra.mxu0 %v2752
    %3144 = vmatprep.subr.mxu0 %v2749
    %3145 = vmatpush1.msra.mxu0 %v2748
    %3146 = vmatprep.subr.mxu0 %v2745
    %3147 = vmatpush1.msra.mxu0 %v2744
    %3148 = vmatprep.subr.mxu0 %v2741
    %3149 = vmatpush1.msra.mxu0 %v2740
    %3150 = vmatprep.subr.mxu0 %v2737
    %3151 = vmatpush1.msra.mxu0 %v2736
    %3152 = vmatprep.subr.mxu0 %v2733
    %3153 = vmatpush1.msra.mxu0 %v2732
    %3154 = vmatprep.subr.mxu0 %v2729
    %3155 = vmatpush1.msra.mxu0 %v2728
    %3156 = vmatprep.subr.mxu0 %v2725
    %3157 = vmatpush1.msra.mxu0 %v2724
    %3158 = vmatprep.subr.mxu0 %v2721
    %3159 = vmatpush1.msra.mxu0 %v2720
    %3160 = vmatprep.subr.mxu0 %v2717
    %3161 = vmatpush1.msra.mxu0 %v2716
    %3162 = vmatprep.subr.mxu0 %v2713
    %3163 = vmatpush1.msra.mxu0 %v2712
    %3164 = vmatprep.subr.mxu0 %v2837
    %3165 = vmatpush2.msra.mxu0 %v2836
    %3166 = vmatprep.subr.mxu0 %v2833
    %3167 = vmatpush2.msra.mxu0 %v2832
    %3168 = vmatprep.subr.mxu0 %v2829
    %3169 = vmatpush2.msra.mxu0 %v2828
    %3170 = vmatprep.subr.mxu0 %v2825
    %3171 = vmatpush2.msra.mxu0 %v2824
    %3172 = vmatprep.subr.mxu0 %v2821
    %3173 = vmatpush2.msra.mxu0 %v2820
    %3174 = vmatprep.subr.mxu0 %v2817
    %3175 = vmatpush2.msra.mxu0 %v2816
    %3176 = vmatprep.subr.mxu0 %v2813
    %3177 = vmatpush2.msra.mxu0 %v2812
    %3178 = vmatprep.subr.mxu0 %v2809
    %3179 = vmatpush2.msra.mxu0 %v2808
    %3180 = vmatprep.subr.mxu0 %v2805
    %3181 = vmatpush2.msra.mxu0 %v2804
    %3182 = vmatprep.subr.mxu0 %v2801
    %3183 = vmatpush2.msra.mxu0 %v2800
    %3184 = vmatprep.subr.mxu0 %v2797
    %3185 = vmatpush2.msra.mxu0 %v2796
    %3186 = vmatprep.subr.mxu0 %v2793
    %3187 = vmatpush2.msra.mxu0 %v2792
    %3188 = vmatprep.subr.mxu0 %v2789
    %3189 = vmatpush2.msra.mxu0 %v2788
    %3190 = vmatprep.subr.mxu0 %v2785
    %3191 = vmatpush2.msra.mxu0 %v2784
    %3192 = vmatprep.subr.mxu0 %v2781
    %3193 = vmatpush2.msra.mxu0 %v2780
    %3194 = vmatprep.subr.mxu0 %v2777
    %3195 = vmatpush2.msra.mxu0 %v2776
    %3196 = vmatprep.mubr.f32.mxu0 %v2197
    %3197 = vmatmul.mubr.f32.gmra.mxu0 %v2196
    %v3198 = vpop.f32.mrf.mxu0
    %v3199 = vadd.f32 %v3128, %v3198
    %v3200 = vpop.f32.mrf.mxu0
    %v3201 = vadd.f32 %v3130, %v3200
    %3202 = vdwg.mxu0
    %3203 = vmatprep.subr.mxu0 %v2901
    %3204 = vmatpush1.msra.mxu0 %v2900
    %3205 = vmatprep.subr.mxu0 %v2897
    %3206 = vmatpush1.msra.mxu0 %v2896
    %3207 = vmatprep.subr.mxu0 %v2893
    %3208 = vmatpush1.msra.mxu0 %v2892
    %3209 = vmatprep.subr.mxu0 %v2889
    %3210 = vmatpush1.msra.mxu0 %v2888
    %3211 = vmatprep.subr.mxu0 %v2885
    %3212 = vmatpush1.msra.mxu0 %v2884
    %3213 = vmatprep.subr.mxu0 %v2881
    %3214 = vmatpush1.msra.mxu0 %v2880
    %3215 = vmatprep.subr.mxu0 %v2877
    %3216 = vmatpush1.msra.mxu0 %v2876
    %3217 = vmatprep.subr.mxu0 %v2873
    %3218 = vmatpush1.msra.mxu0 %v2872
    %3219 = vmatprep.subr.mxu0 %v2869
    %3220 = vmatpush1.msra.mxu0 %v2868
    %3221 = vmatprep.subr.mxu0 %v2865
    %3222 = vmatpush1.msra.mxu0 %v2864
    %3223 = vmatprep.subr.mxu0 %v2861
    %3224 = vmatpush1.msra.mxu0 %v2860
    %3225 = vmatprep.subr.mxu0 %v2857
    %3226 = vmatpush1.msra.mxu0 %v2856
    %3227 = vmatprep.subr.mxu0 %v2853
    %3228 = vmatpush1.msra.mxu0 %v2852
    %3229 = vmatprep.subr.mxu0 %v2849
    %3230 = vmatpush1.msra.mxu0 %v2848
    %3231 = vmatprep.subr.mxu0 %v2845
    %3232 = vmatpush1.msra.mxu0 %v2844
    %3233 = vmatprep.subr.mxu0 %v2841
    %3234 = vmatpush1.msra.mxu0 %v2840
    %3235 = vmatprep.subr.mxu0 %v2965
    %3236 = vmatpush2.msra.mxu0 %v2964
    %3237 = vmatprep.subr.mxu0 %v2961
    %3238 = vmatpush2.msra.mxu0 %v2960
    %3239 = vmatprep.subr.mxu0 %v2957
    %3240 = vmatpush2.msra.mxu0 %v2956
    %3241 = vmatprep.subr.mxu0 %v2953
    %3242 = vmatpush2.msra.mxu0 %v2952
    %3243 = vmatprep.subr.mxu0 %v2949
    %3244 = vmatpush2.msra.mxu0 %v2948
    %3245 = vmatprep.subr.mxu0 %v2945
    %3246 = vmatpush2.msra.mxu0 %v2944
    %3247 = vmatprep.subr.mxu0 %v2941
    %3248 = vmatpush2.msra.mxu0 %v2940
    %3249 = vmatprep.subr.mxu0 %v2937
    %3250 = vmatpush2.msra.mxu0 %v2936
    %3251 = vmatprep.subr.mxu0 %v2933
    %3252 = vmatpush2.msra.mxu0 %v2932
    %3253 = vmatprep.subr.mxu0 %v2929
    %3254 = vmatpush2.msra.mxu0 %v2928
    %3255 = vmatprep.subr.mxu0 %v2925
    %3256 = vmatpush2.msra.mxu0 %v2924
    %3257 = vmatprep.subr.mxu0 %v2921
    %3258 = vmatpush2.msra.mxu0 %v2920
    %3259 = vmatprep.subr.mxu0 %v2917
    %3260 = vmatpush2.msra.mxu0 %v2916
    %3261 = vmatprep.subr.mxu0 %v2913
    %3262 = vmatpush2.msra.mxu0 %v2912
    %3263 = vmatprep.subr.mxu0 %v2909
    %3264 = vmatpush2.msra.mxu0 %v2908
    %3265 = vmatprep.subr.mxu0 %v2905
    %3266 = vmatpush2.msra.mxu0 %v2904
    %3267 = vmatprep.mubr.f32.mxu0 %v2199
    %3268 = vmatmul.mubr.f32.gmra.mxu0 %v2198
    %v3269 = vpop.f32.mrf.mxu0
    %v3270 = vadd.f32 %v3199, %v3269
    %v3271 = vpop.f32.mrf.mxu0
    %v3272 = vadd.f32 %v3201, %v3271
    %3273 = vdwg.mxu0
    %3274 = vmatprep.subr.mxu0 %v2519
    %3275 = vmatpush1.msra.mxu0 %v2518
    %3276 = vmatprep.subr.mxu0 %v2515
    %3277 = vmatpush1.msra.mxu0 %v2514
    %3278 = vmatprep.subr.mxu0 %v2511
    %3279 = vmatpush1.msra.mxu0 %v2510
    %3280 = vmatprep.subr.mxu0 %v2507
    %3281 = vmatpush1.msra.mxu0 %v2506
    %3282 = vmatprep.subr.mxu0 %v2503
    %3283 = vmatpush1.msra.mxu0 %v2502
    %3284 = vmatprep.subr.mxu0 %v2499
    %3285 = vmatpush1.msra.mxu0 %v2498
    %3286 = vmatprep.subr.mxu0 %v2495
    %3287 = vmatpush1.msra.mxu0 %v2494
    %3288 = vmatprep.subr.mxu0 %v2491
    %3289 = vmatpush1.msra.mxu0 %v2490
    %3290 = vmatprep.subr.mxu0 %v2487
    %3291 = vmatpush1.msra.mxu0 %v2486
    %3292 = vmatprep.subr.mxu0 %v2483
    %3293 = vmatpush1.msra.mxu0 %v2482
    %3294 = vmatprep.subr.mxu0 %v2479
    %3295 = vmatpush1.msra.mxu0 %v2478
    %3296 = vmatprep.subr.mxu0 %v2475
    %3297 = vmatpush1.msra.mxu0 %v2474
    %3298 = vmatprep.subr.mxu0 %v2471
    %3299 = vmatpush1.msra.mxu0 %v2470
    %3300 = vmatprep.subr.mxu0 %v2467
    %3301 = vmatpush1.msra.mxu0 %v2466
    %3302 = vmatprep.subr.mxu0 %v2463
    %3303 = vmatpush1.msra.mxu0 %v2462
    %3304 = vmatprep.subr.mxu0 %v2459
    %3305 = vmatpush1.msra.mxu0 %v2458
    %3306 = vmatprep.subr.mxu0 %v2583
    %3307 = vmatpush2.msra.mxu0 %v2582
    %3308 = vmatprep.subr.mxu0 %v2579
    %3309 = vmatpush2.msra.mxu0 %v2578
    %3310 = vmatprep.subr.mxu0 %v2575
    %3311 = vmatpush2.msra.mxu0 %v2574
    %3312 = vmatprep.subr.mxu0 %v2571
    %3313 = vmatpush2.msra.mxu0 %v2570
    %3314 = vmatprep.subr.mxu0 %v2567
    %3315 = vmatpush2.msra.mxu0 %v2566
    %3316 = vmatprep.subr.mxu0 %v2563
    %3317 = vmatpush2.msra.mxu0 %v2562
    %3318 = vmatprep.subr.mxu0 %v2559
    %3319 = vmatpush2.msra.mxu0 %v2558
    %3320 = vmatprep.subr.mxu0 %v2555
    %3321 = vmatpush2.msra.mxu0 %v2554
    %3322 = vmatprep.subr.mxu0 %v2551
    %3323 = vmatpush2.msra.mxu0 %v2550
    %3324 = vmatprep.subr.mxu0 %v2547
    %3325 = vmatpush2.msra.mxu0 %v2546
    %3326 = vmatprep.subr.mxu0 %v2543
    %3327 = vmatpush2.msra.mxu0 %v2542
    %3328 = vmatprep.subr.mxu0 %v2539
    %3329 = vmatpush2.msra.mxu0 %v2538
    %3330 = vmatprep.subr.mxu0 %v2535
    %3331 = vmatpush2.msra.mxu0 %v2534
    %3332 = vmatprep.subr.mxu0 %v2531
    %3333 = vmatpush2.msra.mxu0 %v2530
    %3334 = vmatprep.subr.mxu0 %v2527
    %3335 = vmatpush2.msra.mxu0 %v2526
    %3336 = vmatprep.subr.mxu0 %v2523
    %3337 = vmatpush2.msra.mxu0 %v2522
    %3338 = vmatprep.mubr.f32.mxu0 %v2193
    %3339 = vmatmul.mubr.f32.gmra.mxu0 %v2192
    %v3340 = vpop.f32.mrf.mxu0
    %v3341 = vadd.f32 %v2981, %v3340
    %v3342 = vpop.f32.mrf.mxu0
    %v3343 = vadd.f32 %v2985, %v3342
    %3344 = vdwg.mxu0
    %3345 = vmatprep.subr.mxu0 %v2647
    %3346 = vmatpush1.msra.mxu0 %v2646
    %3347 = vmatprep.subr.mxu0 %v2643
    %3348 = vmatpush1.msra.mxu0 %v2642
    %3349 = vmatprep.subr.mxu0 %v2639
    %3350 = vmatpush1.msra.mxu0 %v2638
    %3351 = vmatprep.subr.mxu0 %v2635
    %3352 = vmatpush1.msra.mxu0 %v2634
    %3353 = vmatprep.subr.mxu0 %v2631
    %3354 = vmatpush1.msra.mxu0 %v2630
    %3355 = vmatprep.subr.mxu0 %v2627
    %3356 = vmatpush1.msra.mxu0 %v2626
    %3357 = vmatprep.subr.mxu0 %v2623
    %3358 = vmatpush1.msra.mxu0 %v2622
    %3359 = vmatprep.subr.mxu0 %v2619
    %3360 = vmatpush1.msra.mxu0 %v2618
    %3361 = vmatprep.subr.mxu0 %v2615
    %3362 = vmatpush1.msra.mxu0 %v2614
    %3363 = vmatprep.subr.mxu0 %v2611
    %3364 = vmatpush1.msra.mxu0 %v2610
    %3365 = vmatprep.subr.mxu0 %v2607
    %3366 = vmatpush1.msra.mxu0 %v2606
    %3367 = vmatprep.subr.mxu0 %v2603
    %3368 = vmatpush1.msra.mxu0 %v2602
    %3369 = vmatprep.subr.mxu0 %v2599
    %3370 = vmatpush1.msra.mxu0 %v2598
    %3371 = vmatprep.subr.mxu0 %v2595
    %3372 = vmatpush1.msra.mxu0 %v2594
    %3373 = vmatprep.subr.mxu0 %v2591
    %3374 = vmatpush1.msra.mxu0 %v2590
    %3375 = vmatprep.subr.mxu0 %v2587
    %3376 = vmatpush1.msra.mxu0 %v2586
    %3377 = vmatprep.subr.mxu0 %v2711
    %3378 = vmatpush2.msra.mxu0 %v2710
    %3379 = vmatprep.subr.mxu0 %v2707
    %3380 = vmatpush2.msra.mxu0 %v2706
    %3381 = vmatprep.subr.mxu0 %v2703
    %3382 = vmatpush2.msra.mxu0 %v2702
    %3383 = vmatprep.subr.mxu0 %v2699
    %3384 = vmatpush2.msra.mxu0 %v2698
    %3385 = vmatprep.subr.mxu0 %v2695
    %3386 = vmatpush2.msra.mxu0 %v2694
    %3387 = vmatprep.subr.mxu0 %v2691
    %3388 = vmatpush2.msra.mxu0 %v2690
    %3389 = vmatprep.subr.mxu0 %v2687
    %3390 = vmatpush2.msra.mxu0 %v2686
    %3391 = vmatprep.subr.mxu0 %v2683
    %3392 = vmatpush2.msra.mxu0 %v2682
    %3393 = vmatprep.subr.mxu0 %v2679
    %3394 = vmatpush2.msra.mxu0 %v2678
    %3395 = vmatprep.subr.mxu0 %v2675
    %3396 = vmatpush2.msra.mxu0 %v2674
    %3397 = vmatprep.subr.mxu0 %v2671
    %3398 = vmatpush2.msra.mxu0 %v2670
    %3399 = vmatprep.subr.mxu0 %v2667
    %3400 = vmatpush2.msra.mxu0 %v2666
    %3401 = vmatprep.subr.mxu0 %v2663
    %3402 = vmatpush2.msra.mxu0 %v2662
    %3403 = vmatprep.subr.mxu0 %v2659
    %3404 = vmatpush2.msra.mxu0 %v2658
    %3405 = vmatprep.subr.mxu0 %v2655
    %3406 = vmatpush2.msra.mxu0 %v2654
    %3407 = vmatprep.subr.mxu0 %v2651
    %3408 = vmatpush2.msra.mxu0 %v2650
    %3409 = vmatprep.mubr.f32.mxu0 %v2195
    %3410 = vmatmul.mubr.f32.gmra.mxu0 %v2194
    %v3411 = vpop.f32.mrf.mxu0
    %v3412 = vadd.f32 %v3341, %v3411
    %v3413 = vpop.f32.mrf.mxu0
    %v3414 = vadd.f32 %v3343, %v3413
    %3415 = vdwg.mxu0
    %3416 = vmatprep.subr.mxu0 %v2775
    %3417 = vmatpush1.msra.mxu0 %v2774
    %3418 = vmatprep.subr.mxu0 %v2771
    %3419 = vmatpush1.msra.mxu0 %v2770
    %3420 = vmatprep.subr.mxu0 %v2767
    %3421 = vmatpush1.msra.mxu0 %v2766
    %3422 = vmatprep.subr.mxu0 %v2763
    %3423 = vmatpush1.msra.mxu0 %v2762
    %3424 = vmatprep.subr.mxu0 %v2759
    %3425 = vmatpush1.msra.mxu0 %v2758
    %3426 = vmatprep.subr.mxu0 %v2755
    %3427 = vmatpush1.msra.mxu0 %v2754
    %3428 = vmatprep.subr.mxu0 %v2751
    %3429 = vmatpush1.msra.mxu0 %v2750
    %3430 = vmatprep.subr.mxu0 %v2747
    %3431 = vmatpush1.msra.mxu0 %v2746
    %3432 = vmatprep.subr.mxu0 %v2743
    %3433 = vmatpush1.msra.mxu0 %v2742
    %3434 = vmatprep.subr.mxu0 %v2739
    %3435 = vmatpush1.msra.mxu0 %v2738
    %3436 = vmatprep.subr.mxu0 %v2735
    %3437 = vmatpush1.msra.mxu0 %v2734
    %3438 = vmatprep.subr.mxu0 %v2731
    %3439 = vmatpush1.msra.mxu0 %v2730
    %3440 = vmatprep.subr.mxu0 %v2727
    %3441 = vmatpush1.msra.mxu0 %v2726
    %3442 = vmatprep.subr.mxu0 %v2723
    %3443 = vmatpush1.msra.mxu0 %v2722
    %3444 = vmatprep.subr.mxu0 %v2719
    %3445 = vmatpush1.msra.mxu0 %v2718
    %3446 = vmatprep.subr.mxu0 %v2715
    %3447 = vmatpush1.msra.mxu0 %v2714
    %3448 = vmatprep.subr.mxu0 %v2839
    %3449 = vmatpush2.msra.mxu0 %v2838
    %3450 = vmatprep.subr.mxu0 %v2835
    %3451 = vmatpush2.msra.mxu0 %v2834
    %3452 = vmatprep.subr.mxu0 %v2831
    %3453 = vmatpush2.msra.mxu0 %v2830
    %3454 = vmatprep.subr.mxu0 %v2827
    %3455 = vmatpush2.msra.mxu0 %v2826
    %3456 = vmatprep.subr.mxu0 %v2823
    %3457 = vmatpush2.msra.mxu0 %v2822
    %3458 = vmatprep.subr.mxu0 %v2819
    %3459 = vmatpush2.msra.mxu0 %v2818
    %3460 = vmatprep.subr.mxu0 %v2815
    %3461 = vmatpush2.msra.mxu0 %v2814
    %3462 = vmatprep.subr.mxu0 %v2811
    %3463 = vmatpush2.msra.mxu0 %v2810
    %3464 = vmatprep.subr.mxu0 %v2807
    %3465 = vmatpush2.msra.mxu0 %v2806
    %3466 = vmatprep.subr.mxu0 %v2803
    %3467 = vmatpush2.msra.mxu0 %v2802
    %3468 = vmatprep.subr.mxu0 %v2799
    %3469 = vmatpush2.msra.mxu0 %v2798
    %3470 = vmatprep.subr.mxu0 %v2795
    %3471 = vmatpush2.msra.mxu0 %v2794
    %3472 = vmatprep.subr.mxu0 %v2791
    %3473 = vmatpush2.msra.mxu0 %v2790
    %3474 = vmatprep.subr.mxu0 %v2787
    %3475 = vmatpush2.msra.mxu0 %v2786
    %3476 = vmatprep.subr.mxu0 %v2783
    %3477 = vmatpush2.msra.mxu0 %v2782
    %3478 = vmatprep.subr.mxu0 %v2779
    %3479 = vmatpush2.msra.mxu0 %v2778
    %3480 = vmatprep.mubr.f32.mxu0 %v2197
    %3481 = vmatmul.mubr.f32.gmra.mxu0 %v2196
    %v3482 = vpop.f32.mrf.mxu0
    %v3483 = vadd.f32 %v3412, %v3482
    %v3484 = vpop.f32.mrf.mxu0
    %v3485 = vadd.f32 %v3414, %v3484
    %3486 = vdwg.mxu0
    %3487 = vmatprep.subr.mxu0 %v2903
    %3488 = vmatpush1.msra.mxu0 %v2902
    %3489 = vmatprep.subr.mxu0 %v2899
    %3490 = vmatpush1.msra.mxu0 %v2898
    %3491 = vmatprep.subr.mxu0 %v2895
    %3492 = vmatpush1.msra.mxu0 %v2894
    %3493 = vmatprep.subr.mxu0 %v2891
    %3494 = vmatpush1.msra.mxu0 %v2890
    %3495 = vmatprep.subr.mxu0 %v2887
    %3496 = vmatpush1.msra.mxu0 %v2886
    %3497 = vmatprep.subr.mxu0 %v2883
    %3498 = vmatpush1.msra.mxu0 %v2882
    %3499 = vmatprep.subr.mxu0 %v2879
    %3500 = vmatpush1.msra.mxu0 %v2878
    %3501 = vmatprep.subr.mxu0 %v2875
    %3502 = vmatpush1.msra.mxu0 %v2874
    %3503 = vmatprep.subr.mxu0 %v2871
    %3504 = vmatpush1.msra.mxu0 %v2870
    %3505 = vmatprep.subr.mxu0 %v2867
    %3506 = vmatpush1.msra.mxu0 %v2866
    %3507 = vmatprep.subr.mxu0 %v2863
    %3508 = vmatpush1.msra.mxu0 %v2862
    %3509 = vmatprep.subr.mxu0 %v2859
    %3510 = vmatpush1.msra.mxu0 %v2858
    %3511 = vmatprep.subr.mxu0 %v2855
    %3512 = vmatpush1.msra.mxu0 %v2854
    %3513 = vmatprep.subr.mxu0 %v2851
    %3514 = vmatpush1.msra.mxu0 %v2850
    %3515 = vmatprep.subr.mxu0 %v2847
    %3516 = vmatpush1.msra.mxu0 %v2846
    %3517 = vmatprep.subr.mxu0 %v2843
    %3518 = vmatpush1.msra.mxu0 %v2842
    %3519 = vmatprep.subr.mxu0 %v2967
    %3520 = vmatpush2.msra.mxu0 %v2966
    %3521 = vmatprep.subr.mxu0 %v2963
    %3522 = vmatpush2.msra.mxu0 %v2962
    %3523 = vmatprep.subr.mxu0 %v2959
    %3524 = vmatpush2.msra.mxu0 %v2958
    %3525 = vmatprep.subr.mxu0 %v2955
    %3526 = vmatpush2.msra.mxu0 %v2954
    %3527 = vmatprep.subr.mxu0 %v2951
    %3528 = vmatpush2.msra.mxu0 %v2950
    %3529 = vmatprep.subr.mxu0 %v2947
    %3530 = vmatpush2.msra.mxu0 %v2946
    %3531 = vmatprep.subr.mxu0 %v2943
    %3532 = vmatpush2.msra.mxu0 %v2942
    %3533 = vmatprep.subr.mxu0 %v2939
    %3534 = vmatpush2.msra.mxu0 %v2938
    %3535 = vmatprep.subr.mxu0 %v2935
    %3536 = vmatpush2.msra.mxu0 %v2934
    %3537 = vmatprep.subr.mxu0 %v2931
    %3538 = vmatpush2.msra.mxu0 %v2930
    %3539 = vmatprep.subr.mxu0 %v2927
    %3540 = vmatpush2.msra.mxu0 %v2926
    %3541 = vmatprep.subr.mxu0 %v2923
    %3542 = vmatpush2.msra.mxu0 %v2922
    %3543 = vmatprep.subr.mxu0 %v2919
    %3544 = vmatpush2.msra.mxu0 %v2918
    %3545 = vmatprep.subr.mxu0 %v2915
    %3546 = vmatpush2.msra.mxu0 %v2914
    %3547 = vmatprep.subr.mxu0 %v2911
    %3548 = vmatpush2.msra.mxu0 %v2910
    %3549 = vmatprep.subr.mxu0 %v2907
    %3550 = vmatpush2.msra.mxu0 %v2906
    %3551 = vmatprep.mubr.f32.mxu0 %v2199
    %3552 = vmatmul.mubr.f32.gmra.mxu0 %v2198
    %v3553 = vpop.f32.mrf.mxu0
    %v3554 = vadd.f32 %v3483, %v3553
    %v3555 = vpop.f32.mrf.mxu0
    %v3556 = vadd.f32 %v3485, %v3555
    %3557 = vdwg.mxu0
    %vm3558 = vcmp.ge.f32.partialorder %v3270, 0.0
    %vm3559 = vcmp.ge.f32.partialorder %v3272, 0.0
    %vm3560 = vcmp.ge.f32.partialorder %v3554, 0.0
    %vm3561 = vcmp.ge.f32.partialorder %v3556, 0.0
    %v3562 = vmul.f32 %v3270, 0.01
    %v3563 = vmul.f32 %v3272, 0.01
    %v3564 = vmul.f32 %v3554, 0.01
    %v3565 = vmul.f32 %v3556, 0.01
    %v3566 = vsel %vm3558, %v3270, %v3562
    %v3567 = vsel %vm3559, %v3272, %v3563
    %v3568 = vsel %vm3560, %v3554, %v3564
    %v3569 = vsel %vm3561, %v3556, %v3565
    %v3570 = vld [vmem:[%s12] sm:$0xff]
    %v3571 = vld [vmem:[%s12 + $0x8] sm:$0xff]
    %v3572 = vld [vmem:[%s12 + $0x10] sm:$0xff]
    %v3573 = vld [vmem:[%s12 + $0x18] sm:$0xff]
    %v3574 = vld [vmem:[%s12 + $0x20] sm:$0xff]
    %v3575 = vld [vmem:[%s12 + $0x28] sm:$0xff]
    %v3576 = vld [vmem:[%s12 + $0x30] sm:$0xff]
    %v3577 = vld [vmem:[%s12 + $0x38] sm:$0xff]
    %v3578 = vld [vmem:[%s12 + $0x40] sm:$0xff]
    %v3579 = vld [vmem:[%s12 + $0x48] sm:$0xff]
    %v3580 = vld [vmem:[%s12 + $0x50] sm:$0xff]
    %v3581 = vld [vmem:[%s12 + $0x58] sm:$0xff]
    %v3582 = vld [vmem:[%s12 + $0x60] sm:$0xff]
    %v3583 = vld [vmem:[%s12 + $0x68] sm:$0xff]
    %v3584 = vld [vmem:[%s12 + $0x70] sm:$0xff]
    %v3585 = vld [vmem:[%s12 + $0x78] sm:$0xff]
    %v3586 = vld [vmem:[%s12 + $0x80] sm:$0xff]
    %v3587 = vld [vmem:[%s12 + $0x88] sm:$0xff]
    %v3588 = vld [vmem:[%s12 + $0x90] sm:$0xff]
    %v3589 = vld [vmem:[%s12 + $0x98] sm:$0xff]
    %v3590 = vld [vmem:[%s12 + $0xa0] sm:$0xff]
    %v3591 = vld [vmem:[%s12 + $0xa8] sm:$0xff]
    %v3592 = vld [vmem:[%s12 + $0xb0] sm:$0xff]
    %v3593 = vld [vmem:[%s12 + $0xb8] sm:$0xff]
    %v3594 = vld [vmem:[%s12 + $0xc0] sm:$0xff]
    %v3595 = vld [vmem:[%s12 + $0xc8] sm:$0xff]
    %v3596 = vld [vmem:[%s12 + $0xd0] sm:$0xff]
    %v3597 = vld [vmem:[%s12 + $0xd8] sm:$0xff]
    %v3598 = vld [vmem:[%s12 + $0xe0] sm:$0xff]
    %v3599 = vld [vmem:[%s12 + $0xe8] sm:$0xff]
    %v3600 = vld [vmem:[%s12 + $0xf0] sm:$0xff]
    %v3601 = vld [vmem:[%s12 + $0xf8] sm:$0xff]
    %v3602 = vld [vmem:[%s12 + $0x100] sm:$0xff]
    %v3603 = vld [vmem:[%s12 + $0x108] sm:$0xff]
    %v3604 = vld [vmem:[%s12 + $0x110] sm:$0xff]
    %v3605 = vld [vmem:[%s12 + $0x118] sm:$0xff]
    %v3606 = vld [vmem:[%s12 + $0x120] sm:$0xff]
    %v3607 = vld [vmem:[%s12 + $0x128] sm:$0xff]
    %v3608 = vld [vmem:[%s12 + $0x130] sm:$0xff]
    %v3609 = vld [vmem:[%s12 + $0x138] sm:$0xff]
    %v3610 = vld [vmem:[%s12 + $0x140] sm:$0xff]
    %v3611 = vld [vmem:[%s12 + $0x148] sm:$0xff]
    %v3612 = vld [vmem:[%s12 + $0x150] sm:$0xff]
    %v3613 = vld [vmem:[%s12 + $0x158] sm:$0xff]
    %v3614 = vld [vmem:[%s12 + $0x160] sm:$0xff]
    %v3615 = vld [vmem:[%s12 + $0x168] sm:$0xff]
    %v3616 = vld [vmem:[%s12 + $0x170] sm:$0xff]
    %v3617 = vld [vmem:[%s12 + $0x178] sm:$0xff]
    %v3618 = vld [vmem:[%s12 + $0x180] sm:$0xff]
    %v3619 = vld [vmem:[%s12 + $0x188] sm:$0xff]
    %v3620 = vld [vmem:[%s12 + $0x190] sm:$0xff]
    %v3621 = vld [vmem:[%s12 + $0x198] sm:$0xff]
    %v3622 = vld [vmem:[%s12 + $0x1a0] sm:$0xff]
    %v3623 = vld [vmem:[%s12 + $0x1a8] sm:$0xff]
    %v3624 = vld [vmem:[%s12 + $0x1b0] sm:$0xff]
    %v3625 = vld [vmem:[%s12 + $0x1b8] sm:$0xff]
    %v3626 = vld [vmem:[%s12 + $0x1c0] sm:$0xff]
    %v3627 = vld [vmem:[%s12 + $0x1c8] sm:$0xff]
    %v3628 = vld [vmem:[%s12 + $0x1d0] sm:$0xff]
    %v3629 = vld [vmem:[%s12 + $0x1d8] sm:$0xff]
    %v3630 = vld [vmem:[%s12 + $0x1e0] sm:$0xff]
    %v3631 = vld [vmem:[%s12 + $0x1e8] sm:$0xff]
    %v3632 = vld [vmem:[%s12 + $0x1f0] sm:$0xff]
    %v3633 = vld [vmem:[%s12 + $0x1f8] sm:$0xff]
    %v3634 = vunpack.c.l.bf16 %v3570
    %v3635 = vunpack.c.h.bf16 %v3570
    %v3636 = vunpack.c.l.bf16 %v3571
    %v3637 = vunpack.c.h.bf16 %v3571
    %v3638 = vunpack.c.l.bf16 %v3572
    %v3639 = vunpack.c.h.bf16 %v3572
    %v3640 = vunpack.c.l.bf16 %v3573
    %v3641 = vunpack.c.h.bf16 %v3573
    %v3642 = vunpack.c.l.bf16 %v3574
    %v3643 = vunpack.c.h.bf16 %v3574
    %v3644 = vunpack.c.l.bf16 %v3575
    %v3645 = vunpack.c.h.bf16 %v3575
    %v3646 = vunpack.c.l.bf16 %v3576
    %v3647 = vunpack.c.h.bf16 %v3576
    %v3648 = vunpack.c.l.bf16 %v3577
    %v3649 = vunpack.c.h.bf16 %v3577
    %v3650 = vunpack.c.l.bf16 %v3578
    %v3651 = vunpack.c.h.bf16 %v3578
    %v3652 = vunpack.c.l.bf16 %v3579
    %v3653 = vunpack.c.h.bf16 %v3579
    %v3654 = vunpack.c.l.bf16 %v3580
    %v3655 = vunpack.c.h.bf16 %v3580
    %v3656 = vunpack.c.l.bf16 %v3581
    %v3657 = vunpack.c.h.bf16 %v3581
    %v3658 = vunpack.c.l.bf16 %v3582
    %v3659 = vunpack.c.h.bf16 %v3582
    %v3660 = vunpack.c.l.bf16 %v3583
    %v3661 = vunpack.c.h.bf16 %v3583
    %v3662 = vunpack.c.l.bf16 %v3584
    %v3663 = vunpack.c.h.bf16 %v3584
    %v3664 = vunpack.c.l.bf16 %v3585
    %v3665 = vunpack.c.h.bf16 %v3585
    %v3666 = vunpack.c.l.bf16 %v3586
    %v3667 = vunpack.c.h.bf16 %v3586
    %v3668 = vunpack.c.l.bf16 %v3587
    %v3669 = vunpack.c.h.bf16 %v3587
    %v3670 = vunpack.c.l.bf16 %v3588
    %v3671 = vunpack.c.h.bf16 %v3588
    %v3672 = vunpack.c.l.bf16 %v3589
    %v3673 = vunpack.c.h.bf16 %v3589
    %v3674 = vunpack.c.l.bf16 %v3590
    %v3675 = vunpack.c.h.bf16 %v3590
    %v3676 = vunpack.c.l.bf16 %v3591
    %v3677 = vunpack.c.h.bf16 %v3591
    %v3678 = vunpack.c.l.bf16 %v3592
    %v3679 = vunpack.c.h.bf16 %v3592
    %v3680 = vunpack.c.l.bf16 %v3593
    %v3681 = vunpack.c.h.bf16 %v3593
    %v3682 = vunpack.c.l.bf16 %v3594
    %v3683 = vunpack.c.h.bf16 %v3594
    %v3684 = vunpack.c.l.bf16 %v3595
    %v3685 = vunpack.c.h.bf16 %v3595
    %v3686 = vunpack.c.l.bf16 %v3596
    %v3687 = vunpack.c.h.bf16 %v3596
    %v3688 = vunpack.c.l.bf16 %v3597
    %v3689 = vunpack.c.h.bf16 %v3597
    %v3690 = vunpack.c.l.bf16 %v3598
    %v3691 = vunpack.c.h.bf16 %v3598
    %v3692 = vunpack.c.l.bf16 %v3599
    %v3693 = vunpack.c.h.bf16 %v3599
    %v3694 = vunpack.c.l.bf16 %v3600
    %v3695 = vunpack.c.h.bf16 %v3600
    %v3696 = vunpack.c.l.bf16 %v3601
    %v3697 = vunpack.c.h.bf16 %v3601
    %v3698 = vunpack.c.l.bf16 %v3602
    %v3699 = vunpack.c.h.bf16 %v3602
    %v3700 = vunpack.c.l.bf16 %v3603
    %v3701 = vunpack.c.h.bf16 %v3603
    %v3702 = vunpack.c.l.bf16 %v3604
    %v3703 = vunpack.c.h.bf16 %v3604
    %v3704 = vunpack.c.l.bf16 %v3605
    %v3705 = vunpack.c.h.bf16 %v3605
    %v3706 = vunpack.c.l.bf16 %v3606
    %v3707 = vunpack.c.h.bf16 %v3606
    %v3708 = vunpack.c.l.bf16 %v3607
    %v3709 = vunpack.c.h.bf16 %v3607
    %v3710 = vunpack.c.l.bf16 %v3608
    %v3711 = vunpack.c.h.bf16 %v3608
    %v3712 = vunpack.c.l.bf16 %v3609
    %v3713 = vunpack.c.h.bf16 %v3609
    %v3714 = vunpack.c.l.bf16 %v3610
    %v3715 = vunpack.c.h.bf16 %v3610
    %v3716 = vunpack.c.l.bf16 %v3611
    %v3717 = vunpack.c.h.bf16 %v3611
    %v3718 = vunpack.c.l.bf16 %v3612
    %v3719 = vunpack.c.h.bf16 %v3612
    %v3720 = vunpack.c.l.bf16 %v3613
    %v3721 = vunpack.c.h.bf16 %v3613
    %v3722 = vunpack.c.l.bf16 %v3614
    %v3723 = vunpack.c.h.bf16 %v3614
    %v3724 = vunpack.c.l.bf16 %v3615
    %v3725 = vunpack.c.h.bf16 %v3615
    %v3726 = vunpack.c.l.bf16 %v3616
    %v3727 = vunpack.c.h.bf16 %v3616
    %v3728 = vunpack.c.l.bf16 %v3617
    %v3729 = vunpack.c.h.bf16 %v3617
    %v3730 = vunpack.c.l.bf16 %v3618
    %v3731 = vunpack.c.h.bf16 %v3618
    %v3732 = vunpack.c.l.bf16 %v3619
    %v3733 = vunpack.c.h.bf16 %v3619
    %v3734 = vunpack.c.l.bf16 %v3620
    %v3735 = vunpack.c.h.bf16 %v3620
    %v3736 = vunpack.c.l.bf16 %v3621
    %v3737 = vunpack.c.h.bf16 %v3621
    %v3738 = vunpack.c.l.bf16 %v3622
    %v3739 = vunpack.c.h.bf16 %v3622
    %v3740 = vunpack.c.l.bf16 %v3623
    %v3741 = vunpack.c.h.bf16 %v3623
    %v3742 = vunpack.c.l.bf16 %v3624
    %v3743 = vunpack.c.h.bf16 %v3624
    %v3744 = vunpack.c.l.bf16 %v3625
    %v3745 = vunpack.c.h.bf16 %v3625
    %v3746 = vunpack.c.l.bf16 %v3626
    %v3747 = vunpack.c.h.bf16 %v3626
    %v3748 = vunpack.c.l.bf16 %v3627
    %v3749 = vunpack.c.h.bf16 %v3627
    %v3750 = vunpack.c.l.bf16 %v3628
    %v3751 = vunpack.c.h.bf16 %v3628
    %v3752 = vunpack.c.l.bf16 %v3629
    %v3753 = vunpack.c.h.bf16 %v3629
    %v3754 = vunpack.c.l.bf16 %v3630
    %v3755 = vunpack.c.h.bf16 %v3630
    %v3756 = vunpack.c.l.bf16 %v3631
    %v3757 = vunpack.c.h.bf16 %v3631
    %v3758 = vunpack.c.l.bf16 %v3632
    %v3759 = vunpack.c.h.bf16 %v3632
    %v3760 = vunpack.c.l.bf16 %v3633
    %v3761 = vunpack.c.h.bf16 %v3633
    %v3762 = vld [vmem:[%s13] sm:$0x3]
    %v3764 = vlaneseq
    %v3765 = vshrl.u32 %v3764, 7
    %v3766 = vsub.s32 0, %v3765
    %v3767 = vrot.slane %v3762, %v3766
    %v3768 = vlaneseq
    %v3769 = vshrl.u32 %v3768, 7
    %v3770 = vsub.s32 1, %v3769
    %v3771 = vrot.slane %v3762, %v3770
    %3774 = vmatprep.subr.mxu0 %v3665
    %3775 = vmatpush1.msra.mxu0 %v3664
    %3776 = vmatprep.subr.mxu0 %v3663
    %3777 = vmatpush1.msra.mxu0 %v3662
    %3778 = vmatprep.subr.mxu0 %v3661
    %3779 = vmatpush1.msra.mxu0 %v3660
    %3780 = vmatprep.subr.mxu0 %v3659
    %3781 = vmatpush1.msra.mxu0 %v3658
    %3782 = vmatprep.subr.mxu0 %v3657
    %3783 = vmatpush1.msra.mxu0 %v3656
    %3784 = vmatprep.subr.mxu0 %v3655
    %3785 = vmatpush1.msra.mxu0 %v3654
    %3786 = vmatprep.subr.mxu0 %v3653
    %3787 = vmatpush1.msra.mxu0 %v3652
    %3788 = vmatprep.subr.mxu0 %v3651
    %3789 = vmatpush1.msra.mxu0 %v3650
    %3790 = vmatprep.subr.mxu0 %v3649
    %3791 = vmatpush1.msra.mxu0 %v3648
    %3792 = vmatprep.subr.mxu0 %v3647
    %3793 = vmatpush1.msra.mxu0 %v3646
    %3794 = vmatprep.subr.mxu0 %v3645
    %3795 = vmatpush1.msra.mxu0 %v3644
    %3796 = vmatprep.subr.mxu0 %v3643
    %3797 = vmatpush1.msra.mxu0 %v3642
    %3798 = vmatprep.subr.mxu0 %v3641
    %3799 = vmatpush1.msra.mxu0 %v3640
    %3800 = vmatprep.subr.mxu0 %v3639
    %3801 = vmatpush1.msra.mxu0 %v3638
    %3802 = vmatprep.subr.mxu0 %v3637
    %3803 = vmatpush1.msra.mxu0 %v3636
    %3804 = vmatprep.subr.mxu0 %v3635
    %3805 = vmatpush1.msra.mxu0 %v3634
    %3806 = vmatprep.subr.mxu0 %v3697
    %3807 = vmatpush2.msra.mxu0 %v3696
    %3808 = vmatprep.subr.mxu0 %v3695
    %3809 = vmatpush2.msra.mxu0 %v3694
    %3810 = vmatprep.subr.mxu0 %v3693
    %3811 = vmatpush2.msra.mxu0 %v3692
    %3812 = vmatprep.subr.mxu0 %v3691
    %3813 = vmatpush2.msra.mxu0 %v3690
    %3814 = vmatprep.subr.mxu0 %v3689
    %3815 = vmatpush2.msra.mxu0 %v3688
    %3816 = vmatprep.subr.mxu0 %v3687
    %3817 = vmatpush2.msra.mxu0 %v3686
    %3818 = vmatprep.subr.mxu0 %v3685
    %3819 = vmatpush2.msra.mxu0 %v3684
    %3820 = vmatprep.subr.mxu0 %v3683
    %3821 = vmatpush2.msra.mxu0 %v3682
    %3822 = vmatprep.subr.mxu0 %v3681
    %3823 = vmatpush2.msra.mxu0 %v3680
    %3824 = vmatprep.subr.mxu0 %v3679
    %3825 = vmatpush2.msra.mxu0 %v3678
    %3826 = vmatprep.subr.mxu0 %v3677
    %3827 = vmatpush2.msra.mxu0 %v3676
    %3828 = vmatprep.subr.mxu0 %v3675
    %3829 = vmatpush2.msra.mxu0 %v3674
    %3830 = vmatprep.subr.mxu0 %v3673
    %3831 = vmatpush2.msra.mxu0 %v3672
    %3832 = vmatprep.subr.mxu0 %v3671
    %3833 = vmatpush2.msra.mxu0 %v3670
    %3834 = vmatprep.subr.mxu0 %v3669
    %3835 = vmatpush2.msra.mxu0 %v3668
    %3836 = vmatprep.subr.mxu0 %v3667
    %3837 = vmatpush2.msra.mxu0 %v3666
    %3838 = vmatprep.mubr.f32.mxu0 %v3567
    %3839 = vmatmul.mubr.f32.gmra.mxu0 %v3566
    %v3840 = vpop.f32.mrf.mxu0
    %v3841 = vadd.f32 %v3767, %v3840
    %v3842 = vpop.f32.mrf.mxu0
    %v3843 = vadd.f32 %v3771, %v3842
    %3844 = vdwg.mxu0
    %3845 = vmatprep.subr.mxu0 %v3729
    %3846 = vmatpush1.msra.mxu0 %v3728
    %3847 = vmatprep.subr.mxu0 %v3727
    %3848 = vmatpush1.msra.mxu0 %v3726
    %3849 = vmatprep.subr.mxu0 %v3725
    %3850 = vmatpush1.msra.mxu0 %v3724
    %3851 = vmatprep.subr.mxu0 %v3723
    %3852 = vmatpush1.msra.mxu0 %v3722
    %3853 = vmatprep.subr.mxu0 %v3721
    %3854 = vmatpush1.msra.mxu0 %v3720
    %3855 = vmatprep.subr.mxu0 %v3719
    %3856 = vmatpush1.msra.mxu0 %v3718
    %3857 = vmatprep.subr.mxu0 %v3717
    %3858 = vmatpush1.msra.mxu0 %v3716
    %3859 = vmatprep.subr.mxu0 %v3715
    %3860 = vmatpush1.msra.mxu0 %v3714
    %3861 = vmatprep.subr.mxu0 %v3713
    %3862 = vmatpush1.msra.mxu0 %v3712
    %3863 = vmatprep.subr.mxu0 %v3711
    %3864 = vmatpush1.msra.mxu0 %v3710
    %3865 = vmatprep.subr.mxu0 %v3709
    %3866 = vmatpush1.msra.mxu0 %v3708
    %3867 = vmatprep.subr.mxu0 %v3707
    %3868 = vmatpush1.msra.mxu0 %v3706
    %3869 = vmatprep.subr.mxu0 %v3705
    %3870 = vmatpush1.msra.mxu0 %v3704
    %3871 = vmatprep.subr.mxu0 %v3703
    %3872 = vmatpush1.msra.mxu0 %v3702
    %3873 = vmatprep.subr.mxu0 %v3701
    %3874 = vmatpush1.msra.mxu0 %v3700
    %3875 = vmatprep.subr.mxu0 %v3699
    %3876 = vmatpush1.msra.mxu0 %v3698
    %3877 = vmatprep.subr.mxu0 %v3761
    %3878 = vmatpush2.msra.mxu0 %v3760
    %3879 = vmatprep.subr.mxu0 %v3759
    %3880 = vmatpush2.msra.mxu0 %v3758
    %3881 = vmatprep.subr.mxu0 %v3757
    %3882 = vmatpush2.msra.mxu0 %v3756
    %3883 = vmatprep.subr.mxu0 %v3755
    %3884 = vmatpush2.msra.mxu0 %v3754
    %3885 = vmatprep.subr.mxu0 %v3753
    %3886 = vmatpush2.msra.mxu0 %v3752
    %3887 = vmatprep.subr.mxu0 %v3751
    %3888 = vmatpush2.msra.mxu0 %v3750
    %3889 = vmatprep.subr.mxu0 %v3749
    %3890 = vmatpush2.msra.mxu0 %v3748
    %3891 = vmatprep.subr.mxu0 %v3747
    %3892 = vmatpush2.msra.mxu0 %v3746
    %3893 = vmatprep.subr.mxu0 %v3745
    %3894 = vmatpush2.msra.mxu0 %v3744
    %3895 = vmatprep.subr.mxu0 %v3743
    %3896 = vmatpush2.msra.mxu0 %v3742
    %3897 = vmatprep.subr.mxu0 %v3741
    %3898 = vmatpush2.msra.mxu0 %v3740
    %3899 = vmatprep.subr.mxu0 %v3739
    %3900 = vmatpush2.msra.mxu0 %v3738
    %3901 = vmatprep.subr.mxu0 %v3737
    %3902 = vmatpush2.msra.mxu0 %v3736
    %3903 = vmatprep.subr.mxu0 %v3735
    %3904 = vmatpush2.msra.mxu0 %v3734
    %3905 = vmatprep.subr.mxu0 %v3733
    %3906 = vmatpush2.msra.mxu0 %v3732
    %3907 = vmatprep.subr.mxu0 %v3731
    %3908 = vmatpush2.msra.mxu0 %v3730
    %3909 = vmatprep.mubr.f32.mxu0 %v3569
    %3910 = vmatmul.mubr.f32.gmra.mxu0 %v3568
    %v3911 = vpop.f32.mrf.mxu0
    %v3912 = vadd.f32 %v3841, %v3911
    %v3913 = vpop.f32.mrf.mxu0
    %v3914 = vadd.f32 %v3843, %v3913
    %3915 = vdwg.mxu0
    %vm3916 = vcmp.ge.f32.partialorder %v3912, 0.0
    %vm3917 = vcmp.ge.f32.partialorder %v3914, 0.0
    %v3918 = vmul.f32 %v3912, 0.01
    %v3919 = vmul.f32 %v3914, 0.01
    %v3920 = vsel %vm3916, %v3912, %v3918
    %v3921 = vsel %vm3917, %v3914, %v3919
    %v3922 = vld [vmem:[%s14] sm:$0x3]
    %v3923 = vunpack.c.l.bf16 %v3922
    %v3925 = vlaneseq
    %v3926 = vshrl.u32 %v3925, 7
    %v3927 = vsub.s32 0, %v3926
    %v3928 = vrot.slane %v3923, %v3927
    %v3929 = vlaneseq
    %v3930 = vshrl.u32 %v3929, 7
    %v3931 = vsub.s32 2, %v3930
    %v3932 = vrot.slane %v3923, %v3931
    %v3935 = vlaneseq
    %v3936 = vshrl.u32 %v3935, 7
    %v3937 = vsub.s32 0, %v3936
    %v3938 = vrot.slane %v3928, %v3937
    %v3939 = vlaneseq
    %v3940 = vshrl.u32 %v3939, 7
    %v3941 = vsub.s32 0, %v3940
    %v3942 = vrot.slane %v3932, %v3941
    %v3943 = vmul.f32 %v3920, %v3938
    %v3944 = vmul.f32 %v3921, %v3942
    %v3945 = vsel %vm59, %v3943, 0.0
    %v3946 = vsel %vm59, %v3944, 0.0
    %v3947 = vadd.f32 %v3945, %v3946
    %3948 = vadd.xlane.f32.xlu0 %v3947
    %v3949 = vpop.xlane.xlu0 %3948
    %v3950 = vld [vmem:[#allocation2] sm:$0x1]
    %v3952 = vlaneseq
    %v3953 = vshrl.u32 %v3952, 7
    %v3954 = vsub.s32 0, %v3953
    %v3955 = vrot.slane %v3950, %v3954
    %v3957 = vadd.f32 %v3949, %v3955
    %v3958 = vsub.f32 0.0, %v3957
    %v3959 = vmul.f32 %v3958, 1.442695
    %v3960 = vpow.pop %v3959
    %v3961 = vadd.f32 %v3960, 1.0
    %v3962 = vrcp.pop %v3961
    %v3963 = vmul.f32 1.0, %v3962
    %v3964 = vld [vmem:[%s6] sm:$0x3]
    %3966 = vset.pattern.permute.xlu0 0
    %3967 = vperm.xlu0 %3966, %v3963
    %v3968 = vpop.permute.xlu0 %3967
    %v3970 = vmul.f32 %v1501, %v3968
    %v3972 = vsel %vm147, %v3964, 0
    %v3975 = vsel %vm59, %v3970, 0
    %3977 = vmatprep.subr.mxu0 0.0
    %3978 = vmatpush1.msra.mxu0 0.0
    %3979 = vmatprep.subr.mxu0 0.0
    %3980 = vmatpush1.msra.mxu0 0.0
    %3981 = vmatprep.subr.mxu0 0.0
    %3982 = vmatpush1.msra.mxu0 0.0
    %3983 = vmatprep.subr.mxu0 0.0
    %3984 = vmatpush1.msra.mxu0 0.0
    %3985 = vmatprep.subr.mxu0 0.0
    %3986 = vmatpush1.msra.mxu0 0.0
    %3987 = vmatprep.subr.mxu0 0.0
    %3988 = vmatpush1.msra.mxu0 0.0
    %3989 = vmatprep.subr.mxu0 0.0
    %3990 = vmatpush1.msra.mxu0 0.0
    %3991 = vmatprep.subr.mxu0 0.0
    %3992 = vmatpush1.msra.mxu0 0.0
    %3993 = vmatprep.subr.mxu0 0.0
    %3994 = vmatpush1.msra.mxu0 0.0
    %3995 = vmatprep.subr.mxu0 0.0
    %3996 = vmatpush1.msra.mxu0 0.0
    %3997 = vmatprep.subr.mxu0 0.0
    %3998 = vmatpush1.msra.mxu0 0.0
    %3999 = vmatprep.subr.mxu0 0.0
    %4000 = vmatpush1.msra.mxu0 0.0
    %4001 = vmatprep.subr.mxu0 0.0
    %4002 = vmatpush1.msra.mxu0 0.0
    %4003 = vmatprep.subr.mxu0 0.0
    %4004 = vmatpush1.msra.mxu0 0.0
    %4005 = vmatprep.subr.mxu0 0.0
    %4006 = vmatpush1.msra.mxu0 0.0
    %4007 = vmatprep.subr.mxu0 0.0
    %4008 = vmatpush1.msra.mxu0 %v3975
    %4009 = vmatprep.subr.mxu0 0.0
    %4010 = vmatpush2.msra.mxu0 0.0
    %4011 = vmatprep.subr.mxu0 0.0
    %4012 = vmatpush2.msra.mxu0 0.0
    %4013 = vmatprep.subr.mxu0 0.0
    %4014 = vmatpush2.msra.mxu0 0.0
    %4015 = vmatprep.subr.mxu0 0.0
    %4016 = vmatpush2.msra.mxu0 0.0
    %4017 = vmatprep.subr.mxu0 0.0
    %4018 = vmatpush2.msra.mxu0 0.0
    %4019 = vmatprep.subr.mxu0 0.0
    %4020 = vmatpush2.msra.mxu0 0.0
    %4021 = vmatprep.subr.mxu0 0.0
    %4022 = vmatpush2.msra.mxu0 0.0
    %4023 = vmatprep.subr.mxu0 0.0
    %4024 = vmatpush2.msra.mxu0 0.0
    %4025 = vmatprep.subr.mxu0 0.0
    %4026 = vmatpush2.msra.mxu0 0.0
    %4027 = vmatprep.subr.mxu0 0.0
    %4028 = vmatpush2.msra.mxu0 0.0
    %4029 = vmatprep.subr.mxu0 0.0
    %4030 = vmatpush2.msra.mxu0 0.0
    %4031 = vmatprep.subr.mxu0 0.0
    %4032 = vmatpush2.msra.mxu0 0.0
    %4033 = vmatprep.subr.mxu0 0.0
    %4034 = vmatpush2.msra.mxu0 0.0
    %4035 = vmatprep.subr.mxu0 0.0
    %4036 = vmatpush2.msra.mxu0 0.0
    %4037 = vmatprep.subr.mxu0 0.0
    %4038 = vmatpush2.msra.mxu0 0.0
    %4039 = vmatprep.subr.mxu0 0.0
    %4040 = vmatpush2.msra.mxu0 0.0
    %4041 = vmatprep.mubr.f32.mxu0 0.0
    %4042 = vmatmul.mubr.f32.gmra.mxu0 %v3972
    %v4043 = vpop.f32.mrf.mxu0
    %v4044 = vadd.f32 0.0, %v4043
    %v4045 = vpop.f32.mrf.mxu0
    %4046 = vdwg.mxu0
    %vm4047 = vcmask 9216
    %v4048 = vsel %vm4047, %v224, -inf
    %4049 = vmax.xlane.f32.xlu0 %v4048
    %v4050 = vpop.xlane.xlu0 %4049
    %v4051 = vsub.f32 %v224, %v4050
    %v4052 = vmul.f32 %v4051, 1.442695
    %v4053 = vpow.pop %v4052
    %v4054 = vsel %vm4047, %v4053, 0.0
    %4055 = vadd.xlane.f32.xlu0 %v4054
    %v4056 = vpop.xlane.xlu0 %4055
    %v4057 = vrcp.pop %v4056
    %v4058 = vmul.f32 %v4053, %v4057
    %v4059 = vsel %vm4047, %v4044, -inf
    %4060 = vmax.xlane.f32.xlu0 %v4059
    %v4061 = vpop.xlane.xlu0 %4060
    %v4062 = vsub.f32 %v4044, %v4061
    %v4063 = vmul.f32 %v4062, 1.442695
    %v4064 = vpow.pop %v4063
    %v4065 = vsel %vm4047, %v4064, 0.0
    %4066 = vadd.xlane.f32.xlu0 %v4065
    %v4067 = vpop.xlane.xlu0 %4066
    %v4068 = vrcp.pop %v4067
    %v4069 = vmul.f32 %v4064, %v4068
    %v4070 = vlaneseq
    %v4071 = vshrl.u32 %v4070, 7
    %v4072 = vlaneseq
    %v4073 = vand.u32 %v4072, 127
    %vm4074 = vcmp.eq.s32.totalorder %v4071, %v4073
    %v4075 = vsel %vm4074, 1, 0
    %v4076 = vcvt.s32.f32 %v4075
    %v4077 = vsub.f32 1.0, %v4076
    %v4078 = vmul.f32 %v4076, %v4058
    %v4079 = vsel %vm4047, %v4078, 0.0
    %4080 = vadd.xlane.f32.xlu0 %v4079
    %v4081 = vpop.xlane.xlu0 %4080
    %v4082 = vsel %vm1506, %v4081, 0.0
    %v4083 = vrot.slane %v4082, 4
    %v4084 = vadd.f32 %v4082, %v4083
    %v4085 = vrot.slane %v4084, 2
    %v4086 = vadd.f32 %v4084, %v4085
    %v4087 = vrot.slane %v4086, 1
    %v4088 = vadd.f32 %v4086, %v4087
    %v4089 = vmul.f32 %v4077, %v4058
    %v4090 = vsel %vm4047, %v4089, 0.0
    %4091 = vadd.xlane.f32.xlu0 %v4090
    %v4092 = vpop.xlane.xlu0 %4091
    %v4093 = vsel %vm1506, %v4092, 0.0
    %v4094 = vrot.slane %v4093, 4
    %v4095 = vadd.f32 %v4093, %v4094
    %v4096 = vrot.slane %v4095, 2
    %v4097 = vadd.f32 %v4095, %v4096
    %v4098 = vrot.slane %v4097, 1
    %v4099 = vadd.f32 %v4097, %v4098
    %v4100 = vmul.f32 %v4077, %v4069
    %v4101 = vsel %vm4047, %v4100, 0.0
    %4102 = vadd.xlane.f32.xlu0 %v4101
    %v4103 = vpop.xlane.xlu0 %4102
    %v4104 = vsel %vm1506, %v4103, 0.0
    %v4105 = vrot.slane %v4104, 4
    %v4106 = vadd.f32 %v4104, %v4105
    %v4107 = vrot.slane %v4106, 2
    %v4108 = vadd.f32 %v4106, %v4107
    %v4109 = vrot.slane %v4108, 1
    %v4110 = vadd.f32 %v4108, %v4109
    %v4111 = vsub.f32 %v4099, %v4088
    %v4112 = vsub.f32 %v4110, %v4088
    %v4113 = vadd.f32 %v4111, %v4112
    %vm4114 = vcmask 0
    %4115 = vst.msk [vmem:[#allocation3] sm:$0x1] %vm4114, %v4113
    // Predicated region
    $region66: #{total_mi_forward.1} parent=1 // pred_check
      _
    $region67: #{total_mi_forward.1} parent=1 // pred_check_branch
      %4117 = sbr.rel (0) target = $region69
    $region68: #{total_mi_forward.1} parent=1 // pred_region
      %s4119 = ssub.s32 16, 16
      %4120 = vsyncadd [#allocation4], %s4119
      %s4122 = sshll.u32 [#allocation3], 4
      %s4123 = int_to_ptr.vmem [resolvable:$true] %s4122
      %4125 = dma.vmem_to_hbm [thread:$0]  %s4123, 16, %s16, [#allocation4]
    $region69: #{total_mi_forward.1} parent=1 // pred_fallthru
      _
    // Predicated region
    $region70: #{total_mi_forward.1} parent=1 // pred_check
      _
    $region71: #{total_mi_forward.1} parent=1 // pred_check_branch
      %4127 = sbr.rel (0) target = $region73
    $region72: #{total_mi_forward.1} parent=1 // pred_region
      %4128 = dma.done [#allocation4], 16
    $region73: #{total_mi_forward.1} parent=1 // pred_fallthru
      _
    %4129 = vsyncpa [#allocation4], 1

</llo_original>
